<compile_context>
chip_gen: v7x
topology: tpu7x:2x2x1
jax: 0.10.0
libtpu: 0.0.40
codegen_flags: <defaults>
</compile_context>

<pallas_src>
import functools

import jax
import jax.numpy as jnp
from jax.experimental import pallas as pl
from jax.experimental.pallas import tpu as pltpu


# ----------------------------------------------------------------------------
# Kernel
# ----------------------------------------------------------------------------
def _pre_swin_head_kernel(feat_ref, mp_ref, w1a_ref, w2_ref, b2_ref,
                          wd_ref, bd_ref, out_ref, *, tanh_bf16):
    """Fused msg_linear -> LayerNorm -> end_addition -> deconv(patch) -> tanh
    for one (rows x D) tile of a single batch element."""
    feat = feat_ref[...].astype(jnp.bfloat16)                       # (TN, D)

    # msg_linear: concat([feat, msg4], -1) @ W1 + b1
    #   == feat @ W1a + (msg4 @ W1b + b1); the msg part is constant per batch
    #   and precomputed outside the kernel (mp_ref is a (1, D) f32 vector).
    z = (jnp.dot(feat, w1a_ref[...], preferred_element_type=jnp.float32)
         + mp_ref[...])                                             # (TN, D) f32

    # LayerNorm (eps=1e-5, biased variance); gamma/beta are folded into the
    # next linear, so only the normalization itself runs here (f32 math).
    mean = jnp.mean(z, axis=-1, keepdims=True)
    zc = z - mean
    var = jnp.mean(zc * zc, axis=-1, keepdims=True)
    zhat = zc * jax.lax.rsqrt(var + 1e-5)                           # (TN, D) f32

    # end_addition_layer: concat([ln, feat], -1) @ W2 + b2 as ONE 2D-deep MXU
    # contraction with W2 = vstack([gamma*W2a, W2b]), b2' = b2 + beta @ W2a.
    lf = jnp.concatenate([zhat.astype(jnp.bfloat16), feat], axis=-1)  # (TN, 2D)
    w = (jnp.dot(lf, w2_ref[...], preferred_element_type=jnp.float32)
         + b2_ref[...])                                             # (TN, D) f32

    # ConvTranspose2d(D, 3, kernel=P, stride=P): kernel == stride means each
    # output PxP patch depends on exactly one input pixel -> a (D, 3*P*P) matmul.
    patch = (jnp.dot(w.astype(jnp.bfloat16), wd_ref[...],
                     preferred_element_type=jnp.float32)
             + bd_ref[...])                                         # (TN, 3*P*P)

    if tanh_bf16:   # bf16 EUP tanh (v6e/v7x): ~2x EUP throughput, less VMEM.
        out_ref[...] = jnp.tanh(patch.astype(jnp.bfloat16)).astype(out_ref.dtype)
    else:           # f32 tanh (v5e and older have no bf16 EUP).
        out_ref[...] = jnp.tanh(patch).astype(out_ref.dtype)


# ----------------------------------------------------------------------------
# Hardware-aware helpers
# ----------------------------------------------------------------------------
def _device_kind():
    try:
        return jax.devices()[0].device_kind.lower()
    except Exception:
        return ""


def _vmem_budget_bytes():
    """~75% of per-core VMEM: ~48 MiB on v7x, ~96 MiB on v5e/v6e."""
    try:
        cap = int(pltpu.get_tpu_info().vmem_capacity_bytes)
    except Exception:
        cap = 64 * 1024 * 1024          # assume the smallest (v7x per-core) part
    return int(cap * 3 // 4)


def _choose_row_tile(rows, requested, fits):
    """Largest row tile that (a) divides `rows` (no padding), (b) is a multiple
    of 8 or equals `rows` (BlockSpec second-minor-dim constraint), (c) is at
    most `requested` and (d) fits the VMEM budget.  Falls back to a padded
    multiple-of-8 tile only when no divisor works."""
    divisors = [d for d in range(1, rows + 1)
                if rows % d == 0 and (d == rows or d % 8 == 0)]
    for d in sorted(divisors, reverse=True):
        if d <= requested and fits(d):
            return d, False
    t = max(8, min(requested, rows))
    t = max(8, t - t % 8)
    while t > 8 and not fits(t):
        t = max(8, (t // 2) - (t // 2) % 8)
    return t, rows % t != 0


# ----------------------------------------------------------------------------
# Wrapper
# ----------------------------------------------------------------------------
def pre_swin_linear_head(x_feat, msgs, params, *, patch_size=32, tile_rows=512,
                         out_dtype=jnp.bfloat16, reassemble_nchw=False):
    """Fused head of `pre_Swin_Linear` (everything after the swin backbone).

    x_feat: (B, Hp, Wp, D) backbone features (NHWC, any float dtype; bf16 input
            minimizes HBM traffic -- the kernel casts in-VMEM otherwise).
    msgs:   (B, num_bits)
    params: (w1a, w1b, b1, gamma, beta, w2a, w2b, b2, wd, bd) with Linear
            weights stored as (in, out).  NOTE: real PyTorch nn.Linear weights
            are (out, in) and must be transposed when porting a checkpoint.

    Returns (B, Hp, Wp, 3, P, P) patches by default; `reassemble_nchw=True`
    gives the PyTorch-identical (B, 3, Hp*P, Wp*P) image (one extra full HBM
    read+write of the output).
    """
    B, Hp, Wp, D = x_feat.shape
    P = patch_size
    OUT = 3 * P * P
    R = Hp * Wp

    (w1a, w1b, b1, gamma, beta, w2a, w2b, b2, wd, bd) = params

    # --- hoist the per-batch-constant message projection out of the kernel ---
    # msgs.repeat(..., 4) @ W1b + b1 -> (B, 1, D) f32 (tiny; no (N, D) stream).
    msg4 = jnp.tile(msgs.astype(jnp.float32), (1, 4))
    msg_proj = (msg4 @ w1b.astype(jnp.float32)
                + b1.astype(jnp.float32).reshape(1, D)).reshape(B, 1, D)

    # --- fold LayerNorm gamma/beta into the end_addition layer and stack its
    #     two matmuls into one 2D-deep contraction ---
    gamma32 = gamma.astype(jnp.float32).reshape(D)
    beta32 = beta.astype(jnp.float32).reshape(D)
    w2a32 = w2a.astype(jnp.float32)
    w2_stack = jnp.concatenate(
        [gamma32[:, None] * w2a32, w2b.astype(jnp.float32)],
        axis=0).astype(jnp.bfloat16)                                 # (2D, D)
    b2f = (b2.astype(jnp.float32).reshape(1, D)
           + (beta32 @ w2a32).reshape(1, D))                         # (1, D)

    w1a_b = w1a.astype(jnp.bfloat16)
    wd_b = wd.astype(jnp.bfloat16)
    bd32 = bd.astype(jnp.float32).reshape(1, OUT)

    # Feature rows keep their incoming dtype (no wrapper-side cast pass).
    feat3 = x_feat.reshape(B, R, D)
    in_itemsize = feat3.dtype.itemsize
    out_itemsize = jnp.dtype(out_dtype).itemsize

    kind = _device_kind()
    # bf16 tanh only where the EUP supports it (v6e / v7x).
    tanh_bf16 = bool(kind) and not any(g in kind for g in ("v2", "v3", "v4", "v5"))
    two_core = ("v7" in kind) or ("7x" in kind)

    budget = _vmem_budget_bytes()
    # Conservative VMEM estimate (weights double-buffered, covers the fallback).
    weight_bytes = 2 * ((D * D + 2 * D * D + D * OUT) * 2 + (D + OUT) * 4)

    def _vmem_needed(t):
        stream = 2 * (t * D * in_itemsize + t * OUT * out_itemsize + D * 4)
        interm = 4 * t * D * 4 + 2 * t * D * 2 + t * OUT * 4 + t * OUT * out_itemsize
        return stream + weight_bytes + interm + (4 << 20)

    tn, needs_pad = _choose_row_tile(R, tile_rows,
                                     lambda t: _vmem_needed(t) <= budget)
    r_pad = R
    if needs_pad:   # rare: only when Hp*Wp has no suitable divisor <= tile_rows
        r_pad = pl.cdiv(R, tn) * tn
        feat3 = jnp.pad(feat3, ((0, 0), (0, r_pad - R), (0, 0)))

    grid = (B, r_pad // tn)
    # v7x has two TensorCores per chip: if the grid collapsed to one step, split
    # the rows so the "parallel" axes can be sharded across both cores.
    if two_core and B * (r_pad // tn) < 2 and tn % 16 == 0:
        tn //= 2
        grid = (B, r_pad // tn)

    vmem_limit = int(min(budget, max(32 * 1024 * 1024, _vmem_needed(tn))))

    kernel_weights = (w1a_b, w2_stack, b2f, wd_b, bd32)
    weight_nbytes = sum(int(a.size) * a.dtype.itemsize for a in kernel_weights)
    n_rows = B * r_pad
    cost = pl.CostEstimate(
        flops=2 * n_rows * D * (3 * D + OUT),
        transcendentals=n_rows * (OUT + 1),       # tanh per element + rsqrt per row
        bytes_accessed=(n_rows * D * in_itemsize + B * D * 4
                        + weight_nbytes + n_rows * OUT * out_itemsize))

    def _call(weight_buffers, use_bf16_tanh):
        wkw = ({"pipeline_mode": pl.Buffered(weight_buffers)}
               if weight_buffers is not None else {})
        wspec = lambda shape: pl.BlockSpec(shape, lambda b, i: (0,) * len(shape),
                                           **wkw)
        return pl.pallas_call(
            functools.partial(_pre_swin_head_kernel, tanh_bf16=use_bf16_tanh),
            out_shape=jax.ShapeDtypeStruct((B, r_pad, OUT), out_dtype),
            grid=grid,
            in_specs=[
                pl.BlockSpec((None, tn, D), lambda b, i: (b, i, 0)),   # feat rows
                pl.BlockSpec((None, 1, D), lambda b, i: (b, 0, 0)),    # msg proj (per batch)
                wspec((D, D)),         # W1a  (feat part of msg_linear)
                wspec((2 * D, D)),     # [gamma*W2a ; W2b]  (end_addition, fused)
                wspec((1, D)),         # b2 + beta @ W2a
                wspec((D, OUT)),       # deconv weight, flattened (D, 3*P*P)
                wspec((1, OUT)),       # deconv bias, broadcast per patch element
            ],
            out_specs=pl.BlockSpec((None, tn, OUT), lambda b, i: (b, i, 0)),
            compiler_params=pltpu.CompilerParams(
                dimension_semantics=("parallel", "parallel"),
                vmem_limit_bytes=vmem_limit),
            cost_estimate=cost,
        )(feat3, msg_proj, *kernel_weights)

    try:
        # Preferred config: single-buffered resident weights, bf16 tanh on v6e/v7x.
        out_flat = _call(1, tanh_bf16)
    except Exception:
        # Conservative fallback: default double-buffered weights, f32 tanh.
        out_flat = _call(None, False)

    if r_pad != R:
        out_flat = out_flat[:, :R]

    patches = out_flat.reshape(B, Hp, Wp, 3, P, P)
    if not reassemble_nchw:
        return patches
    # PyTorch-identical NCHW image (B, 3, Hp*P, Wp*P) -- extra full HBM pass.
    return patches.transpose(0, 3, 1, 4, 2, 5).reshape(B, 3, Hp * P, Wp * P)


# ----------------------------------------------------------------------------
# Synthetic parameters + pure-JAX reference
# ----------------------------------------------------------------------------
def make_params(key, *, embed_dim, num_bits, patch_size):
    """Deterministic synthetic parameters (Linear weights stored as (in, out))."""
    D, nb, P = embed_dim, num_bits, patch_size
    ks = jax.random.split(key, 10)
    s = 0.05
    w1a = s * jax.random.normal(ks[0], (D, D), jnp.float32)
    w1b = s * jax.random.normal(ks[1], (4 * nb, D), jnp.float32)
    b1 = s * jax.random.normal(ks[2], (1, D), jnp.float32)
    gamma = 1.0 + 0.1 * jax.random.normal(ks[3], (1, D), jnp.float32)
    beta = 0.05 * jax.random.normal(ks[4], (1, D), jnp.float32)
    w2a = s * jax.random.normal(ks[5], (D, D), jnp.float32)
    w2b = s * jax.random.normal(ks[6], (D, D), jnp.float32)
    b2 = s * jax.random.normal(ks[7], (1, D), jnp.float32)
    # ConvTranspose2d weight in PyTorch is (in_ch=D, out_ch=3, P, P); flatten so
    # column index = c*P*P + i*P + j, matching the (3, P, P) patch reshape.
    wd = (s * jax.random.normal(ks[8], (D, 3, P, P), jnp.float32)).reshape(D, 3 * P * P)
    bd_c = s * jax.random.normal(ks[9], (3,), jnp.float32)
    bd = jnp.repeat(bd_c, P * P).reshape(1, 3 * P * P)
    return (w1a, w1b, b1, gamma, beta, w2a, w2b, b2, wd, bd)


def _reference_head(x_feat, msgs, params, *, patch_size=32):
    """Pure-JAX f32 reference following the PyTorch op ordering exactly."""
    B, Hp, Wp, D = x_feat.shape
    nb = msgs.shape[-1]
    P = patch_size
    (w1a, w1b, b1, gamma, beta, w2a, w2b, b2, wd, bd) = params
    feat = x_feat.reshape(B * Hp * Wp, D).astype(jnp.float32)
    msg4 = jnp.tile(msgs.astype(jnp.float32), (1, 4))
    msg4 = jnp.broadcast_to(msg4[:, None, :],
                            (B, Hp * Wp, 4 * nb)).reshape(B * Hp * Wp, 4 * nb)
    z = feat @ w1a + msg4 @ w1b + b1
    mean = jnp.mean(z, -1, keepdims=True)
    zc = z - mean
    var = jnp.mean(zc * zc, -1, keepdims=True)
    ln = zc * jax.lax.rsqrt(var + 1e-5) * gamma + beta
    w = ln @ w2a + feat @ w2b + b2
    patch = jnp.tanh(w @ wd + bd)
    out = patch.reshape(B, Hp, Wp, 3, P, P)
    return out.transpose(0, 3, 1, 4, 2, 5).reshape(B, 3, Hp * P, Wp * P)


if __name__ == "__main__":
    # Small shapes: embed_dim=128, num_bits=32, patch_size=32, backbone grid 4x4
    # (corresponds to an original 128x128 image at patch size 32).
    B, Hp, Wp = 2, 4, 4
    embed_dim, num_bits, patch_size = 128, 32, 32

    key = jax.random.PRNGKey(0)
    k_feat, k_msg, k_param = jax.random.split(key, 3)

    x_feat = jax.random.normal(k_feat, (B, Hp, Wp, embed_dim), jnp.float32)
    msgs = jax.random.bernoulli(k_msg, 0.5, (B, num_bits)).astype(jnp.float32)
    params = make_params(k_param, embed_dim=embed_dim, num_bits=num_bits,
                         patch_size=patch_size)

    out = pre_swin_linear_head(x_feat, msgs, params, patch_size=patch_size,
                               reassemble_nchw=True)   # PyTorch NCHW layout
    jax.block_until_ready(out)
    assert out.shape == (B, 3, Hp * patch_size, Wp * patch_size), out.shape

    # Sanity-check the bf16 kernel against an f32 reference (tanh outputs, loose tol).
    ref = _reference_head(x_feat, msgs, params, patch_size=patch_size)
    max_err = float(jnp.max(jnp.abs(out.astype(jnp.float32) - ref)))
    assert max_err < 0.15, f"max abs error vs f32 reference: {max_err}"

    print("KERNEL_OK")
</pallas_src>

<mosaic_0001>
module attributes {stable_mosaic.version = 11 : i64} {
  func.func @_pre_swin_head_kernel(%arg0: i32, %arg1: i32, %arg2: memref<1x16x128xf32, #tpu.memory_space<vmem>>, %arg3: memref<1x1x128xf32, #tpu.memory_space<vmem>>, %arg4: memref<128x128xbf16, #tpu.memory_space<vmem>>, %arg5: memref<256x128xbf16, #tpu.memory_space<vmem>>, %arg6: memref<1x128xf32, #tpu.memory_space<vmem>>, %arg7: memref<128x3072xbf16, #tpu.memory_space<vmem>>, %arg8: memref<1x3072xf32, #tpu.memory_space<vmem>>, %arg9: memref<1x16x3072xbf16, #tpu.memory_space<vmem>>) attributes {dimension_semantics = [#tpu.dimension_semantics<parallel>, #tpu.dimension_semantics<parallel>], iteration_bounds = array<i64: 2, 1>, scalar_prefetch = 0 : i64, scratch_operands = 0 : i64, tpu.core_type = #tpu.core_type<tc>, window_params = [{transform_indices = @transform_0, window_bounds = array<i64: 1, 16, 128>}, {transform_indices = @transform_1, window_bounds = array<i64: 1, 1, 128>}, {pipeline_mode = #tpu.pipeline_mode<synchronous>, transform_indices = @transform_2, window_bounds = array<i64: 128, 128>}, {pipeline_mode = #tpu.pipeline_mode<synchronous>, transform_indices = @transform_3, window_bounds = array<i64: 256, 128>}, {pipeline_mode = #tpu.pipeline_mode<synchronous>, transform_indices = @transform_4, window_bounds = array<i64: 1, 128>}, {pipeline_mode = #tpu.pipeline_mode<synchronous>, transform_indices = @transform_5, window_bounds = array<i64: 128, 3072>}, {pipeline_mode = #tpu.pipeline_mode<synchronous>, transform_indices = @transform_6, window_bounds = array<i64: 1, 3072>}, {transform_indices = @transform_7, window_bounds = array<i64: 1, 16, 3072>}]} {
    %c0 = arith.constant 0 : index
    %c0_0 = arith.constant 0 : index
    %c0_1 = arith.constant 0 : index
    %0 = vector.load %arg2[%c0, %c0_0, %c0_1] : memref<1x16x128xf32, #tpu.memory_space<vmem>>, vector<1x16x128xf32>
    %1 = vector.shape_cast %0 : vector<1x16x128xf32> to vector<16x128xf32>
    %2 = arith.truncf %1 : vector<16x128xf32> to vector<16x128xbf16>
    %c0_2 = arith.constant 0 : index
    %c0_3 = arith.constant 0 : index
    %3 = vector.load %arg4[%c0_2, %c0_3] : memref<128x128xbf16, #tpu.memory_space<vmem>>, vector<128x128xbf16>
    %cst = arith.constant dense<0.000000e+00> : vector<16x128xf32>
    %4 = tpu.matmul %2, %3, %cst {dimension_numbers = #tpu.dot_dimension_numbers<[1], [0], [0], [1], [0, 0, 1, 1], [], []>} : vector<16x128xbf16>, vector<128x128xbf16>, vector<16x128xf32> -> vector<16x128xf32>
    %c0_4 = arith.constant 0 : index
    %c0_5 = arith.constant 0 : index
    %c0_6 = arith.constant 0 : index
    %5 = vector.load %arg3[%c0_4, %c0_5, %c0_6] : memref<1x1x128xf32, #tpu.memory_space<vmem>>, vector<1x1x128xf32>
    %6 = vector.shape_cast %5 : vector<1x1x128xf32> to vector<1x128xf32>
    %7 = vector.broadcast %6 : vector<1x128xf32> to vector<16x128xf32>
    %8 = arith.addf %4, %7 : vector<16x128xf32>
    %cst_7 = arith.constant dense<0.000000e+00> : vector<16xf32>
    %9 = vector.multi_reduction <add>, %8, %cst_7 [1] : vector<16x128xf32> to vector<16xf32>
    %10 = vector.shape_cast %9 : vector<16xf32> to vector<16x1xf32>
    %cst_8 = arith.constant 1.280000e+02 : f32
    %11 = vector.broadcast %cst_8 : f32 to vector<16x1xf32>
    %12 = arith.divf %10, %11 : vector<16x1xf32>
    %13 = vector.broadcast %12 : vector<16x1xf32> to vector<16x128xf32>
    %14 = arith.subf %8, %13 : vector<16x128xf32>
    %15 = arith.mulf %14, %14 : vector<16x128xf32>
    %cst_9 = arith.constant dense<0.000000e+00> : vector<16xf32>
    %16 = vector.multi_reduction <add>, %15, %cst_9 [1] : vector<16x128xf32> to vector<16xf32>
    %17 = vector.shape_cast %16 : vector<16xf32> to vector<16x1xf32>
    %cst_10 = arith.constant 1.280000e+02 : f32
    %18 = vector.broadcast %cst_10 : f32 to vector<16x1xf32>
    %19 = arith.divf %17, %18 : vector<16x1xf32>
    %cst_11 = arith.constant 9.99999974E-6 : f32
    %20 = vector.broadcast %cst_11 : f32 to vector<16x1xf32>
    %21 = arith.addf %19, %20 : vector<16x1xf32>
    %22 = math.rsqrt %21 : vector<16x1xf32>
    %23 = vector.broadcast %22 : vector<16x1xf32> to vector<16x128xf32>
    %24 = arith.mulf %14, %23 : vector<16x128xf32>
    %25 = arith.truncf %24 : vector<16x128xf32> to vector<16x128xbf16>
    %26 = tpu.concatenate %25, %2 in 1 : vector<16x128xbf16>, vector<16x128xbf16> -> vector<16x256xbf16>
    %c0_12 = arith.constant 0 : index
    %c0_13 = arith.constant 0 : index
    %27 = vector.load %arg5[%c0_12, %c0_13] : memref<256x128xbf16, #tpu.memory_space<vmem>>, vector<256x128xbf16>
    %cst_14 = arith.constant dense<0.000000e+00> : vector<16x128xf32>
    %28 = tpu.matmul %26, %27, %cst_14 {dimension_numbers = #tpu.dot_dimension_numbers<[1], [0], [0], [1], [0, 0, 1, 1], [], []>} : vector<16x256xbf16>, vector<256x128xbf16>, vector<16x128xf32> -> vector<16x128xf32>
    %c0_15 = arith.constant 0 : index
    %c0_16 = arith.constant 0 : index
    %29 = vector.load %arg6[%c0_15, %c0_16] : memref<1x128xf32, #tpu.memory_space<vmem>>, vector<1x128xf32>
    %30 = vector.broadcast %29 : vector<1x128xf32> to vector<16x128xf32>
    %31 = arith.addf %28, %30 : vector<16x128xf32>
    %32 = arith.truncf %31 : vector<16x128xf32> to vector<16x128xbf16>
    %c0_17 = arith.constant 0 : index
    %c0_18 = arith.constant 0 : index
    %33 = vector.load %arg7[%c0_17, %c0_18] : memref<128x3072xbf16, #tpu.memory_space<vmem>>, vector<128x3072xbf16>
    %cst_19 = arith.constant dense<0.000000e+00> : vector<16x3072xf32>
    %34 = tpu.matmul %32, %33, %cst_19 {dimension_numbers = #tpu.dot_dimension_numbers<[1], [0], [0], [1], [0, 0, 1, 1], [], []>} : vector<16x128xbf16>, vector<128x3072xbf16>, vector<16x3072xf32> -> vector<16x3072xf32>
    %c0_20 = arith.constant 0 : index
    %c0_21 = arith.constant 0 : index
    %35 = vector.load %arg8[%c0_20, %c0_21] : memref<1x3072xf32, #tpu.memory_space<vmem>>, vector<1x3072xf32>
    %36 = vector.broadcast %35 : vector<1x3072xf32> to vector<16x3072xf32>
    %37 = arith.addf %34, %36 : vector<16x3072xf32>
    %38 = arith.truncf %37 : vector<16x3072xf32> to vector<16x3072xbf16>
    %39 = math.tanh %38 : vector<16x3072xbf16>
    %c0_22 = arith.constant 0 : index
    %c0_23 = arith.constant 0 : index
    %c0_24 = arith.constant 0 : index
    %40 = vector.load %arg9[%c0_22, %c0_23, %c0_24] : memref<1x16x3072xbf16, #tpu.memory_space<vmem>>, vector<1x16x3072xbf16>
    %41 = vector.shape_cast %40 : vector<1x16x3072xbf16> to vector<16x3072xbf16>
    %42 = vector.shape_cast %39 : vector<16x3072xbf16> to vector<1x16x3072xbf16>
    tpu.vector_store %arg9[%c0_22, %c0_23, %c0_24], %42 {strides = array<i32>} : memref<1x16x3072xbf16, #tpu.memory_space<vmem>>, vector<1x16x3072xbf16>,
    return
  }
  func.func @transform_0(%arg0: i32, %arg1: i32) -> (i32, i32, i32) {
    %c0_i32 = arith.constant 0 : i32
    %c0_i32_0 = arith.constant 0 : i32
    return %arg0, %arg1, %c0_i32 : i32, i32, i32
  }
  func.func @transform_1(%arg0: i32, %arg1: i32) -> (i32, i32, i32) {
    %c0_i32 = arith.constant 0 : i32
    %c0_i32_0 = arith.constant 0 : i32
    %c0_i32_1 = arith.constant 0 : i32
    return %arg0, %c0_i32, %c0_i32_0 : i32, i32, i32
  }
  func.func @transform_2(%arg0: i32, %arg1: i32) -> (i32, i32) {
    %c0_i32 = arith.constant 0 : i32
    %c0_i32_0 = arith.constant 0 : i32
    %c0_i32_1 = arith.constant 0 : i32
    return %c0_i32, %c0_i32_0 : i32, i32
  }
  func.func @transform_3(%arg0: i32, %arg1: i32) -> (i32, i32) {
    %c0_i32 = arith.constant 0 : i32
    %c0_i32_0 = arith.constant 0 : i32
    %c0_i32_1 = arith.constant 0 : i32
    return %c0_i32, %c0_i32_0 : i32, i32
  }
  func.func @transform_4(%arg0: i32, %arg1: i32) -> (i32, i32) {
    %c0_i32 = arith.constant 0 : i32
    %c0_i32_0 = arith.constant 0 : i32
    %c0_i32_1 = arith.constant 0 : i32
    return %c0_i32, %c0_i32_0 : i32, i32
  }
  func.func @transform_5(%arg0: i32, %arg1: i32) -> (i32, i32) {
    %c0_i32 = arith.constant 0 : i32
    %c0_i32_0 = arith.constant 0 : i32
    %c0_i32_1 = arith.constant 0 : i32
    return %c0_i32, %c0_i32_0 : i32, i32
  }
  func.func @transform_6(%arg0: i32, %arg1: i32) -> (i32, i32) {
    %c0_i32 = arith.constant 0 : i32
    %c0_i32_0 = arith.constant 0 : i32
    %c0_i32_1 = arith.constant 0 : i32
    return %c0_i32, %c0_i32_0 : i32, i32
  }
  func.func @transform_7(%arg0: i32, %arg1: i32) -> (i32, i32, i32) {
    %c0_i32 = arith.constant 0 : i32
    %c0_i32_0 = arith.constant 0 : i32
    return %arg0, %arg1, %c0_i32 : i32, i32, i32
  }
}

module attributes {stable_mosaic.version = 11 : i64} {
  func.func @_pre_swin_head_kernel(%arg0: i32, %arg1: i32, %arg2: memref<1x16x128xf32, #tpu.memory_space<vmem>>, %arg3: memref<1x1x128xf32, #tpu.memory_space<vmem>>, %arg4: memref<128x128xbf16, #tpu.memory_space<vmem>>, %arg5: memref<256x128xbf16, #tpu.memory_space<vmem>>, %arg6: memref<1x128xf32, #tpu.memory_space<vmem>>, %arg7: memref<128x3072xbf16, #tpu.memory_space<vmem>>, %arg8: memref<1x3072xf32, #tpu.memory_space<vmem>>, %arg9: memref<1x16x3072xbf16, #tpu.memory_space<vmem>>) attributes {dimension_semantics = [#tpu.dimension_semantics<parallel>, #tpu.dimension_semantics<parallel>], iteration_bounds = array<i64: 2, 1>, scalar_prefetch = 0 : i64, scratch_operands = 0 : i64, tpu.core_type = #tpu.core_type<tc>, window_params = [{transform_indices = @transform_0, window_bounds = array<i64: 1, 16, 128>}, {transform_indices = @transform_1, window_bounds = array<i64: 1, 1, 128>}, {pipeline_mode = #tpu.pipeline_mode<synchronous>, transform_indices = @transform_2, window_bounds = array<i64: 128, 128>}, {pipeline_mode = #tpu.pipeline_mode<synchronous>, transform_indices = @transform_3, window_bounds = array<i64: 256, 128>}, {pipeline_mode = #tpu.pipeline_mode<synchronous>, transform_indices = @transform_4, window_bounds = array<i64: 1, 128>}, {pipeline_mode = #tpu.pipeline_mode<synchronous>, transform_indices = @transform_5, window_bounds = array<i64: 128, 3072>}, {pipeline_mode = #tpu.pipeline_mode<synchronous>, transform_indices = @transform_6, window_bounds = array<i64: 1, 3072>}, {transform_indices = @transform_7, window_bounds = array<i64: 1, 16, 3072>}]} {
    %c0 = arith.constant 0 : index
    %c0_0 = arith.constant 0 : index
    %c0_1 = arith.constant 0 : index
    %0 = vector.load %arg2[%c0, %c0_0, %c0_1] : memref<1x16x128xf32, #tpu.memory_space<vmem>>, vector<1x16x128xf32>
    %1 = vector.shape_cast %0 : vector<1x16x128xf32> to vector<16x128xf32>
    %2 = arith.truncf %1 : vector<16x128xf32> to vector<16x128xbf16>
    %c0_2 = arith.constant 0 : index
    %c0_3 = arith.constant 0 : index
    %3 = vector.load %arg4[%c0_2, %c0_3] : memref<128x128xbf16, #tpu.memory_space<vmem>>, vector<128x128xbf16>
    %cst = arith.constant dense<0.000000e+00> : vector<16x128xf32>
    %4 = tpu.matmul %2, %3, %cst {dimension_numbers = #tpu.dot_dimension_numbers<[1], [0], [0], [1], [0, 0, 1, 1], [], []>} : vector<16x128xbf16>, vector<128x128xbf16>, vector<16x128xf32> -> vector<16x128xf32>
    %c0_4 = arith.constant 0 : index
    %c0_5 = arith.constant 0 : index
    %c0_6 = arith.constant 0 : index
    %5 = vector.load %arg3[%c0_4, %c0_5, %c0_6] : memref<1x1x128xf32, #tpu.memory_space<vmem>>, vector<1x1x128xf32>
    %6 = vector.shape_cast %5 : vector<1x1x128xf32> to vector<1x128xf32>
    %7 = vector.broadcast %6 : vector<1x128xf32> to vector<16x128xf32>
    %8 = arith.addf %4, %7 : vector<16x128xf32>
    %cst_7 = arith.constant dense<0.000000e+00> : vector<16xf32>
    %9 = vector.multi_reduction <add>, %8, %cst_7 [1] : vector<16x128xf32> to vector<16xf32>
    %10 = vector.shape_cast %9 : vector<16xf32> to vector<16x1xf32>
    %cst_8 = arith.constant 1.280000e+02 : f32
    %11 = vector.broadcast %cst_8 : f32 to vector<16x1xf32>
    %12 = arith.divf %10, %11 : vector<16x1xf32>
    %13 = vector.broadcast %12 : vector<16x1xf32> to vector<16x128xf32>
    %14 = arith.subf %8, %13 : vector<16x128xf32>
    %15 = arith.mulf %14, %14 : vector<16x128xf32>
    %cst_9 = arith.constant dense<0.000000e+00> : vector<16xf32>
    %16 = vector.multi_reduction <add>, %15, %cst_9 [1] : vector<16x128xf32> to vector<16xf32>
    %17 = vector.shape_cast %16 : vector<16xf32> to vector<16x1xf32>
    %cst_10 = arith.constant 1.280000e+02 : f32
    %18 = vector.broadcast %cst_10 : f32 to vector<16x1xf32>
    %19 = arith.divf %17, %18 : vector<16x1xf32>
    %cst_11 = arith.constant 9.99999974E-6 : f32
    %20 = vector.broadcast %cst_11 : f32 to vector<16x1xf32>
    %21 = arith.addf %19, %20 : vector<16x1xf32>
    %22 = math.rsqrt %21 : vector<16x1xf32>
    %23 = vector.broadcast %22 : vector<16x1xf32> to vector<16x128xf32>
    %24 = arith.mulf %14, %23 : vector<16x128xf32>
    %25 = arith.truncf %24 : vector<16x128xf32> to vector<16x128xbf16>
    %26 = tpu.concatenate %25, %2 in 1 : vector<16x128xbf16>, vector<16x128xbf16> -> vector<16x256xbf16>
    %c0_12 = arith.constant 0 : index
    %c0_13 = arith.constant 0 : index
    %27 = vector.load %arg5[%c0_12, %c0_13] : memref<256x128xbf16, #tpu.memory_space<vmem>>, vector<256x128xbf16>
    %cst_14 = arith.constant dense<0.000000e+00> : vector<16x128xf32>
    %28 = tpu.matmul %26, %27, %cst_14 {dimension_numbers = #tpu.dot_dimension_numbers<[1], [0], [0], [1], [0, 0, 1, 1], [], []>} : vector<16x256xbf16>, vector<256x128xbf16>, vector<16x128xf32> -> vector<16x128xf32>
    %c0_15 = arith.constant 0 : index
    %c0_16 = arith.constant 0 : index
    %29 = vector.load %arg6[%c0_15, %c0_16] : memref<1x128xf32, #tpu.memory_space<vmem>>, vector<1x128xf32>
    %30 = vector.broadcast %29 : vector<1x128xf32> to vector<16x128xf32>
    %31 = arith.addf %28, %30 : vector<16x128xf32>
    %32 = arith.truncf %31 : vector<16x128xf32> to vector<16x128xbf16>
    %c0_17 = arith.constant 0 : index
    %c0_18 = arith.constant 0 : index
    %33 = vector.load %arg7[%c0_17, %c0_18] : memref<128x3072xbf16, #tpu.memory_space<vmem>>, vector<128x3072xbf16>
    %cst_19 = arith.constant dense<0.000000e+00> : vector<16x3072xf32>
    %34 = tpu.matmul %32, %33, %cst_19 {dimension_numbers = #tpu.dot_dimension_numbers<[1], [0], [0], [1], [0, 0, 1, 1], [], []>} : vector<16x128xbf16>, vector<128x3072xbf16>, vector<16x3072xf32> -> vector<16x3072xf32>
    %c0_20 = arith.constant 0 : index
    %c0_21 = arith.constant 0 : index
    %35 = vector.load %arg8[%c0_20, %c0_21] : memref<1x3072xf32, #tpu.memory_space<vmem>>, vector<1x3072xf32>
    %36 = vector.broadcast %35 : vector<1x3072xf32> to vector<16x3072xf32>
    %37 = arith.addf %34, %36 : vector<16x3072xf32>
    %38 = math.tanh %37 : vector<16x3072xf32>
    %39 = arith.truncf %38 : vector<16x3072xf32> to vector<16x3072xbf16>
    %c0_22 = arith.constant 0 : index
    %c0_23 = arith.constant 0 : index
    %c0_24 = arith.constant 0 : index
    %40 = vector.load %arg9[%c0_22, %c0_23, %c0_24] : memref<1x16x3072xbf16, #tpu.memory_space<vmem>>, vector<1x16x3072xbf16>
    %41 = vector.shape_cast %40 : vector<1x16x3072xbf16> to vector<16x3072xbf16>
    %42 = vector.shape_cast %39 : vector<16x3072xbf16> to vector<1x16x3072xbf16>
    tpu.vector_store %arg9[%c0_22, %c0_23, %c0_24], %42 {strides = array<i32>} : memref<1x16x3072xbf16, #tpu.memory_space<vmem>>, vector<1x16x3072xbf16>,
    return
  }
  func.func @transform_0(%arg0: i32, %arg1: i32) -> (i32, i32, i32) {
    %c0_i32 = arith.constant 0 : i32
    %c0_i32_0 = arith.constant 0 : i32
    return %arg0, %arg1, %c0_i32 : i32, i32, i32
  }
  func.func @transform_1(%arg0: i32, %arg1: i32) -> (i32, i32, i32) {
    %c0_i32 = arith.constant 0 : i32
    %c0_i32_0 = arith.constant 0 : i32
    %c0_i32_1 = arith.constant 0 : i32
    return %arg0, %c0_i32, %c0_i32_0 : i32, i32, i32
  }
  func.func @transform_2(%arg0: i32, %arg1: i32) -> (i32, i32) {
    %c0_i32 = arith.constant 0 : i32
    %c0_i32_0 = arith.constant 0 : i32
    %c0_i32_1 = arith.constant 0 : i32
    return %c0_i32, %c0_i32_0 : i32, i32
  }
  func.func @transform_3(%arg0: i32, %arg1: i32) -> (i32, i32) {
    %c0_i32 = arith.constant 0 : i32
    %c0_i32_0 = arith.constant 0 : i32
    %c0_i32_1 = arith.constant 0 : i32
    return %c0_i32, %c0_i32_0 : i32, i32
  }
  func.func @transform_4(%arg0: i32, %arg1: i32) -> (i32, i32) {
    %c0_i32 = arith.constant 0 : i32
    %c0_i32_0 = arith.constant 0 : i32
    %c0_i32_1 = arith.constant 0 : i32
    return %c0_i32, %c0_i32_0 : i32, i32
  }
  func.func @transform_5(%arg0: i32, %arg1: i32) -> (i32, i32) {
    %c0_i32 = arith.constant 0 : i32
    %c0_i32_0 = arith.constant 0 : i32
    %c0_i32_1 = arith.constant 0 : i32
    return %c0_i32, %c0_i32_0 : i32, i32
  }
  func.func @transform_6(%arg0: i32, %arg1: i32) -> (i32, i32) {
    %c0_i32 = arith.constant 0 : i32
    %c0_i32_0 = arith.constant 0 : i32
    %c0_i32_1 = arith.constant 0 : i32
    return %c0_i32, %c0_i32_0 : i32, i32
  }
  func.func @transform_7(%arg0: i32, %arg1: i32) -> (i32, i32, i32) {
    %c0_i32 = arith.constant 0 : i32
    %c0_i32_0 = arith.constant 0 : i32
    return %arg0, %arg1, %c0_i32 : i32, i32, i32
  }
}

</mosaic_0001>

<llo_original>
// kernel: tpu_custom_call.1
$region0: #{tpu_custom_call.1}
  #allocation0 [shape = 'u32[]', space=smem, size = 0x4, offset = 0x4, fixed_abs, tag = 'smem constant byte address 0x4 - core index']
  #allocation1 [shape = 'u32[144,128]{1,0:T(1,128)}', space=vmem, size = 0x12000, scoped, tag = 'internal scratch']
  %s0 = inlined_call_operand.hbm [shape: f32[2,16,128], index: 0, kind: input, shape index: {}]
  %s1 = inlined_call_operand.vmem [shape: f32[2,1,128], index: 1, kind: input, shape index: {}]
  %s2 = inlined_call_operand.hbm [shape: bf16[128,128], index: 2, kind: input, shape index: {}]
  %s3 = inlined_call_operand.hbm [shape: bf16[256,128], index: 3, kind: input, shape index: {}]
  %s4 = inlined_call_operand.vmem [shape: f32[1,128], index: 4, kind: input, shape index: {}]
  %s5 = inlined_call_operand.hbm [shape: bf16[128,3072], index: 5, kind: input, shape index: {}]
  %s6 = inlined_call_operand.hbm [shape: f32[1,3072], index: 6, kind: input, shape index: {}]
  %s7 = inlined_call_operand.hbm [shape: bf16[2,16,3072], index: 7, kind: output, shape index: {}]
  %s8 = sld [smem:[#allocation0]]
  $region81: #{tpu_custom_call.1} parent=0
    _
  %s10 = ssub.s32 1, %s8
  %s11 = scalar_select 0, %s10, %s8
  $region1: #{tpu_custom_call.1} parent=0
    #allocation2 [shape = 'u8[16384]{0}', space=vmem, size = 0x4000, scoped, tag = 'input window, operand 0']
    #allocation3 [shape = 's32[2]{0}', space=sflag, size = 0x8, scoped, tag = 'scoped memory for tpu_custom_call.1']
    #allocation4 [shape = 's32[2]{0}', space=sflag, size = 0x8, scoped, tag = 'scoped memory for tpu_custom_call.1']
    #allocation5 [shape = 'u8[32768]{0}', space=vmem, size = 0x8000, scoped, tag = 'input window, operand 2, single buffered']
    #allocation6 [shape = 's32[1]{0}', space=sflag, size = 0x4, scoped, tag = 'scoped memory for tpu_custom_call.1']
    #allocation7 [shape = 'u8[65536]{0}', space=vmem, size = 0x10000, scoped, tag = 'input window, operand 3, single buffered']
    #allocation8 [shape = 'u8[786432]{0}', space=vmem, size = 0xc0000, scoped, tag = 'input window, operand 5, single buffered']
    #allocation9 [shape = 's32[1]{0}', space=sflag, size = 0x4, scoped, tag = 'scoped memory for tpu_custom_call.1']
    #allocation10 [shape = 'u8[12288]{0}', space=vmem, size = 0x3000, scoped, tag = 'input window, operand 6, single buffered']
    #allocation11 [shape = 'u8[196608]{0}', space=vmem, size = 0x30000, scoped, tag = 'output window, operand 0']
    %12 = vsyncpa [#allocation3], 0
    %s13 = scalar_lea.sflag [#allocation3], 1
    %14 = vsyncpa %s13, 0
    %15 = vsyncpa [#allocation6], 0
    %16 = vsyncpa [#allocation9], 0
    %17 = vsyncpa [#allocation4], 0
    %s18 = scalar_lea.sflag [#allocation4], 1
    %19 = vsyncpa %s18, 0
    loop: start=0, step=1, limit=4
    $region2: #{tpu_custom_call.1} parent=1 // loop_pre_header
      _
    $region3: #{tpu_custom_call.1} parent=1 // loop_header
      %s21 = sphi 0, %s25
      %p22 = scmp.ge.s32.totalorder %s21, 4
      %s28 = sphi 0, %s40
      %s29 = sphi 0, %s36
      %s30 = sphi 0, %s28
      %s31 = sphi 0, %s29
      %s32 = sphi 0, %s30
      %s33 = sphi 0, %s31
      %s45 = sphi 0, %s47
      %s48 = sphi 0, %s45
      %s49 = sphi 0, %s48
      %s65 = sphi 0, %s49
      %s71 = sphi 0, %s73
      %s74 = sphi 0, %s71
      %s75 = sphi 0, %s74
      %s91 = sphi 0, %s75
      %s95 = sphi 0, %s95
      %s97 = sphi 0, %s95
      %s98 = sphi 0, %s97
      %s112 = sphi 0, %s98
      %s116 = sphi 0, %s116
      %s118 = sphi 0, %s116
      %s119 = sphi 0, %s118
      %s133 = sphi 0, %s119
      %s137 = sphi 0, %s137
      %s139 = sphi 0, %s137
      %s140 = sphi 0, %s139
      %s154 = sphi 0, %s140
      %s158 = sphi 0, %s158
      %s160 = sphi 0, %s158
      %s161 = sphi 0, %s160
      %s175 = sphi 0, %s161
      %s179 = sphi 0, %s179
      %s181 = sphi 0, %s179
      %s182 = sphi 0, %s181
      %s196 = sphi 0, %s182
      %s204 = sphi 0, %s206
      %s207 = sphi 0, %s204
      %s208 = sphi 0, %s207
      %s224 = sphi 0, %s208
    $region4: #{tpu_custom_call.1} parent=1 // loop_header_branch
      %24 = sbr.rel (%p22) target = $region8
    $region5: #{tpu_custom_call.1} parent=1 // loop_body
      %s26 = ssub.s32 %s21, 1
      %s27 = ssub.s32 %s21, 2
      %s34 = sadd.s32 1, %s29
      %p35 = scmp.ge.s32.totalorder %s34, 1
      %s36 = scalar_select %p35, 0, %s34
      %s37 = sadd.s32 1, %s28
      %s38 = scalar_select %p35, %s37, %s28
      %p39 = scmp.ge.s32.totalorder %s38, 2
      %s40 = scalar_select %p39, 0, %s38
      %s41 = ssub.s32 %s28, %s40
      %s42 = ssub.s32 %s29, %s36
      %s43 = sor.u32 %s41, %s42
      %p44 = scmp.eq.s32.totalorder %s43, 0
      %s46 = sadd.s32 %s45, 1
      %s47 = scalar_select %p44, %s45, %s46
      %p50 = pneg %p44
      %p51 = scmp.eq.s32.totalorder %s21, 1
      %p52 = por %p50, %p51
      %p53 = scmp.ne.s32.totalorder %s45, %s48
      %p54 = scmp.eq.s32.totalorder %s21, 0
      %p55 = por %p53, %p54
      %p56 = scmp.ne.s32.totalorder %s45, %s48
      %p57 = scmp.eq.s32.totalorder %s26, 1
      %p58 = por %p56, %p57
      %p59 = scmp.ne.s32.totalorder %s48, %s49
      %p60 = scmp.eq.s32.totalorder %s26, 0
      %p61 = por %p59, %p60
      %p62 = scmp.ne.s32.totalorder %s48, %s49
      %p63 = scmp.eq.s32.totalorder %s27, 1
      %p64 = por %p62, %p63
      %p66 = scmp.ne.s32.totalorder %s49, %s65
      %p67 = scmp.eq.s32.totalorder %s27, 0
      %p68 = por %p66, %p67
      %s69 = ssub.s32 %s28, %s40
      %p70 = scmp.eq.s32.totalorder %s69, 0
      %s72 = sadd.s32 %s71, 1
      %s73 = scalar_select %p70, %s71, %s72
      %p76 = pneg %p70
      %p77 = scmp.eq.s32.totalorder %s21, 1
      %p78 = por %p76, %p77
      %p79 = scmp.ne.s32.totalorder %s71, %s74
      %p80 = scmp.eq.s32.totalorder %s21, 0
      %p81 = por %p79, %p80
      %p82 = scmp.ne.s32.totalorder %s71, %s74
      %p83 = scmp.eq.s32.totalorder %s26, 1
      %p84 = por %p82, %p83
      %p85 = scmp.ne.s32.totalorder %s74, %s75
      %p86 = scmp.eq.s32.totalorder %s26, 0
      %p87 = por %p85, %p86
      %p88 = scmp.ne.s32.totalorder %s74, %s75
      %p89 = scmp.eq.s32.totalorder %s27, 1
      %p90 = por %p88, %p89
      %p92 = scmp.ne.s32.totalorder %s75, %s91
      %p93 = scmp.eq.s32.totalorder %s27, 0
      %p94 = por %p92, %p93
      %s96 = sadd.s32 %s95, 1
      %p99 = scmp.eq.s32.totalorder %s21, 1
      %p100 = scmp.ne.s32.totalorder %s95, %s97
      %p101 = scmp.eq.s32.totalorder %s21, 0
      %p102 = por %p100, %p101
      %p103 = scmp.ne.s32.totalorder %s95, %s97
      %p104 = scmp.eq.s32.totalorder %s26, 1
      %p105 = por %p103, %p104
      %p106 = scmp.ne.s32.totalorder %s97, %s98
      %p107 = scmp.eq.s32.totalorder %s26, 0
      %p108 = por %p106, %p107
      %p109 = scmp.ne.s32.totalorder %s97, %s98
      %p110 = scmp.eq.s32.totalorder %s27, 1
      %p111 = por %p109, %p110
      %p113 = scmp.ne.s32.totalorder %s98, %s112
      %p114 = scmp.eq.s32.totalorder %s27, 0
      %p115 = por %p113, %p114
      %s117 = sadd.s32 %s116, 1
      %p120 = scmp.eq.s32.totalorder %s21, 1
      %p121 = scmp.ne.s32.totalorder %s116, %s118
      %p122 = scmp.eq.s32.totalorder %s21, 0
      %p123 = por %p121, %p122
      %p124 = scmp.ne.s32.totalorder %s116, %s118
      %p125 = scmp.eq.s32.totalorder %s26, 1
      %p126 = por %p124, %p125
      %p127 = scmp.ne.s32.totalorder %s118, %s119
      %p128 = scmp.eq.s32.totalorder %s26, 0
      %p129 = por %p127, %p128
      %p130 = scmp.ne.s32.totalorder %s118, %s119
      %p131 = scmp.eq.s32.totalorder %s27, 1
      %p132 = por %p130, %p131
      %p134 = scmp.ne.s32.totalorder %s119, %s133
      %p135 = scmp.eq.s32.totalorder %s27, 0
      %p136 = por %p134, %p135
      %s138 = sadd.s32 %s137, 1
      %p141 = scmp.eq.s32.totalorder %s21, 1
      %p142 = scmp.ne.s32.totalorder %s137, %s139
      %p143 = scmp.eq.s32.totalorder %s21, 0
      %p144 = por %p142, %p143
      %p145 = scmp.ne.s32.totalorder %s137, %s139
      %p146 = scmp.eq.s32.totalorder %s26, 1
      %p147 = por %p145, %p146
      %p148 = scmp.ne.s32.totalorder %s139, %s140
      %p149 = scmp.eq.s32.totalorder %s26, 0
      %p150 = por %p148, %p149
      %p151 = scmp.ne.s32.totalorder %s139, %s140
      %p152 = scmp.eq.s32.totalorder %s27, 1
      %p153 = por %p151, %p152
      %p155 = scmp.ne.s32.totalorder %s140, %s154
      %p156 = scmp.eq.s32.totalorder %s27, 0
      %p157 = por %p155, %p156
      %s159 = sadd.s32 %s158, 1
      %p162 = scmp.eq.s32.totalorder %s21, 1
      %p163 = scmp.ne.s32.totalorder %s158, %s160
      %p164 = scmp.eq.s32.totalorder %s21, 0
      %p165 = por %p163, %p164
      %p166 = scmp.ne.s32.totalorder %s158, %s160
      %p167 = scmp.eq.s32.totalorder %s26, 1
      %p168 = por %p166, %p167
      %p169 = scmp.ne.s32.totalorder %s160, %s161
      %p170 = scmp.eq.s32.totalorder %s26, 0
      %p171 = por %p169, %p170
      %p172 = scmp.ne.s32.totalorder %s160, %s161
      %p173 = scmp.eq.s32.totalorder %s27, 1
      %p174 = por %p172, %p173
      %p176 = scmp.ne.s32.totalorder %s161, %s175
      %p177 = scmp.eq.s32.totalorder %s27, 0
      %p178 = por %p176, %p177
      %s180 = sadd.s32 %s179, 1
      %p183 = scmp.eq.s32.totalorder %s21, 1
      %p184 = scmp.ne.s32.totalorder %s179, %s181
      %p185 = scmp.eq.s32.totalorder %s21, 0
      %p186 = por %p184, %p185
      %p187 = scmp.ne.s32.totalorder %s179, %s181
      %p188 = scmp.eq.s32.totalorder %s26, 1
      %p189 = por %p187, %p188
      %p190 = scmp.ne.s32.totalorder %s181, %s182
      %p191 = scmp.eq.s32.totalorder %s26, 0
      %p192 = por %p190, %p191
      %p193 = scmp.ne.s32.totalorder %s181, %s182
      %p194 = scmp.eq.s32.totalorder %s27, 1
      %p195 = por %p193, %p194
      %p197 = scmp.ne.s32.totalorder %s182, %s196
      %p198 = scmp.eq.s32.totalorder %s27, 0
      %p199 = por %p197, %p198
      %s200 = ssub.s32 %s28, %s40
      %s201 = ssub.s32 %s29, %s36
      %s202 = sor.u32 %s200, %s201
      %p203 = scmp.eq.s32.totalorder %s202, 0
      %s205 = sadd.s32 %s204, 1
      %s206 = scalar_select %p203, %s204, %s205
      %p209 = pneg %p203
      %p210 = scmp.eq.s32.totalorder %s21, 1
      %p211 = por %p209, %p210
      %p212 = scmp.ne.s32.totalorder %s204, %s207
      %p213 = scmp.eq.s32.totalorder %s21, 0
      %p214 = por %p212, %p213
      %p215 = scmp.ne.s32.totalorder %s204, %s207
      %p216 = scmp.eq.s32.totalorder %s26, 1
      %p217 = por %p215, %p216
      %p218 = scmp.ne.s32.totalorder %s207, %s208
      %p219 = scmp.eq.s32.totalorder %s26, 0
      %p220 = por %p218, %p219
      %p221 = scmp.ne.s32.totalorder %s207, %s208
      %p222 = scmp.eq.s32.totalorder %s27, 1
      %p223 = por %p221, %p222
      %p225 = scmp.ne.s32.totalorder %s208, %s224
      %p226 = scmp.eq.s32.totalorder %s27, 0
      %p227 = por %p225, %p226
      %p228 = scmp.le.s32.totalorder 1, %s21
      %p229 = scmp.lt.s32.totalorder %s21, 3
      %p230 = pnand %p228, %p229
      %p231 = pneg %p230
      // Predicated region
      $region9: #{tpu_custom_call.1} parent=5 // pred_check
        _
      $region10: #{tpu_custom_call.1} parent=5 // pred_check_branch
        %233 = sbr.rel (%p230) target = $region12
      $region11: #{tpu_custom_call.1} parent=5 // pred_region
        %s234 = ssub.s32 %s21, 1
        // Predicated region
        $region13: #{tpu_custom_call.1} parent=11 // pred_check
          %p235 = pneg %p108
        $region14: #{tpu_custom_call.1} parent=11 // pred_check_branch
          %237 = sbr.rel (%p235) target = $region16
        $region15: #{tpu_custom_call.1} parent=11 // pred_region
          %s239 = ssub.s32 1024, 1024
          %240 = vsyncadd [#allocation6], %s239
          %s241 = sshll.u32 [#allocation5], 4
          %s242 = int_to_ptr.vmem [resolvable:$true] %s241
          %247 = dma.hbm_to_vmem [thread:$0]  %s2, 1024, %s242, [#allocation6], 64, 64, 4
        $region16: #{tpu_custom_call.1} parent=11 // pred_fallthru
          _
        // Predicated region
        $region17: #{tpu_custom_call.1} parent=11 // pred_check
          %p248 = pneg %p129
        $region18: #{tpu_custom_call.1} parent=11 // pred_check_branch
          %250 = sbr.rel (%p248) target = $region20
        $region19: #{tpu_custom_call.1} parent=11 // pred_region
          %s252 = ssub.s32 2048, 2048
          %253 = vsyncadd [#allocation6], %s252
          %s254 = sshll.u32 [#allocation7], 4
          %s255 = int_to_ptr.vmem [resolvable:$true] %s254
          %260 = dma.hbm_to_vmem [thread:$0]  %s3, 2048, %s255, [#allocation6], 64, 64, 4
        $region20: #{tpu_custom_call.1} parent=11 // pred_fallthru
          _
        // Predicated region
        $region21: #{tpu_custom_call.1} parent=11 // pred_check
          %p261 = pneg %p150
        $region22: #{tpu_custom_call.1} parent=11 // pred_check_branch
          %263 = sbr.rel (%p261) target = $region24
        $region23: #{tpu_custom_call.1} parent=11 // pred_region
          _
        $region24: #{tpu_custom_call.1} parent=11 // pred_fallthru
          _
        // Predicated region
        $region25: #{tpu_custom_call.1} parent=11 // pred_check
          %p264 = pneg %p171
        $region26: #{tpu_custom_call.1} parent=11 // pred_check_branch
          %266 = sbr.rel (%p264) target = $region28
        $region27: #{tpu_custom_call.1} parent=11 // pred_region
          %s268 = ssub.s32 24576, 24576
          %269 = vsyncadd [#allocation9], %s268
          %s270 = sshll.u32 [#allocation8], 4
          %s271 = int_to_ptr.vmem [resolvable:$true] %s270
          %276 = dma.hbm_to_vmem [thread:$0]  %s5, 24576, %s271, [#allocation9], 1536, 1536, 96
        $region28: #{tpu_custom_call.1} parent=11 // pred_fallthru
          _
        // Predicated region
        $region29: #{tpu_custom_call.1} parent=11 // pred_check
          %p277 = pneg %p192
        $region30: #{tpu_custom_call.1} parent=11 // pred_check_branch
          %279 = sbr.rel (%p277) target = $region32
        $region31: #{tpu_custom_call.1} parent=11 // pred_region
          %s281 = ssub.s32 384, 384
          %282 = vsyncadd [#allocation9], %s281
          %s284 = sshll.u32 [#allocation10], 4
          %s285 = int_to_ptr.vmem [resolvable:$true] %s284
          %287 = dma.hbm_to_vmem [thread:$0]  %s6, 384, %s285, [#allocation9]
        $region32: #{tpu_custom_call.1} parent=11 // pred_fallthru
          _
      $region12: #{tpu_custom_call.1} parent=5 // pred_fallthru
        _
      %p288 = scmp.lt.s32.totalorder %s21, 2
      // Predicated region
      $region33: #{tpu_custom_call.1} parent=5 // pred_check
        %p289 = pneg %p288
      $region34: #{tpu_custom_call.1} parent=5 // pred_check_branch
        %291 = sbr.rel (%p289) target = $region36
      $region35: #{tpu_custom_call.1} parent=5 // pred_region
        // Predicated region
        $region37: #{tpu_custom_call.1} parent=35 // pred_check
          %p292 = pneg %p55
        $region38: #{tpu_custom_call.1} parent=35 // pred_check_branch
          %294 = sbr.rel (%p292) target = $region40
        $region39: #{tpu_custom_call.1} parent=35 // pred_region
          %s295 = sand.u32 %s45, 1
          %s296 = scalar_lea.sflag [#allocation3], %s295
          %s297 = sand.u32 %s45, 1
          %s298 = smul.addr %s297, 16
          %s299 = scalar_lea.vmem [#allocation2], %s298
          %s300 = smul.u32 2, %s29
          %s302 = ssub.s32 256, 256
          %303 = vsyncadd %s296, %s302
          %s304 = smul.addr %s28, 2
          %s305 = sadd.s32 %s300, %s304
          %s306 = smul.addr %s305, 128
          %s307 = scalar_lea.hbm %s0, %s306
          %s308 = sshll.u32 %s299, 4
          %s309 = int_to_ptr.vmem [resolvable:$true] %s308
          %314 = dma.hbm_to_vmem [thread:$0]  %s307, 256, %s309, %s296, 128, 128, 8
        $region40: #{tpu_custom_call.1} parent=35 // pred_fallthru
          _
        // Predicated region
        $region41: #{tpu_custom_call.1} parent=35 // pred_check
          %p315 = pneg %p81
        $region42: #{tpu_custom_call.1} parent=35 // pred_check_branch
          %317 = sbr.rel (%p315) target = $region44
        $region43: #{tpu_custom_call.1} parent=35 // pred_region
          %p318 = scmp.lt.s32.totalorder %s28, 1
          %s319 = scalar_select %p318, %s28, 1
          %s320 = scalar_lea.vmem %s1, %s319
        $region44: #{tpu_custom_call.1} parent=35 // pred_fallthru
          _
      $region36: #{tpu_custom_call.1} parent=5 // pred_fallthru
        _
      %p321 = scmp.le.s32.totalorder 1, %s21
      %p322 = scmp.lt.s32.totalorder %s21, 3
      %p323 = pnand %p321, %p322
      %p324 = pneg %p323
      // Predicated region
      $region45: #{tpu_custom_call.1} parent=5 // pred_check
        _
      $region46: #{tpu_custom_call.1} parent=5 // pred_check_branch
        %326 = sbr.rel (%p323) target = $region48
      $region47: #{tpu_custom_call.1} parent=5 // pred_region
        %s327 = ssub.s32 %s21, 1
        %s328 = sand.u32 %s48, 1
        %s329 = scalar_lea.sflag [#allocation3], %s328
        %s330 = sand.u32 %s48, 1
        %s331 = smul.addr %s330, 16
        %s332 = scalar_lea.vmem [#allocation2], %s331
        // Predicated region
        $region49: #{tpu_custom_call.1} parent=47 // pred_check
          %p333 = pneg %p61
        $region50: #{tpu_custom_call.1} parent=47 // pred_check_branch
          %335 = sbr.rel (%p333) target = $region52
        $region51: #{tpu_custom_call.1} parent=47 // pred_region
          %336 = dma.done %s329, 256
        $region52: #{tpu_custom_call.1} parent=47 // pred_fallthru
          _
        // Predicated region
        $region53: #{tpu_custom_call.1} parent=47 // pred_check
          %p337 = pneg %p108
        $region54: #{tpu_custom_call.1} parent=47 // pred_check_branch
          %339 = sbr.rel (%p337) target = $region56
        $region55: #{tpu_custom_call.1} parent=47 // pred_region
          %340 = dma.done [#allocation6], 1024
        $region56: #{tpu_custom_call.1} parent=47 // pred_fallthru
          _
        // Predicated region
        $region57: #{tpu_custom_call.1} parent=47 // pred_check
          %p341 = pneg %p129
        $region58: #{tpu_custom_call.1} parent=47 // pred_check_branch
          %343 = sbr.rel (%p341) target = $region60
        $region59: #{tpu_custom_call.1} parent=47 // pred_region
          %344 = dma.done [#allocation6], 2048
        $region60: #{tpu_custom_call.1} parent=47 // pred_fallthru
          _
        // Predicated region
        $region61: #{tpu_custom_call.1} parent=47 // pred_check
          %p345 = pneg %p171
        $region62: #{tpu_custom_call.1} parent=47 // pred_check_branch
          %347 = sbr.rel (%p345) target = $region64
        $region63: #{tpu_custom_call.1} parent=47 // pred_region
          %348 = dma.done [#allocation9], 24576
        $region64: #{tpu_custom_call.1} parent=47 // pred_fallthru
          _
        // Predicated region
        $region65: #{tpu_custom_call.1} parent=47 // pred_check
          %p349 = pneg %p192
        $region66: #{tpu_custom_call.1} parent=47 // pred_check_branch
          %351 = sbr.rel (%p349) target = $region68
        $region67: #{tpu_custom_call.1} parent=47 // pred_region
          %352 = dma.done [#allocation9], 384
        $region68: #{tpu_custom_call.1} parent=47 // pred_fallthru
          _
        %s353 = sand.u32 %s48, 1
        %s354 = scalar_lea.sflag [#allocation3], %s353
        %s355 = sand.u32 %s48, 1
        %s356 = smul.addr %s355, 16
        %s357 = scalar_lea.vmem [#allocation2], %s356
        %p358 = pneg %p61
        %p359 = pneg %p58
        %p360 = scmp.lt.s32.totalorder %s30, 1
        %s361 = scalar_select %p360, %s30, 1
        %s362 = scalar_lea.vmem %s1, %s361
        %p363 = pneg %p87
        %p364 = pneg %p84
        %p365 = pneg %p108
        %p366 = pneg %p105
        %p367 = pneg %p129
        %p368 = pneg %p126
        %p369 = pneg %p150
        %p370 = pneg %p147
        %p371 = pneg %p171
        %p372 = pneg %p168
        %p373 = pneg %p192
        %p374 = pneg %p189
        %p375 = pneg %p220
        %p376 = pneg %p217
        %s377 = sand.u32 %s207, 1
        %s378 = scalar_lea.sflag [#allocation4], %s377
        %s379 = sand.u32 %s207, 1
        %s380 = smul.addr %s379, 192
        %s381 = scalar_lea.vmem [#allocation11], %s380
        %s382 = smul.u32 2, %s31
        %p383 = scmp.lt.s32.totalorder %s30, 1
        %s384 = scalar_select %p383, %s30, 1
        %s385 = scalar_lea.vmem %s1, %s384
        %s386 = smul.u32 2, %s31
        %v388 = vld [vmem:[%s332] sm:$0xff]
        %v389 = vld [vmem:[%s332 + $0x8] sm:$0xff]
        %v390 = vpack.c.bf16 %v389, %v388
        %v391 = vld [vmem:[#allocation5] sm:$0xf]
        %v392 = vld [vmem:[#allocation5 + $0x4] sm:$0xf]
        %v393 = vld [vmem:[#allocation5 + $0x8] sm:$0xf]
        %v394 = vld [vmem:[#allocation5 + $0xc] sm:$0xf]
        %v395 = vld [vmem:[#allocation5 + $0x10] sm:$0xf]
        %v396 = vld [vmem:[#allocation5 + $0x14] sm:$0xf]
        %v397 = vld [vmem:[#allocation5 + $0x18] sm:$0xf]
        %v398 = vld [vmem:[#allocation5 + $0x1c] sm:$0xf]
        %v399 = vld [vmem:[#allocation5 + $0x20] sm:$0xf]
        %v400 = vld [vmem:[#allocation5 + $0x24] sm:$0xf]
        %v401 = vld [vmem:[#allocation5 + $0x28] sm:$0xf]
        %v402 = vld [vmem:[#allocation5 + $0x2c] sm:$0xf]
        %v403 = vld [vmem:[#allocation5 + $0x30] sm:$0xf]
        %v404 = vld [vmem:[#allocation5 + $0x34] sm:$0xf]
        %v405 = vld [vmem:[#allocation5 + $0x38] sm:$0xf]
        %v406 = vld [vmem:[#allocation5 + $0x3c] sm:$0xf]
        %v407 = vld [vmem:[%s385] sm:$0x1]
        %v409 = vlaneseq
        %v410 = vshrl.u32 %v409, 7
        %v411 = vsub.s32 0, %v410
        %v412 = vrot.slane %v407, %v411
        %v430 = vunpack.c.l.b16 %v391
        %v431 = vunpack.c.l.b16 %v392
        %v432 = vunpack.c.l.b16 %v393
        %v433 = vunpack.c.l.b16 %v394
        %v434 = vunpack.c.l.b16 %v395
        %v435 = vunpack.c.l.b16 %v396
        %v436 = vunpack.c.l.b16 %v397
        %v437 = vunpack.c.l.b16 %v398
        %v438 = vunpack.c.l.b16 %v399
        %v439 = vunpack.c.l.b16 %v400
        %v440 = vunpack.c.l.b16 %v401
        %v441 = vunpack.c.l.b16 %v402
        %v442 = vunpack.c.l.b16 %v403
        %v443 = vunpack.c.l.b16 %v404
        %v444 = vunpack.c.l.b16 %v405
        %v445 = vunpack.c.l.b16 %v406
        %v446 = vpack.c.b16 %v431, %v430
        %v447 = vpack.c.b16 %v433, %v432
        %v448 = vpack.c.b16 %v435, %v434
        %v449 = vpack.c.b16 %v437, %v436
        %v450 = vpack.c.b16 %v439, %v438
        %v451 = vpack.c.b16 %v441, %v440
        %v452 = vpack.c.b16 %v443, %v442
        %v453 = vpack.c.b16 %v445, %v444
        %462 = vmatprep.subr.bf16.mxu0 0
        %463 = vmatpush1.bf16.msra.mxu0 %v446
        %464 = vmatprep.subr.bf16.mxu0 0
        %465 = vmatpush1.bf16.msra.mxu0 %v447
        %466 = vmatprep.subr.bf16.mxu0 0
        %467 = vmatpush1.bf16.msra.mxu0 %v448
        %468 = vmatprep.subr.bf16.mxu0 0
        %469 = vmatpush1.bf16.msra.mxu0 %v449
        %470 = vmatprep.subr.bf16.mxu0 0
        %471 = vmatpush1.bf16.msra.mxu0 %v450
        %472 = vmatprep.subr.bf16.mxu0 0
        %473 = vmatpush1.bf16.msra.mxu0 %v451
        %474 = vmatprep.subr.bf16.mxu0 0
        %475 = vmatpush1.bf16.msra.mxu0 %v452
        %476 = vmatprep.subr.bf16.mxu0 0
        %477 = vmatpush1.bf16.msra.mxu0 %v453
        %478 = vmatprep.subr.bf16.mxu0 0
        %479 = vmatpush1.bf16.msra.mxu0 0
        %480 = vmatprep.subr.bf16.mxu0 0
        %481 = vmatpush1.bf16.msra.mxu0 0
        %482 = vmatprep.subr.bf16.mxu0 0
        %483 = vmatpush1.bf16.msra.mxu0 0
        %484 = vmatprep.subr.bf16.mxu0 0
        %485 = vmatpush1.bf16.msra.mxu0 0
        %486 = vmatprep.subr.bf16.mxu0 0
        %487 = vmatpush1.bf16.msra.mxu0 0
        %488 = vmatprep.subr.bf16.mxu0 0
        %489 = vmatpush1.bf16.msra.mxu0 0
        %490 = vmatprep.subr.bf16.mxu0 0
        %491 = vmatpush1.bf16.msra.mxu0 0
        %492 = vmatprep.subr.bf16.mxu0 0
        %493 = vmatpush1.bf16.msra.mxu0 0
        %494 = vmatprep.mubr.bf16.mxu0 0
        %495 = vmatmul.mubr.bf16.gmra.mrb[0].mxu0 %v390
        %v496 = vpop.f32.mrb[0].mxu0
        %v497 = vadd.f32 %v412, %v496
        %v498 = vpop.f32.mrb[0].mxu0
        %v499 = vpop.f32.mrb[0].mxu0
        %v500 = vadd.f32 %v412, %v499
        %v501 = vpop.f32.mrb[0].mxu0
        %502 = vdwg.mxu0
        %503 = vadd.xlane.f32.xlu0 %v497
        %v504 = vpop.xlane.xlu0 %503
        %505 = vadd.xlane.f32.xlu0 %v500
        %v506 = vpop.xlane.xlu0 %505
        %v507 = vrcp.pop 128.0
        %v508 = vmul.f32 %v504, %v507
        %v509 = vmul.f32 %v506, %v507
        %v510 = vsub.f32 %v497, %v508
        %v511 = vsub.f32 %v500, %v509
        %v512 = vmul.f32 %v510, %v510
        %v513 = vmul.f32 %v511, %v511
        %514 = vadd.xlane.f32.xlu0 %v512
        %v515 = vpop.xlane.xlu0 %514
        %516 = vadd.xlane.f32.xlu0 %v513
        %v517 = vpop.xlane.xlu0 %516
        %v518 = vmul.f32 %v515, %v507
        %v519 = vmul.f32 %v517, %v507
        %v520 = vadd.f32 %v518, 1e-05
        %v521 = vadd.f32 %v519, 1e-05
        %v522 = vrsqrt.pop %v520
        %v523 = vrsqrt.pop %v521
        %v524 = vmul.f32 %v510, %v522
        %v525 = vmul.f32 %v511, %v523
        %v526 = vpack.c.bf16 %v525, %v524
        %v527 = vld [vmem:[#allocation7] sm:$0xf]
        %v528 = vld [vmem:[#allocation7 + $0x4] sm:$0xf]
        %v529 = vld [vmem:[#allocation7 + $0x8] sm:$0xf]
        %v530 = vld [vmem:[#allocation7 + $0xc] sm:$0xf]
        %v531 = vld [vmem:[#allocation7 + $0x10] sm:$0xf]
        %v532 = vld [vmem:[#allocation7 + $0x14] sm:$0xf]
        %v533 = vld [vmem:[#allocation7 + $0x18] sm:$0xf]
        %v534 = vld [vmem:[#allocation7 + $0x1c] sm:$0xf]
        %v535 = vld [vmem:[#allocation7 + $0x20] sm:$0xf]
        %v536 = vld [vmem:[#allocation7 + $0x24] sm:$0xf]
        %v537 = vld [vmem:[#allocation7 + $0x28] sm:$0xf]
        %v538 = vld [vmem:[#allocation7 + $0x2c] sm:$0xf]
        %v539 = vld [vmem:[#allocation7 + $0x30] sm:$0xf]
        %v540 = vld [vmem:[#allocation7 + $0x34] sm:$0xf]
        %v541 = vld [vmem:[#allocation7 + $0x38] sm:$0xf]
        %v542 = vld [vmem:[#allocation7 + $0x3c] sm:$0xf]
        %v543 = vld [vmem:[#allocation7 + $0x40] sm:$0xf]
        %v544 = vld [vmem:[#allocation7 + $0x44] sm:$0xf]
        %v545 = vld [vmem:[#allocation7 + $0x48] sm:$0xf]
        %v546 = vld [vmem:[#allocation7 + $0x4c] sm:$0xf]
        %v547 = vld [vmem:[#allocation7 + $0x50] sm:$0xf]
        %v548 = vld [vmem:[#allocation7 + $0x54] sm:$0xf]
        %v549 = vld [vmem:[#allocation7 + $0x58] sm:$0xf]
        %v550 = vld [vmem:[#allocation7 + $0x5c] sm:$0xf]
        %v551 = vld [vmem:[#allocation7 + $0x60] sm:$0xf]
        %v552 = vld [vmem:[#allocation7 + $0x64] sm:$0xf]
        %v553 = vld [vmem:[#allocation7 + $0x68] sm:$0xf]
        %v554 = vld [vmem:[#allocation7 + $0x6c] sm:$0xf]
        %v555 = vld [vmem:[#allocation7 + $0x70] sm:$0xf]
        %v556 = vld [vmem:[#allocation7 + $0x74] sm:$0xf]
        %v557 = vld [vmem:[#allocation7 + $0x78] sm:$0xf]
        %v558 = vld [vmem:[#allocation7 + $0x7c] sm:$0xf]
        %v559 = vld [vmem:[%s4] sm:$0x1]
        %v561 = vlaneseq
        %v562 = vshrl.u32 %v561, 7
        %v563 = vsub.s32 0, %v562
        %v564 = vrot.slane %v559, %v563
        %v598 = vunpack.c.l.b16 %v527
        %v599 = vunpack.c.l.b16 %v528
        %v600 = vunpack.c.l.b16 %v529
        %v601 = vunpack.c.l.b16 %v530
        %v602 = vunpack.c.l.b16 %v531
        %v603 = vunpack.c.l.b16 %v532
        %v604 = vunpack.c.l.b16 %v533
        %v605 = vunpack.c.l.b16 %v534
        %v606 = vunpack.c.l.b16 %v535
        %v607 = vunpack.c.l.b16 %v536
        %v608 = vunpack.c.l.b16 %v537
        %v609 = vunpack.c.l.b16 %v538
        %v610 = vunpack.c.l.b16 %v539
        %v611 = vunpack.c.l.b16 %v540
        %v612 = vunpack.c.l.b16 %v541
        %v613 = vunpack.c.l.b16 %v542
        %v614 = vunpack.c.l.b16 %v543
        %v615 = vunpack.c.l.b16 %v544
        %v616 = vunpack.c.l.b16 %v545
        %v617 = vunpack.c.l.b16 %v546
        %v618 = vunpack.c.l.b16 %v547
        %v619 = vunpack.c.l.b16 %v548
        %v620 = vunpack.c.l.b16 %v549
        %v621 = vunpack.c.l.b16 %v550
        %v622 = vunpack.c.l.b16 %v551
        %v623 = vunpack.c.l.b16 %v552
        %v624 = vunpack.c.l.b16 %v553
        %v625 = vunpack.c.l.b16 %v554
        %v626 = vunpack.c.l.b16 %v555
        %v627 = vunpack.c.l.b16 %v556
        %v628 = vunpack.c.l.b16 %v557
        %v629 = vunpack.c.l.b16 %v558
        %v630 = vpack.c.b16 %v599, %v598
        %v631 = vpack.c.b16 %v601, %v600
        %v632 = vpack.c.b16 %v603, %v602
        %v633 = vpack.c.b16 %v605, %v604
        %v634 = vpack.c.b16 %v607, %v606
        %v635 = vpack.c.b16 %v609, %v608
        %v636 = vpack.c.b16 %v611, %v610
        %v637 = vpack.c.b16 %v613, %v612
        %v638 = vpack.c.b16 %v615, %v614
        %v639 = vpack.c.b16 %v617, %v616
        %v640 = vpack.c.b16 %v619, %v618
        %v641 = vpack.c.b16 %v621, %v620
        %v642 = vpack.c.b16 %v623, %v622
        %v643 = vpack.c.b16 %v625, %v624
        %v644 = vpack.c.b16 %v627, %v626
        %v645 = vpack.c.b16 %v629, %v628
        %662 = vmatprep.subr.bf16.mxu0 0
        %663 = vmatpush1.bf16.msra.mxu0 %v630
        %664 = vmatprep.subr.bf16.mxu0 0
        %665 = vmatpush1.bf16.msra.mxu0 %v631
        %666 = vmatprep.subr.bf16.mxu0 0
        %667 = vmatpush1.bf16.msra.mxu0 %v632
        %668 = vmatprep.subr.bf16.mxu0 0
        %669 = vmatpush1.bf16.msra.mxu0 %v633
        %670 = vmatprep.subr.bf16.mxu0 0
        %671 = vmatpush1.bf16.msra.mxu0 %v634
        %672 = vmatprep.subr.bf16.mxu0 0
        %673 = vmatpush1.bf16.msra.mxu0 %v635
        %674 = vmatprep.subr.bf16.mxu0 0
        %675 = vmatpush1.bf16.msra.mxu0 %v636
        %676 = vmatprep.subr.bf16.mxu0 0
        %677 = vmatpush1.bf16.msra.mxu0 %v637
        %678 = vmatprep.subr.bf16.mxu0 0
        %679 = vmatpush1.bf16.msra.mxu0 %v638
        %680 = vmatprep.subr.bf16.mxu0 0
        %681 = vmatpush1.bf16.msra.mxu0 %v639
        %682 = vmatprep.subr.bf16.mxu0 0
        %683 = vmatpush1.bf16.msra.mxu0 %v640
        %684 = vmatprep.subr.bf16.mxu0 0
        %685 = vmatpush1.bf16.msra.mxu0 %v641
        %686 = vmatprep.subr.bf16.mxu0 0
        %687 = vmatpush1.bf16.msra.mxu0 %v642
        %688 = vmatprep.subr.bf16.mxu0 0
        %689 = vmatpush1.bf16.msra.mxu0 %v643
        %690 = vmatprep.subr.bf16.mxu0 0
        %691 = vmatpush1.bf16.msra.mxu0 %v644
        %692 = vmatprep.subr.bf16.mxu0 0
        %693 = vmatpush1.bf16.msra.mxu0 %v645
        %694 = vmatprep.mubr.bf16.mxu0 %v390
        %695 = vmatmul.mubr.bf16.gmra.mrb[0].mxu0 %v526
        %v696 = vpop.f32.mrb[0].mxu0
        %v697 = vadd.f32 %v564, %v696
        %v698 = vpop.f32.mrb[0].mxu0
        %v699 = vpop.f32.mrb[0].mxu0
        %v700 = vadd.f32 %v564, %v699
        %v701 = vpop.f32.mrb[0].mxu0
        %702 = vdwg.mxu0
        %v703 = vpack.c.bf16 %v700, %v697
        %v704 = vld [vmem:[#allocation8] sm:$0xff]
        %v705 = vld [vmem:[#allocation8 + $0x8] sm:$0xff]
        %v706 = vld [vmem:[#allocation8 + $0x10] sm:$0xff]
        %v707 = vld [vmem:[#allocation8 + $0x18] sm:$0xff]
        %v708 = vld [vmem:[#allocation8 + $0x20] sm:$0xff]
        %v709 = vld [vmem:[#allocation8 + $0x28] sm:$0xff]
        %v710 = vld [vmem:[#allocation8 + $0x30] sm:$0xff]
        %v711 = vld [vmem:[#allocation8 + $0x38] sm:$0xff]
        %v712 = vld [vmem:[#allocation8 + $0x40] sm:$0xff]
        %v713 = vld [vmem:[#allocation8 + $0x48] sm:$0xff]
        %v714 = vld [vmem:[#allocation8 + $0x50] sm:$0xff]
        %v715 = vld [vmem:[#allocation8 + $0x58] sm:$0xff]
        %v716 = vld [vmem:[#allocation8 + $0x60] sm:$0xff]
        %v717 = vld [vmem:[#allocation8 + $0x68] sm:$0xff]
        %v718 = vld [vmem:[#allocation8 + $0x70] sm:$0xff]
        %v719 = vld [vmem:[#allocation8 + $0x78] sm:$0xff]
        %v720 = vld [vmem:[#allocation8 + $0x80] sm:$0xff]
        %v721 = vld [vmem:[#allocation8 + $0x88] sm:$0xff]
        %v722 = vld [vmem:[#allocation8 + $0x90] sm:$0xff]
        %v723 = vld [vmem:[#allocation8 + $0x98] sm:$0xff]
        %v724 = vld [vmem:[#allocation8 + $0xa0] sm:$0xff]
        %v725 = vld [vmem:[#allocation8 + $0xa8] sm:$0xff]
        %v726 = vld [vmem:[#allocation8 + $0xb0] sm:$0xff]
        %v727 = vld [vmem:[#allocation8 + $0xb8] sm:$0xff]
        %v728 = vld [vmem:[#allocation8 + $0xc0] sm:$0xff]
        %v729 = vld [vmem:[#allocation8 + $0xc8] sm:$0xff]
        %v730 = vld [vmem:[#allocation8 + $0xd0] sm:$0xff]
        %v731 = vld [vmem:[#allocation8 + $0xd8] sm:$0xff]
        %v732 = vld [vmem:[#allocation8 + $0xe0] sm:$0xff]
        %v733 = vld [vmem:[#allocation8 + $0xe8] sm:$0xff]
        %v734 = vld [vmem:[#allocation8 + $0xf0] sm:$0xff]
        %v735 = vld [vmem:[#allocation8 + $0xf8] sm:$0xff]
        %v736 = vld [vmem:[#allocation8 + $0x100] sm:$0xff]
        %v737 = vld [vmem:[#allocation8 + $0x108] sm:$0xff]
        %v738 = vld [vmem:[#allocation8 + $0x110] sm:$0xff]
        %v739 = vld [vmem:[#allocation8 + $0x118] sm:$0xff]
        %v740 = vld [vmem:[#allocation8 + $0x120] sm:$0xff]
        %v741 = vld [vmem:[#allocation8 + $0x128] sm:$0xff]
        %v742 = vld [vmem:[#allocation8 + $0x130] sm:$0xff]
        %v743 = vld [vmem:[#allocation8 + $0x138] sm:$0xff]
        %v744 = vld [vmem:[#allocation8 + $0x140] sm:$0xff]
        %v745 = vld [vmem:[#allocation8 + $0x148] sm:$0xff]
        %v746 = vld [vmem:[#allocation8 + $0x150] sm:$0xff]
        %v747 = vld [vmem:[#allocation8 + $0x158] sm:$0xff]
        %v748 = vld [vmem:[#allocation8 + $0x160] sm:$0xff]
        %v749 = vld [vmem:[#allocation8 + $0x168] sm:$0xff]
        %v750 = vld [vmem:[#allocation8 + $0x170] sm:$0xff]
        %v751 = vld [vmem:[#allocation8 + $0x178] sm:$0xff]
        %v752 = vld [vmem:[#allocation8 + $0x180] sm:$0xff]
        %v753 = vld [vmem:[#allocation8 + $0x188] sm:$0xff]
        %v754 = vld [vmem:[#allocation8 + $0x190] sm:$0xff]
        %v755 = vld [vmem:[#allocation8 + $0x198] sm:$0xff]
        %v756 = vld [vmem:[#allocation8 + $0x1a0] sm:$0xff]
        %v757 = vld [vmem:[#allocation8 + $0x1a8] sm:$0xff]
        %v758 = vld [vmem:[#allocation8 + $0x1b0] sm:$0xff]
        %v759 = vld [vmem:[#allocation8 + $0x1b8] sm:$0xff]
        %v760 = vld [vmem:[#allocation8 + $0x1c0] sm:$0xff]
        %v761 = vld [vmem:[#allocation8 + $0x1c8] sm:$0xff]
        %v762 = vld [vmem:[#allocation8 + $0x1d0] sm:$0xff]
        %v763 = vld [vmem:[#allocation8 + $0x1d8] sm:$0xff]
        %v764 = vld [vmem:[#allocation8 + $0x1e0] sm:$0xff]
        %v765 = vld [vmem:[#allocation8 + $0x1e8] sm:$0xff]
        %v766 = vld [vmem:[#allocation8 + $0x1f0] sm:$0xff]
        %v767 = vld [vmem:[#allocation8 + $0x1f8] sm:$0xff]
        %v768 = vld [vmem:[#allocation8 + $0x200] sm:$0xff]
        %v769 = vld [vmem:[#allocation8 + $0x208] sm:$0xff]
        %v770 = vld [vmem:[#allocation8 + $0x210] sm:$0xff]
        %v771 = vld [vmem:[#allocation8 + $0x218] sm:$0xff]
        %v772 = vld [vmem:[#allocation8 + $0x220] sm:$0xff]
        %v773 = vld [vmem:[#allocation8 + $0x228] sm:$0xff]
        %v774 = vld [vmem:[#allocation8 + $0x230] sm:$0xff]
        %v775 = vld [vmem:[#allocation8 + $0x238] sm:$0xff]
        %v776 = vld [vmem:[#allocation8 + $0x240] sm:$0xff]
        %v777 = vld [vmem:[#allocation8 + $0x248] sm:$0xff]
        %v778 = vld [vmem:[#allocation8 + $0x250] sm:$0xff]
        %v779 = vld [vmem:[#allocation8 + $0x258] sm:$0xff]
        %v780 = vld [vmem:[#allocation8 + $0x260] sm:$0xff]
        %v781 = vld [vmem:[#allocation8 + $0x268] sm:$0xff]
        %v782 = vld [vmem:[#allocation8 + $0x270] sm:$0xff]
        %v783 = vld [vmem:[#allocation8 + $0x278] sm:$0xff]
        %v784 = vld [vmem:[#allocation8 + $0x280] sm:$0xff]
        %v785 = vld [vmem:[#allocation8 + $0x288] sm:$0xff]
        %v786 = vld [vmem:[#allocation8 + $0x290] sm:$0xff]
        %v787 = vld [vmem:[#allocation8 + $0x298] sm:$0xff]
        %v788 = vld [vmem:[#allocation8 + $0x2a0] sm:$0xff]
        %v789 = vld [vmem:[#allocation8 + $0x2a8] sm:$0xff]
        %v790 = vld [vmem:[#allocation8 + $0x2b0] sm:$0xff]
        %v791 = vld [vmem:[#allocation8 + $0x2b8] sm:$0xff]
        %v792 = vld [vmem:[#allocation8 + $0x2c0] sm:$0xff]
        %v793 = vld [vmem:[#allocation8 + $0x2c8] sm:$0xff]
        %v794 = vld [vmem:[#allocation8 + $0x2d0] sm:$0xff]
        %v795 = vld [vmem:[#allocation8 + $0x2d8] sm:$0xff]
        %v796 = vld [vmem:[#allocation8 + $0x2e0] sm:$0xff]
        %v797 = vld [vmem:[#allocation8 + $0x2e8] sm:$0xff]
        %v798 = vld [vmem:[#allocation8 + $0x2f0] sm:$0xff]
        %v799 = vld [vmem:[#allocation8 + $0x2f8] sm:$0xff]
        %v800 = vld [vmem:[#allocation8 + $0x300] sm:$0xff]
        %v801 = vld [vmem:[#allocation8 + $0x308] sm:$0xff]
        %v802 = vld [vmem:[#allocation8 + $0x310] sm:$0xff]
        %v803 = vld [vmem:[#allocation8 + $0x318] sm:$0xff]
        %v804 = vld [vmem:[#allocation8 + $0x320] sm:$0xff]
        %v805 = vld [vmem:[#allocation8 + $0x328] sm:$0xff]
        %v806 = vld [vmem:[#allocation8 + $0x330] sm:$0xff]
        %v807 = vld [vmem:[#allocation8 + $0x338] sm:$0xff]
        %v808 = vld [vmem:[#allocation8 + $0x340] sm:$0xff]
        %v809 = vld [vmem:[#allocation8 + $0x348] sm:$0xff]
        %v810 = vld [vmem:[#allocation8 + $0x350] sm:$0xff]
        %v811 = vld [vmem:[#allocation8 + $0x358] sm:$0xff]
        %v812 = vld [vmem:[#allocation8 + $0x360] sm:$0xff]
        %v813 = vld [vmem:[#allocation8 + $0x368] sm:$0xff]
        %v814 = vld [vmem:[#allocation8 + $0x370] sm:$0xff]
        %v815 = vld [vmem:[#allocation8 + $0x378] sm:$0xff]
        %v816 = vld [vmem:[#allocation8 + $0x380] sm:$0xff]
        %v817 = vld [vmem:[#allocation8 + $0x388] sm:$0xff]
        %v818 = vld [vmem:[#allocation8 + $0x390] sm:$0xff]
        %v819 = vld [vmem:[#allocation8 + $0x398] sm:$0xff]
        %v820 = vld [vmem:[#allocation8 + $0x3a0] sm:$0xff]
        %v821 = vld [vmem:[#allocation8 + $0x3a8] sm:$0xff]
        %v822 = vld [vmem:[#allocation8 + $0x3b0] sm:$0xff]
        %v823 = vld [vmem:[#allocation8 + $0x3b8] sm:$0xff]
        %v824 = vld [vmem:[#allocation8 + $0x3c0] sm:$0xff]
        %v825 = vld [vmem:[#allocation8 + $0x3c8] sm:$0xff]
        %v826 = vld [vmem:[#allocation8 + $0x3d0] sm:$0xff]
        %v827 = vld [vmem:[#allocation8 + $0x3d8] sm:$0xff]
        %v828 = vld [vmem:[#allocation8 + $0x3e0] sm:$0xff]
        %v829 = vld [vmem:[#allocation8 + $0x3e8] sm:$0xff]
        %v830 = vld [vmem:[#allocation8 + $0x3f0] sm:$0xff]
        %v831 = vld [vmem:[#allocation8 + $0x3f8] sm:$0xff]
        %v832 = vld [vmem:[#allocation8 + $0x400] sm:$0xff]
        %v833 = vld [vmem:[#allocation8 + $0x408] sm:$0xff]
        %v834 = vld [vmem:[#allocation8 + $0x410] sm:$0xff]
        %v835 = vld [vmem:[#allocation8 + $0x418] sm:$0xff]
        %v836 = vld [vmem:[#allocation8 + $0x420] sm:$0xff]
        %v837 = vld [vmem:[#allocation8 + $0x428] sm:$0xff]
        %v838 = vld [vmem:[#allocation8 + $0x430] sm:$0xff]
        %v839 = vld [vmem:[#allocation8 + $0x438] sm:$0xff]
        %v840 = vld [vmem:[#allocation8 + $0x440] sm:$0xff]
        %v841 = vld [vmem:[#allocation8 + $0x448] sm:$0xff]
        %v842 = vld [vmem:[#allocation8 + $0x450] sm:$0xff]
        %v843 = vld [vmem:[#allocation8 + $0x458] sm:$0xff]
        %v844 = vld [vmem:[#allocation8 + $0x460] sm:$0xff]
        %v845 = vld [vmem:[#allocation8 + $0x468] sm:$0xff]
        %v846 = vld [vmem:[#allocation8 + $0x470] sm:$0xff]
        %v847 = vld [vmem:[#allocation8 + $0x478] sm:$0xff]
        %v848 = vld [vmem:[#allocation8 + $0x480] sm:$0xff]
        %v849 = vld [vmem:[#allocation8 + $0x488] sm:$0xff]
        %v850 = vld [vmem:[#allocation8 + $0x490] sm:$0xff]
        %v851 = vld [vmem:[#allocation8 + $0x498] sm:$0xff]
        %v852 = vld [vmem:[#allocation8 + $0x4a0] sm:$0xff]
        %v853 = vld [vmem:[#allocation8 + $0x4a8] sm:$0xff]
        %v854 = vld [vmem:[#allocation8 + $0x4b0] sm:$0xff]
        %v855 = vld [vmem:[#allocation8 + $0x4b8] sm:$0xff]
        %v856 = vld [vmem:[#allocation8 + $0x4c0] sm:$0xff]
        %v857 = vld [vmem:[#allocation8 + $0x4c8] sm:$0xff]
        %v858 = vld [vmem:[#allocation8 + $0x4d0] sm:$0xff]
        %v859 = vld [vmem:[#allocation8 + $0x4d8] sm:$0xff]
        %v860 = vld [vmem:[#allocation8 + $0x4e0] sm:$0xff]
        %v861 = vld [vmem:[#allocation8 + $0x4e8] sm:$0xff]
        %v862 = vld [vmem:[#allocation8 + $0x4f0] sm:$0xff]
        %v863 = vld [vmem:[#allocation8 + $0x4f8] sm:$0xff]
        %v864 = vld [vmem:[#allocation8 + $0x500] sm:$0xff]
        %v865 = vld [vmem:[#allocation8 + $0x508] sm:$0xff]
        %v866 = vld [vmem:[#allocation8 + $0x510] sm:$0xff]
        %v867 = vld [vmem:[#allocation8 + $0x518] sm:$0xff]
        %v868 = vld [vmem:[#allocation8 + $0x520] sm:$0xff]
        %v869 = vld [vmem:[#allocation8 + $0x528] sm:$0xff]
        %v870 = vld [vmem:[#allocation8 + $0x530] sm:$0xff]
        %v871 = vld [vmem:[#allocation8 + $0x538] sm:$0xff]
        %v872 = vld [vmem:[#allocation8 + $0x540] sm:$0xff]
        %v873 = vld [vmem:[#allocation8 + $0x548] sm:$0xff]
        %v874 = vld [vmem:[#allocation8 + $0x550] sm:$0xff]
        %v875 = vld [vmem:[#allocation8 + $0x558] sm:$0xff]
        %v876 = vld [vmem:[#allocation8 + $0x560] sm:$0xff]
        %v877 = vld [vmem:[#allocation8 + $0x568] sm:$0xff]
        %v878 = vld [vmem:[#allocation8 + $0x570] sm:$0xff]
        %v879 = vld [vmem:[#allocation8 + $0x578] sm:$0xff]
        %v880 = vld [vmem:[#allocation8 + $0x580] sm:$0xff]
        %v881 = vld [vmem:[#allocation8 + $0x588] sm:$0xff]
        %v882 = vld [vmem:[#allocation8 + $0x590] sm:$0xff]
        %v883 = vld [vmem:[#allocation8 + $0x598] sm:$0xff]
        %v884 = vld [vmem:[#allocation8 + $0x5a0] sm:$0xff]
        %v885 = vld [vmem:[#allocation8 + $0x5a8] sm:$0xff]
        %v886 = vld [vmem:[#allocation8 + $0x5b0] sm:$0xff]
        %v887 = vld [vmem:[#allocation8 + $0x5b8] sm:$0xff]
        %v888 = vld [vmem:[#allocation8 + $0x5c0] sm:$0xff]
        %v889 = vld [vmem:[#allocation8 + $0x5c8] sm:$0xff]
        %v890 = vld [vmem:[#allocation8 + $0x5d0] sm:$0xff]
        %v891 = vld [vmem:[#allocation8 + $0x5d8] sm:$0xff]
        %v892 = vld [vmem:[#allocation8 + $0x5e0] sm:$0xff]
        %v893 = vld [vmem:[#allocation8 + $0x5e8] sm:$0xff]
        %v894 = vld [vmem:[#allocation8 + $0x5f0] sm:$0xff]
        %v895 = vld [vmem:[#allocation8 + $0x5f8] sm:$0xff]
        %v896 = vld [vmem:[#allocation10] sm:$0xff]
        %v897 = vld [vmem:[#allocation10 + $0x8] sm:$0xff]
        %v898 = vld [vmem:[#allocation10 + $0x10] sm:$0xff]
        %v902 = vlaneseq
        %v903 = vshrl.u32 %v902, 7
        %v904 = vsub.s32 0, %v903
        %v905 = vrot.slane %v896, %v904
        %v906 = vlaneseq
        %v907 = vshrl.u32 %v906, 7
        %v908 = vsub.s32 1, %v907
        %v909 = vrot.slane %v896, %v908
        %v910 = vlaneseq
        %v911 = vshrl.u32 %v910, 7
        %v912 = vsub.s32 2, %v911
        %v913 = vrot.slane %v896, %v912
        %v914 = vlaneseq
        %v915 = vshrl.u32 %v914, 7
        %v916 = vsub.s32 3, %v915
        %v917 = vrot.slane %v896, %v916
        %v918 = vlaneseq
        %v919 = vshrl.u32 %v918, 7
        %v920 = vsub.s32 4, %v919
        %v921 = vrot.slane %v896, %v920
        %v922 = vlaneseq
        %v923 = vshrl.u32 %v922, 7
        %v924 = vsub.s32 5, %v923
        %v925 = vrot.slane %v896, %v924
        %v926 = vlaneseq
        %v927 = vshrl.u32 %v926, 7
        %v928 = vsub.s32 6, %v927
        %v929 = vrot.slane %v896, %v928
        %v930 = vlaneseq
        %v931 = vshrl.u32 %v930, 7
        %v932 = vsub.s32 7, %v931
        %v933 = vrot.slane %v896, %v932
        %v934 = vlaneseq
        %v935 = vshrl.u32 %v934, 7
        %v936 = vsub.s32 0, %v935
        %v937 = vrot.slane %v897, %v936
        %v938 = vlaneseq
        %v939 = vshrl.u32 %v938, 7
        %v940 = vsub.s32 1, %v939
        %v941 = vrot.slane %v897, %v940
        %v942 = vlaneseq
        %v943 = vshrl.u32 %v942, 7
        %v944 = vsub.s32 2, %v943
        %v945 = vrot.slane %v897, %v944
        %v946 = vlaneseq
        %v947 = vshrl.u32 %v946, 7
        %v948 = vsub.s32 3, %v947
        %v949 = vrot.slane %v897, %v948
        %v950 = vlaneseq
        %v951 = vshrl.u32 %v950, 7
        %v952 = vsub.s32 4, %v951
        %v953 = vrot.slane %v897, %v952
        %v954 = vlaneseq
        %v955 = vshrl.u32 %v954, 7
        %v956 = vsub.s32 5, %v955
        %v957 = vrot.slane %v897, %v956
        %v958 = vlaneseq
        %v959 = vshrl.u32 %v958, 7
        %v960 = vsub.s32 6, %v959
        %v961 = vrot.slane %v897, %v960
        %v962 = vlaneseq
        %v963 = vshrl.u32 %v962, 7
        %v964 = vsub.s32 7, %v963
        %v965 = vrot.slane %v897, %v964
        %v966 = vlaneseq
        %v967 = vshrl.u32 %v966, 7
        %v968 = vsub.s32 0, %v967
        %v969 = vrot.slane %v898, %v968
        %v970 = vlaneseq
        %v971 = vshrl.u32 %v970, 7
        %v972 = vsub.s32 1, %v971
        %v973 = vrot.slane %v898, %v972
        %v974 = vlaneseq
        %v975 = vshrl.u32 %v974, 7
        %v976 = vsub.s32 2, %v975
        %v977 = vrot.slane %v898, %v976
        %v978 = vlaneseq
        %v979 = vshrl.u32 %v978, 7
        %v980 = vsub.s32 3, %v979
        %v981 = vrot.slane %v898, %v980
        %v982 = vlaneseq
        %v983 = vshrl.u32 %v982, 7
        %v984 = vsub.s32 4, %v983
        %v985 = vrot.slane %v898, %v984
        %v986 = vlaneseq
        %v987 = vshrl.u32 %v986, 7
        %v988 = vsub.s32 5, %v987
        %v989 = vrot.slane %v898, %v988
        %v990 = vlaneseq
        %v991 = vshrl.u32 %v990, 7
        %v992 = vsub.s32 6, %v991
        %v993 = vrot.slane %v898, %v992
        %v994 = vlaneseq
        %v995 = vshrl.u32 %v994, 7
        %v996 = vsub.s32 7, %v995
        %v997 = vrot.slane %v898, %v996
        %v1214 = vunpack.c.l.b16 %v704
        %v1215 = vunpack.c.h.b16 %v704
        %v1216 = vunpack.c.l.b16 %v705
        %v1217 = vunpack.c.h.b16 %v705
        %v1218 = vunpack.c.l.b16 %v706
        %v1219 = vunpack.c.h.b16 %v706
        %v1220 = vunpack.c.l.b16 %v707
        %v1221 = vunpack.c.h.b16 %v707
        %v1222 = vunpack.c.l.b16 %v708
        %v1223 = vunpack.c.h.b16 %v708
        %v1224 = vunpack.c.l.b16 %v709
        %v1225 = vunpack.c.h.b16 %v709
        %v1226 = vunpack.c.l.b16 %v710
        %v1227 = vunpack.c.h.b16 %v710
        %v1228 = vunpack.c.l.b16 %v711
        %v1229 = vunpack.c.h.b16 %v711
        %v1230 = vunpack.c.l.b16 %v712
        %v1231 = vunpack.c.h.b16 %v712
        %v1232 = vunpack.c.l.b16 %v713
        %v1233 = vunpack.c.h.b16 %v713
        %v1234 = vunpack.c.l.b16 %v714
        %v1235 = vunpack.c.h.b16 %v714
        %v1236 = vunpack.c.l.b16 %v715
        %v1237 = vunpack.c.h.b16 %v715
        %v1238 = vunpack.c.l.b16 %v716
        %v1239 = vunpack.c.h.b16 %v716
        %v1240 = vunpack.c.l.b16 %v717
        %v1241 = vunpack.c.h.b16 %v717
        %v1242 = vunpack.c.l.b16 %v718
        %v1243 = vunpack.c.h.b16 %v718
        %v1244 = vunpack.c.l.b16 %v719
        %v1245 = vunpack.c.h.b16 %v719
        %v1246 = vunpack.c.l.b16 %v720
        %v1247 = vunpack.c.h.b16 %v720
        %v1248 = vunpack.c.l.b16 %v721
        %v1249 = vunpack.c.h.b16 %v721
        %v1250 = vunpack.c.l.b16 %v722
        %v1251 = vunpack.c.h.b16 %v722
        %v1252 = vunpack.c.l.b16 %v723
        %v1253 = vunpack.c.h.b16 %v723
        %v1254 = vunpack.c.l.b16 %v724
        %v1255 = vunpack.c.h.b16 %v724
        %v1256 = vunpack.c.l.b16 %v725
        %v1257 = vunpack.c.h.b16 %v725
        %v1258 = vunpack.c.l.b16 %v726
        %v1259 = vunpack.c.h.b16 %v726
        %v1260 = vunpack.c.l.b16 %v727
        %v1261 = vunpack.c.h.b16 %v727
        %v1262 = vunpack.c.l.b16 %v728
        %v1263 = vunpack.c.h.b16 %v728
        %v1264 = vunpack.c.l.b16 %v729
        %v1265 = vunpack.c.h.b16 %v729
        %v1266 = vunpack.c.l.b16 %v730
        %v1267 = vunpack.c.h.b16 %v730
        %v1268 = vunpack.c.l.b16 %v731
        %v1269 = vunpack.c.h.b16 %v731
        %v1270 = vunpack.c.l.b16 %v732
        %v1271 = vunpack.c.h.b16 %v732
        %v1272 = vunpack.c.l.b16 %v733
        %v1273 = vunpack.c.h.b16 %v733
        %v1274 = vunpack.c.l.b16 %v734
        %v1275 = vunpack.c.h.b16 %v734
        %v1276 = vunpack.c.l.b16 %v735
        %v1277 = vunpack.c.h.b16 %v735
        %v1278 = vunpack.c.l.b16 %v736
        %v1279 = vunpack.c.h.b16 %v736
        %v1280 = vunpack.c.l.b16 %v737
        %v1281 = vunpack.c.h.b16 %v737
        %v1282 = vunpack.c.l.b16 %v738
        %v1283 = vunpack.c.h.b16 %v738
        %v1284 = vunpack.c.l.b16 %v739
        %v1285 = vunpack.c.h.b16 %v739
        %v1286 = vunpack.c.l.b16 %v740
        %v1287 = vunpack.c.h.b16 %v740
        %v1288 = vunpack.c.l.b16 %v741
        %v1289 = vunpack.c.h.b16 %v741
        %v1290 = vunpack.c.l.b16 %v742
        %v1291 = vunpack.c.h.b16 %v742
        %v1292 = vunpack.c.l.b16 %v743
        %v1293 = vunpack.c.h.b16 %v743
        %v1294 = vunpack.c.l.b16 %v744
        %v1295 = vunpack.c.h.b16 %v744
        %v1296 = vunpack.c.l.b16 %v745
        %v1297 = vunpack.c.h.b16 %v745
        %v1298 = vunpack.c.l.b16 %v746
        %v1299 = vunpack.c.h.b16 %v746
        %v1300 = vunpack.c.l.b16 %v747
        %v1301 = vunpack.c.h.b16 %v747
        %v1302 = vunpack.c.l.b16 %v748
        %v1303 = vunpack.c.h.b16 %v748
        %v1304 = vunpack.c.l.b16 %v749
        %v1305 = vunpack.c.h.b16 %v749
        %v1306 = vunpack.c.l.b16 %v750
        %v1307 = vunpack.c.h.b16 %v750
        %v1308 = vunpack.c.l.b16 %v751
        %v1309 = vunpack.c.h.b16 %v751
        %v1310 = vunpack.c.l.b16 %v752
        %v1311 = vunpack.c.h.b16 %v752
        %v1312 = vunpack.c.l.b16 %v753
        %v1313 = vunpack.c.h.b16 %v753
        %v1314 = vunpack.c.l.b16 %v754
        %v1315 = vunpack.c.h.b16 %v754
        %v1316 = vunpack.c.l.b16 %v755
        %v1317 = vunpack.c.h.b16 %v755
        %v1318 = vunpack.c.l.b16 %v756
        %v1319 = vunpack.c.h.b16 %v756
        %v1320 = vunpack.c.l.b16 %v757
        %v1321 = vunpack.c.h.b16 %v757
        %v1322 = vunpack.c.l.b16 %v758
        %v1323 = vunpack.c.h.b16 %v758
        %v1324 = vunpack.c.l.b16 %v759
        %v1325 = vunpack.c.h.b16 %v759
        %v1326 = vunpack.c.l.b16 %v760
        %v1327 = vunpack.c.h.b16 %v760
        %v1328 = vunpack.c.l.b16 %v761
        %v1329 = vunpack.c.h.b16 %v761
        %v1330 = vunpack.c.l.b16 %v762
        %v1331 = vunpack.c.h.b16 %v762
        %v1332 = vunpack.c.l.b16 %v763
        %v1333 = vunpack.c.h.b16 %v763
        %v1334 = vunpack.c.l.b16 %v764
        %v1335 = vunpack.c.h.b16 %v764
        %v1336 = vunpack.c.l.b16 %v765
        %v1337 = vunpack.c.h.b16 %v765
        %v1338 = vunpack.c.l.b16 %v766
        %v1339 = vunpack.c.h.b16 %v766
        %v1340 = vunpack.c.l.b16 %v767
        %v1341 = vunpack.c.h.b16 %v767
        %v1342 = vunpack.c.l.b16 %v768
        %v1343 = vunpack.c.h.b16 %v768
        %v1344 = vunpack.c.l.b16 %v769
        %v1345 = vunpack.c.h.b16 %v769
        %v1346 = vunpack.c.l.b16 %v770
        %v1347 = vunpack.c.h.b16 %v770
        %v1348 = vunpack.c.l.b16 %v771
        %v1349 = vunpack.c.h.b16 %v771
        %v1350 = vunpack.c.l.b16 %v772
        %v1351 = vunpack.c.h.b16 %v772
        %v1352 = vunpack.c.l.b16 %v773
        %v1353 = vunpack.c.h.b16 %v773
        %v1354 = vunpack.c.l.b16 %v774
        %v1355 = vunpack.c.h.b16 %v774
        %v1356 = vunpack.c.l.b16 %v775
        %v1357 = vunpack.c.h.b16 %v775
        %v1358 = vunpack.c.l.b16 %v776
        %v1359 = vunpack.c.h.b16 %v776
        %v1360 = vunpack.c.l.b16 %v777
        %v1361 = vunpack.c.h.b16 %v777
        %v1362 = vunpack.c.l.b16 %v778
        %v1363 = vunpack.c.h.b16 %v778
        %v1364 = vunpack.c.l.b16 %v779
        %v1365 = vunpack.c.h.b16 %v779
        %v1366 = vunpack.c.l.b16 %v780
        %v1367 = vunpack.c.h.b16 %v780
        %v1368 = vunpack.c.l.b16 %v781
        %v1369 = vunpack.c.h.b16 %v781
        %v1370 = vunpack.c.l.b16 %v782
        %v1371 = vunpack.c.h.b16 %v782
        %v1372 = vunpack.c.l.b16 %v783
        %v1373 = vunpack.c.h.b16 %v783
        %v1374 = vunpack.c.l.b16 %v784
        %v1375 = vunpack.c.h.b16 %v784
        %v1376 = vunpack.c.l.b16 %v785
        %v1377 = vunpack.c.h.b16 %v785
        %v1378 = vunpack.c.l.b16 %v786
        %v1379 = vunpack.c.h.b16 %v786
        %v1380 = vunpack.c.l.b16 %v787
        %v1381 = vunpack.c.h.b16 %v787
        %v1382 = vunpack.c.l.b16 %v788
        %v1383 = vunpack.c.h.b16 %v788
        %v1384 = vunpack.c.l.b16 %v789
        %v1385 = vunpack.c.h.b16 %v789
        %v1386 = vunpack.c.l.b16 %v790
        %v1387 = vunpack.c.h.b16 %v790
        %v1388 = vunpack.c.l.b16 %v791
        %v1389 = vunpack.c.h.b16 %v791
        %v1390 = vunpack.c.l.b16 %v792
        %v1391 = vunpack.c.h.b16 %v792
        %v1392 = vunpack.c.l.b16 %v793
        %v1393 = vunpack.c.h.b16 %v793
        %v1394 = vunpack.c.l.b16 %v794
        %v1395 = vunpack.c.h.b16 %v794
        %v1396 = vunpack.c.l.b16 %v795
        %v1397 = vunpack.c.h.b16 %v795
        %v1398 = vunpack.c.l.b16 %v796
        %v1399 = vunpack.c.h.b16 %v796
        %v1400 = vunpack.c.l.b16 %v797
        %v1401 = vunpack.c.h.b16 %v797
        %v1402 = vunpack.c.l.b16 %v798
        %v1403 = vunpack.c.h.b16 %v798
        %v1404 = vunpack.c.l.b16 %v799
        %v1405 = vunpack.c.h.b16 %v799
        %v1406 = vunpack.c.l.b16 %v800
        %v1407 = vunpack.c.h.b16 %v800
        %v1408 = vunpack.c.l.b16 %v801
        %v1409 = vunpack.c.h.b16 %v801
        %v1410 = vunpack.c.l.b16 %v802
        %v1411 = vunpack.c.h.b16 %v802
        %v1412 = vunpack.c.l.b16 %v803
        %v1413 = vunpack.c.h.b16 %v803
        %v1414 = vunpack.c.l.b16 %v804
        %v1415 = vunpack.c.h.b16 %v804
        %v1416 = vunpack.c.l.b16 %v805
        %v1417 = vunpack.c.h.b16 %v805
        %v1418 = vunpack.c.l.b16 %v806
        %v1419 = vunpack.c.h.b16 %v806
        %v1420 = vunpack.c.l.b16 %v807
        %v1421 = vunpack.c.h.b16 %v807
        %v1422 = vunpack.c.l.b16 %v808
        %v1423 = vunpack.c.h.b16 %v808
        %v1424 = vunpack.c.l.b16 %v809
        %v1425 = vunpack.c.h.b16 %v809
        %v1426 = vunpack.c.l.b16 %v810
        %v1427 = vunpack.c.h.b16 %v810
        %v1428 = vunpack.c.l.b16 %v811
        %v1429 = vunpack.c.h.b16 %v811
        %v1430 = vunpack.c.l.b16 %v812
        %v1431 = vunpack.c.h.b16 %v812
        %v1432 = vunpack.c.l.b16 %v813
        %v1433 = vunpack.c.h.b16 %v813
        %v1434 = vunpack.c.l.b16 %v814
        %v1435 = vunpack.c.h.b16 %v814
        %v1436 = vunpack.c.l.b16 %v815
        %v1437 = vunpack.c.h.b16 %v815
        %v1438 = vunpack.c.l.b16 %v816
        %v1439 = vunpack.c.h.b16 %v816
        %v1440 = vunpack.c.l.b16 %v817
        %v1441 = vunpack.c.h.b16 %v817
        %v1442 = vunpack.c.l.b16 %v818
        %v1443 = vunpack.c.h.b16 %v818
        %v1444 = vunpack.c.l.b16 %v819
        %v1445 = vunpack.c.h.b16 %v819
        %v1446 = vunpack.c.l.b16 %v820
        %v1447 = vunpack.c.h.b16 %v820
        %v1448 = vunpack.c.l.b16 %v821
        %v1449 = vunpack.c.h.b16 %v821
        %v1450 = vunpack.c.l.b16 %v822
        %v1451 = vunpack.c.h.b16 %v822
        %v1452 = vunpack.c.l.b16 %v823
        %v1453 = vunpack.c.h.b16 %v823
        %v1454 = vunpack.c.l.b16 %v824
        %v1455 = vunpack.c.h.b16 %v824
        %v1456 = vunpack.c.l.b16 %v825
        %v1457 = vunpack.c.h.b16 %v825
        %v1458 = vunpack.c.l.b16 %v826
        %v1459 = vunpack.c.h.b16 %v826
        %v1460 = vunpack.c.l.b16 %v827
        %v1461 = vunpack.c.h.b16 %v827
        %v1462 = vunpack.c.l.b16 %v828
        %v1463 = vunpack.c.h.b16 %v828
        %v1464 = vunpack.c.l.b16 %v829
        %v1465 = vunpack.c.h.b16 %v829
        %v1466 = vunpack.c.l.b16 %v830
        %v1467 = vunpack.c.h.b16 %v830
        %v1468 = vunpack.c.l.b16 %v831
        %v1469 = vunpack.c.h.b16 %v831
        %v1470 = vunpack.c.l.b16 %v832
        %v1471 = vunpack.c.h.b16 %v832
        %v1472 = vunpack.c.l.b16 %v833
        %v1473 = vunpack.c.h.b16 %v833
        %v1474 = vunpack.c.l.b16 %v834
        %v1475 = vunpack.c.h.b16 %v834
        %v1476 = vunpack.c.l.b16 %v835
        %v1477 = vunpack.c.h.b16 %v835
        %v1478 = vunpack.c.l.b16 %v836
        %v1479 = vunpack.c.h.b16 %v836
        %v1480 = vunpack.c.l.b16 %v837
        %v1481 = vunpack.c.h.b16 %v837
        %v1482 = vunpack.c.l.b16 %v838
        %v1483 = vunpack.c.h.b16 %v838
        %v1484 = vunpack.c.l.b16 %v839
        %v1485 = vunpack.c.h.b16 %v839
        %v1486 = vunpack.c.l.b16 %v840
        %v1487 = vunpack.c.h.b16 %v840
        %v1488 = vunpack.c.l.b16 %v841
        %v1489 = vunpack.c.h.b16 %v841
        %v1490 = vunpack.c.l.b16 %v842
        %v1491 = vunpack.c.h.b16 %v842
        %v1492 = vunpack.c.l.b16 %v843
        %v1493 = vunpack.c.h.b16 %v843
        %v1494 = vunpack.c.l.b16 %v844
        %v1495 = vunpack.c.h.b16 %v844
        %v1496 = vunpack.c.l.b16 %v845
        %v1497 = vunpack.c.h.b16 %v845
        %v1498 = vunpack.c.l.b16 %v846
        %v1499 = vunpack.c.h.b16 %v846
        %v1500 = vunpack.c.l.b16 %v847
        %v1501 = vunpack.c.h.b16 %v847
        %v1502 = vunpack.c.l.b16 %v848
        %v1503 = vunpack.c.h.b16 %v848
        %v1504 = vunpack.c.l.b16 %v849
        %v1505 = vunpack.c.h.b16 %v849
        %v1506 = vunpack.c.l.b16 %v850
        %v1507 = vunpack.c.h.b16 %v850
        %v1508 = vunpack.c.l.b16 %v851
        %v1509 = vunpack.c.h.b16 %v851
        %v1510 = vunpack.c.l.b16 %v852
        %v1511 = vunpack.c.h.b16 %v852
        %v1512 = vunpack.c.l.b16 %v853
        %v1513 = vunpack.c.h.b16 %v853
        %v1514 = vunpack.c.l.b16 %v854
        %v1515 = vunpack.c.h.b16 %v854
        %v1516 = vunpack.c.l.b16 %v855
        %v1517 = vunpack.c.h.b16 %v855
        %v1518 = vunpack.c.l.b16 %v856
        %v1519 = vunpack.c.h.b16 %v856
        %v1520 = vunpack.c.l.b16 %v857
        %v1521 = vunpack.c.h.b16 %v857
        %v1522 = vunpack.c.l.b16 %v858
        %v1523 = vunpack.c.h.b16 %v858
        %v1524 = vunpack.c.l.b16 %v859
        %v1525 = vunpack.c.h.b16 %v859
        %v1526 = vunpack.c.l.b16 %v860
        %v1527 = vunpack.c.h.b16 %v860
        %v1528 = vunpack.c.l.b16 %v861
        %v1529 = vunpack.c.h.b16 %v861
        %v1530 = vunpack.c.l.b16 %v862
        %v1531 = vunpack.c.h.b16 %v862
        %v1532 = vunpack.c.l.b16 %v863
        %v1533 = vunpack.c.h.b16 %v863
        %v1534 = vunpack.c.l.b16 %v864
        %v1535 = vunpack.c.h.b16 %v864
        %v1536 = vunpack.c.l.b16 %v865
        %v1537 = vunpack.c.h.b16 %v865
        %v1538 = vunpack.c.l.b16 %v866
        %v1539 = vunpack.c.h.b16 %v866
        %v1540 = vunpack.c.l.b16 %v867
        %v1541 = vunpack.c.h.b16 %v867
        %v1542 = vunpack.c.l.b16 %v868
        %v1543 = vunpack.c.h.b16 %v868
        %v1544 = vunpack.c.l.b16 %v869
        %v1545 = vunpack.c.h.b16 %v869
        %v1546 = vunpack.c.l.b16 %v870
        %v1547 = vunpack.c.h.b16 %v870
        %v1548 = vunpack.c.l.b16 %v871
        %v1549 = vunpack.c.h.b16 %v871
        %v1550 = vunpack.c.l.b16 %v872
        %v1551 = vunpack.c.h.b16 %v872
        %v1552 = vunpack.c.l.b16 %v873
        %v1553 = vunpack.c.h.b16 %v873
        %v1554 = vunpack.c.l.b16 %v874
        %v1555 = vunpack.c.h.b16 %v874
        %v1556 = vunpack.c.l.b16 %v875
        %v1557 = vunpack.c.h.b16 %v875
        %v1558 = vunpack.c.l.b16 %v876
        %v1559 = vunpack.c.h.b16 %v876
        %v1560 = vunpack.c.l.b16 %v877
        %v1561 = vunpack.c.h.b16 %v877
        %v1562 = vunpack.c.l.b16 %v878
        %v1563 = vunpack.c.h.b16 %v878
        %v1564 = vunpack.c.l.b16 %v879
        %v1565 = vunpack.c.h.b16 %v879
        %v1566 = vunpack.c.l.b16 %v880
        %v1567 = vunpack.c.h.b16 %v880
        %v1568 = vunpack.c.l.b16 %v881
        %v1569 = vunpack.c.h.b16 %v881
        %v1570 = vunpack.c.l.b16 %v882
        %v1571 = vunpack.c.h.b16 %v882
        %v1572 = vunpack.c.l.b16 %v883
        %v1573 = vunpack.c.h.b16 %v883
        %v1574 = vunpack.c.l.b16 %v884
        %v1575 = vunpack.c.h.b16 %v884
        %v1576 = vunpack.c.l.b16 %v885
        %v1577 = vunpack.c.h.b16 %v885
        %v1578 = vunpack.c.l.b16 %v886
        %v1579 = vunpack.c.h.b16 %v886
        %v1580 = vunpack.c.l.b16 %v887
        %v1581 = vunpack.c.h.b16 %v887
        %v1582 = vunpack.c.l.b16 %v888
        %v1583 = vunpack.c.h.b16 %v888
        %v1584 = vunpack.c.l.b16 %v889
        %v1585 = vunpack.c.h.b16 %v889
        %v1586 = vunpack.c.l.b16 %v890
        %v1587 = vunpack.c.h.b16 %v890
        %v1588 = vunpack.c.l.b16 %v891
        %v1589 = vunpack.c.h.b16 %v891
        %v1590 = vunpack.c.l.b16 %v892
        %v1591 = vunpack.c.h.b16 %v892
        %v1592 = vunpack.c.l.b16 %v893
        %v1593 = vunpack.c.h.b16 %v893
        %v1594 = vunpack.c.l.b16 %v894
        %v1595 = vunpack.c.h.b16 %v894
        %v1596 = vunpack.c.l.b16 %v895
        %v1597 = vunpack.c.h.b16 %v895
        %v1598 = vpack.c.b16 %v1238, %v1214
        %v1599 = vpack.c.b16 %v1239, %v1215
        %v1600 = vpack.c.b16 %v1240, %v1216
        %v1601 = vpack.c.b16 %v1241, %v1217
        %v1602 = vpack.c.b16 %v1242, %v1218
        %v1603 = vpack.c.b16 %v1243, %v1219
        %v1604 = vpack.c.b16 %v1244, %v1220
        %v1605 = vpack.c.b16 %v1245, %v1221
        %v1606 = vpack.c.b16 %v1246, %v1222
        %v1607 = vpack.c.b16 %v1247, %v1223
        %v1608 = vpack.c.b16 %v1248, %v1224
        %v1609 = vpack.c.b16 %v1249, %v1225
        %v1610 = vpack.c.b16 %v1250, %v1226
        %v1611 = vpack.c.b16 %v1251, %v1227
        %v1612 = vpack.c.b16 %v1252, %v1228
        %v1613 = vpack.c.b16 %v1253, %v1229
        %v1614 = vpack.c.b16 %v1254, %v1230
        %v1615 = vpack.c.b16 %v1255, %v1231
        %v1616 = vpack.c.b16 %v1256, %v1232
        %v1617 = vpack.c.b16 %v1257, %v1233
        %v1618 = vpack.c.b16 %v1258, %v1234
        %v1619 = vpack.c.b16 %v1259, %v1235
        %v1620 = vpack.c.b16 %v1260, %v1236
        %v1621 = vpack.c.b16 %v1261, %v1237
        %v1622 = vpack.c.b16 %v1286, %v1262
        %v1623 = vpack.c.b16 %v1287, %v1263
        %v1624 = vpack.c.b16 %v1288, %v1264
        %v1625 = vpack.c.b16 %v1289, %v1265
        %v1626 = vpack.c.b16 %v1290, %v1266
        %v1627 = vpack.c.b16 %v1291, %v1267
        %v1628 = vpack.c.b16 %v1292, %v1268
        %v1629 = vpack.c.b16 %v1293, %v1269
        %v1630 = vpack.c.b16 %v1294, %v1270
        %v1631 = vpack.c.b16 %v1295, %v1271
        %v1632 = vpack.c.b16 %v1296, %v1272
        %v1633 = vpack.c.b16 %v1297, %v1273
        %v1634 = vpack.c.b16 %v1298, %v1274
        %v1635 = vpack.c.b16 %v1299, %v1275
        %v1636 = vpack.c.b16 %v1300, %v1276
        %v1637 = vpack.c.b16 %v1301, %v1277
        %v1638 = vpack.c.b16 %v1302, %v1278
        %v1639 = vpack.c.b16 %v1303, %v1279
        %v1640 = vpack.c.b16 %v1304, %v1280
        %v1641 = vpack.c.b16 %v1305, %v1281
        %v1642 = vpack.c.b16 %v1306, %v1282
        %v1643 = vpack.c.b16 %v1307, %v1283
        %v1644 = vpack.c.b16 %v1308, %v1284
        %v1645 = vpack.c.b16 %v1309, %v1285
        %v1646 = vpack.c.b16 %v1334, %v1310
        %v1647 = vpack.c.b16 %v1335, %v1311
        %v1648 = vpack.c.b16 %v1336, %v1312
        %v1649 = vpack.c.b16 %v1337, %v1313
        %v1650 = vpack.c.b16 %v1338, %v1314
        %v1651 = vpack.c.b16 %v1339, %v1315
        %v1652 = vpack.c.b16 %v1340, %v1316
        %v1653 = vpack.c.b16 %v1341, %v1317
        %v1654 = vpack.c.b16 %v1342, %v1318
        %v1655 = vpack.c.b16 %v1343, %v1319
        %v1656 = vpack.c.b16 %v1344, %v1320
        %v1657 = vpack.c.b16 %v1345, %v1321
        %v1658 = vpack.c.b16 %v1346, %v1322
        %v1659 = vpack.c.b16 %v1347, %v1323
        %v1660 = vpack.c.b16 %v1348, %v1324
        %v1661 = vpack.c.b16 %v1349, %v1325
        %v1662 = vpack.c.b16 %v1350, %v1326
        %v1663 = vpack.c.b16 %v1351, %v1327
        %v1664 = vpack.c.b16 %v1352, %v1328
        %v1665 = vpack.c.b16 %v1353, %v1329
        %v1666 = vpack.c.b16 %v1354, %v1330
        %v1667 = vpack.c.b16 %v1355, %v1331
        %v1668 = vpack.c.b16 %v1356, %v1332
        %v1669 = vpack.c.b16 %v1357, %v1333
        %v1670 = vpack.c.b16 %v1382, %v1358
        %v1671 = vpack.c.b16 %v1383, %v1359
        %v1672 = vpack.c.b16 %v1384, %v1360
        %v1673 = vpack.c.b16 %v1385, %v1361
        %v1674 = vpack.c.b16 %v1386, %v1362
        %v1675 = vpack.c.b16 %v1387, %v1363
        %v1676 = vpack.c.b16 %v1388, %v1364
        %v1677 = vpack.c.b16 %v1389, %v1365
        %v1678 = vpack.c.b16 %v1390, %v1366
        %v1679 = vpack.c.b16 %v1391, %v1367
        %v1680 = vpack.c.b16 %v1392, %v1368
        %v1681 = vpack.c.b16 %v1393, %v1369
        %v1682 = vpack.c.b16 %v1394, %v1370
        %v1683 = vpack.c.b16 %v1395, %v1371
        %v1684 = vpack.c.b16 %v1396, %v1372
        %v1685 = vpack.c.b16 %v1397, %v1373
        %v1686 = vpack.c.b16 %v1398, %v1374
        %v1687 = vpack.c.b16 %v1399, %v1375
        %v1688 = vpack.c.b16 %v1400, %v1376
        %v1689 = vpack.c.b16 %v1401, %v1377
        %v1690 = vpack.c.b16 %v1402, %v1378
        %v1691 = vpack.c.b16 %v1403, %v1379
        %v1692 = vpack.c.b16 %v1404, %v1380
        %v1693 = vpack.c.b16 %v1405, %v1381
        %v1694 = vpack.c.b16 %v1430, %v1406
        %v1695 = vpack.c.b16 %v1431, %v1407
        %v1696 = vpack.c.b16 %v1432, %v1408
        %v1697 = vpack.c.b16 %v1433, %v1409
        %v1698 = vpack.c.b16 %v1434, %v1410
        %v1699 = vpack.c.b16 %v1435, %v1411
        %v1700 = vpack.c.b16 %v1436, %v1412
        %v1701 = vpack.c.b16 %v1437, %v1413
        %v1702 = vpack.c.b16 %v1438, %v1414
        %v1703 = vpack.c.b16 %v1439, %v1415
        %v1704 = vpack.c.b16 %v1440, %v1416
        %v1705 = vpack.c.b16 %v1441, %v1417
        %v1706 = vpack.c.b16 %v1442, %v1418
        %v1707 = vpack.c.b16 %v1443, %v1419
        %v1708 = vpack.c.b16 %v1444, %v1420
        %v1709 = vpack.c.b16 %v1445, %v1421
        %v1710 = vpack.c.b16 %v1446, %v1422
        %v1711 = vpack.c.b16 %v1447, %v1423
        %v1712 = vpack.c.b16 %v1448, %v1424
        %v1713 = vpack.c.b16 %v1449, %v1425
        %v1714 = vpack.c.b16 %v1450, %v1426
        %v1715 = vpack.c.b16 %v1451, %v1427
        %v1716 = vpack.c.b16 %v1452, %v1428
        %v1717 = vpack.c.b16 %v1453, %v1429
        %v1718 = vpack.c.b16 %v1478, %v1454
        %v1719 = vpack.c.b16 %v1479, %v1455
        %v1720 = vpack.c.b16 %v1480, %v1456
        %v1721 = vpack.c.b16 %v1481, %v1457
        %v1722 = vpack.c.b16 %v1482, %v1458
        %v1723 = vpack.c.b16 %v1483, %v1459
        %v1724 = vpack.c.b16 %v1484, %v1460
        %v1725 = vpack.c.b16 %v1485, %v1461
        %v1726 = vpack.c.b16 %v1486, %v1462
        %v1727 = vpack.c.b16 %v1487, %v1463
        %v1728 = vpack.c.b16 %v1488, %v1464
        %v1729 = vpack.c.b16 %v1489, %v1465
        %v1730 = vpack.c.b16 %v1490, %v1466
        %v1731 = vpack.c.b16 %v1491, %v1467
        %v1732 = vpack.c.b16 %v1492, %v1468
        %v1733 = vpack.c.b16 %v1493, %v1469
        %v1734 = vpack.c.b16 %v1494, %v1470
        %v1735 = vpack.c.b16 %v1495, %v1471
        %v1736 = vpack.c.b16 %v1496, %v1472
        %v1737 = vpack.c.b16 %v1497, %v1473
        %v1738 = vpack.c.b16 %v1498, %v1474
        %v1739 = vpack.c.b16 %v1499, %v1475
        %v1740 = vpack.c.b16 %v1500, %v1476
        %v1741 = vpack.c.b16 %v1501, %v1477
        %v1742 = vpack.c.b16 %v1526, %v1502
        %v1743 = vpack.c.b16 %v1527, %v1503
        %v1744 = vpack.c.b16 %v1528, %v1504
        %v1745 = vpack.c.b16 %v1529, %v1505
        %v1746 = vpack.c.b16 %v1530, %v1506
        %v1747 = vpack.c.b16 %v1531, %v1507
        %v1748 = vpack.c.b16 %v1532, %v1508
        %v1749 = vpack.c.b16 %v1533, %v1509
        %v1750 = vpack.c.b16 %v1534, %v1510
        %v1751 = vpack.c.b16 %v1535, %v1511
        %v1752 = vpack.c.b16 %v1536, %v1512
        %v1753 = vpack.c.b16 %v1537, %v1513
        %v1754 = vpack.c.b16 %v1538, %v1514
        %v1755 = vpack.c.b16 %v1539, %v1515
        %v1756 = vpack.c.b16 %v1540, %v1516
        %v1757 = vpack.c.b16 %v1541, %v1517
        %v1758 = vpack.c.b16 %v1542, %v1518
        %v1759 = vpack.c.b16 %v1543, %v1519
        %v1760 = vpack.c.b16 %v1544, %v1520
        %v1761 = vpack.c.b16 %v1545, %v1521
        %v1762 = vpack.c.b16 %v1546, %v1522
        %v1763 = vpack.c.b16 %v1547, %v1523
        %v1764 = vpack.c.b16 %v1548, %v1524
        %v1765 = vpack.c.b16 %v1549, %v1525
        %v1766 = vpack.c.b16 %v1574, %v1550
        %v1767 = vpack.c.b16 %v1575, %v1551
        %v1768 = vpack.c.b16 %v1576, %v1552
        %v1769 = vpack.c.b16 %v1577, %v1553
        %v1770 = vpack.c.b16 %v1578, %v1554
        %v1771 = vpack.c.b16 %v1579, %v1555
        %v1772 = vpack.c.b16 %v1580, %v1556
        %v1773 = vpack.c.b16 %v1581, %v1557
        %v1774 = vpack.c.b16 %v1582, %v1558
        %v1775 = vpack.c.b16 %v1583, %v1559
        %v1776 = vpack.c.b16 %v1584, %v1560
        %v1777 = vpack.c.b16 %v1585, %v1561
        %v1778 = vpack.c.b16 %v1586, %v1562
        %v1779 = vpack.c.b16 %v1587, %v1563
        %v1780 = vpack.c.b16 %v1588, %v1564
        %v1781 = vpack.c.b16 %v1589, %v1565
        %v1782 = vpack.c.b16 %v1590, %v1566
        %v1783 = vpack.c.b16 %v1591, %v1567
        %v1784 = vpack.c.b16 %v1592, %v1568
        %v1785 = vpack.c.b16 %v1593, %v1569
        %v1786 = vpack.c.b16 %v1594, %v1570
        %v1787 = vpack.c.b16 %v1595, %v1571
        %v1788 = vpack.c.b16 %v1596, %v1572
        %v1789 = vpack.c.b16 %v1597, %v1573
        %1982 = vmatprep.subr.bf16.mxu0 %v1599
        %1983 = vmatpush1.bf16.msra.mxu0 %v1598
        %1984 = vmatprep.subr.bf16.mxu0 %v1623
        %1985 = vmatpush1.bf16.msra.mxu0 %v1622
        %1986 = vmatprep.subr.bf16.mxu0 %v1647
        %1987 = vmatpush1.bf16.msra.mxu0 %v1646
        %1988 = vmatprep.subr.bf16.mxu0 %v1671
        %1989 = vmatpush1.bf16.msra.mxu0 %v1670
        %1990 = vmatprep.subr.bf16.mxu0 %v1695
        %1991 = vmatpush1.bf16.msra.mxu0 %v1694
        %1992 = vmatprep.subr.bf16.mxu0 %v1719
        %1993 = vmatpush1.bf16.msra.mxu0 %v1718
        %1994 = vmatprep.subr.bf16.mxu0 %v1743
        %1995 = vmatpush1.bf16.msra.mxu0 %v1742
        %1996 = vmatprep.subr.bf16.mxu0 %v1767
        %1997 = vmatpush1.bf16.msra.mxu0 %v1766
        %1998 = vmatprep.subr.bf16.mxu0 0
        %1999 = vmatpush1.bf16.msra.mxu0 0
        %2000 = vmatprep.subr.bf16.mxu0 0
        %2001 = vmatpush1.bf16.msra.mxu0 0
        %2002 = vmatprep.subr.bf16.mxu0 0
        %2003 = vmatpush1.bf16.msra.mxu0 0
        %2004 = vmatprep.subr.bf16.mxu0 0
        %2005 = vmatpush1.bf16.msra.mxu0 0
        %2006 = vmatprep.subr.bf16.mxu0 0
        %2007 = vmatpush1.bf16.msra.mxu0 0
        %2008 = vmatprep.subr.bf16.mxu0 0
        %2009 = vmatpush1.bf16.msra.mxu0 0
        %2010 = vmatprep.subr.bf16.mxu0 0
        %2011 = vmatpush1.bf16.msra.mxu0 0
        %2012 = vmatprep.subr.bf16.mxu0 0
        %2013 = vmatpush1.bf16.msra.mxu0 0
        %2014 = vmatprep.mubr.bf16.mxu0 0
        %2015 = vmatmul.mubr.bf16.gmra.mrb[0].mxu0 %v703
        %v2016 = vpop.f32.mrb[0].mxu0
        %v2017 = vadd.f32 %v905, %v2016
        %v2018 = vpop.f32.mrb[0].mxu0
        %v2019 = vadd.f32 %v909, %v2018
        %v2020 = vpop.f32.mrb[0].mxu0
        %v2021 = vadd.f32 %v905, %v2020
        %v2022 = vpop.f32.mrb[0].mxu0
        %v2023 = vadd.f32 %v909, %v2022
        %2024 = vdwg.mxu0
        %2025 = vmatprep.subr.bf16.mxu0 %v1601
        %2026 = vmatpush1.bf16.msra.mxu0 %v1600
        %2027 = vmatprep.subr.bf16.mxu0 %v1625
        %2028 = vmatpush1.bf16.msra.mxu0 %v1624
        %2029 = vmatprep.subr.bf16.mxu0 %v1649
        %2030 = vmatpush1.bf16.msra.mxu0 %v1648
        %2031 = vmatprep.subr.bf16.mxu0 %v1673
        %2032 = vmatpush1.bf16.msra.mxu0 %v1672
        %2033 = vmatprep.subr.bf16.mxu0 %v1697
        %2034 = vmatpush1.bf16.msra.mxu0 %v1696
        %2035 = vmatprep.subr.bf16.mxu0 %v1721
        %2036 = vmatpush1.bf16.msra.mxu0 %v1720
        %2037 = vmatprep.subr.bf16.mxu0 %v1745
        %2038 = vmatpush1.bf16.msra.mxu0 %v1744
        %2039 = vmatprep.subr.bf16.mxu0 %v1769
        %2040 = vmatpush1.bf16.msra.mxu0 %v1768
        %2041 = vmatprep.subr.bf16.mxu0 0
        %2042 = vmatpush1.bf16.msra.mxu0 0
        %2043 = vmatprep.subr.bf16.mxu0 0
        %2044 = vmatpush1.bf16.msra.mxu0 0
        %2045 = vmatprep.subr.bf16.mxu0 0
        %2046 = vmatpush1.bf16.msra.mxu0 0
        %2047 = vmatprep.subr.bf16.mxu0 0
        %2048 = vmatpush1.bf16.msra.mxu0 0
        %2049 = vmatprep.subr.bf16.mxu0 0
        %2050 = vmatpush1.bf16.msra.mxu0 0
        %2051 = vmatprep.subr.bf16.mxu0 0
        %2052 = vmatpush1.bf16.msra.mxu0 0
        %2053 = vmatprep.subr.bf16.mxu0 0
        %2054 = vmatpush1.bf16.msra.mxu0 0
        %2055 = vmatprep.subr.bf16.mxu0 0
        %2056 = vmatpush1.bf16.msra.mxu0 0
        %2057 = vmatprep.mubr.bf16.mxu0 0
        %2058 = vmatmul.mubr.bf16.gmra.mrb[0].mxu0 %v703
        %v2059 = vpop.f32.mrb[0].mxu0
        %v2060 = vadd.f32 %v913, %v2059
        %v2061 = vpop.f32.mrb[0].mxu0
        %v2062 = vadd.f32 %v917, %v2061
        %v2063 = vpop.f32.mrb[0].mxu0
        %v2064 = vadd.f32 %v913, %v2063
        %v2065 = vpop.f32.mrb[0].mxu0
        %v2066 = vadd.f32 %v917, %v2065
        %2067 = vdwg.mxu0
        %2068 = vmatprep.subr.bf16.mxu0 %v1603
        %2069 = vmatpush1.bf16.msra.mxu0 %v1602
        %2070 = vmatprep.subr.bf16.mxu0 %v1627
        %2071 = vmatpush1.bf16.msra.mxu0 %v1626
        %2072 = vmatprep.subr.bf16.mxu0 %v1651
        %2073 = vmatpush1.bf16.msra.mxu0 %v1650
        %2074 = vmatprep.subr.bf16.mxu0 %v1675
        %2075 = vmatpush1.bf16.msra.mxu0 %v1674
        %2076 = vmatprep.subr.bf16.mxu0 %v1699
        %2077 = vmatpush1.bf16.msra.mxu0 %v1698
        %2078 = vmatprep.subr.bf16.mxu0 %v1723
        %2079 = vmatpush1.bf16.msra.mxu0 %v1722
        %2080 = vmatprep.subr.bf16.mxu0 %v1747
        %2081 = vmatpush1.bf16.msra.mxu0 %v1746
        %2082 = vmatprep.subr.bf16.mxu0 %v1771
        %2083 = vmatpush1.bf16.msra.mxu0 %v1770
        %2084 = vmatprep.subr.bf16.mxu0 0
        %2085 = vmatpush1.bf16.msra.mxu0 0
        %2086 = vmatprep.subr.bf16.mxu0 0
        %2087 = vmatpush1.bf16.msra.mxu0 0
        %2088 = vmatprep.subr.bf16.mxu0 0
        %2089 = vmatpush1.bf16.msra.mxu0 0
        %2090 = vmatprep.subr.bf16.mxu0 0
        %2091 = vmatpush1.bf16.msra.mxu0 0
        %2092 = vmatprep.subr.bf16.mxu0 0
        %2093 = vmatpush1.bf16.msra.mxu0 0
        %2094 = vmatprep.subr.bf16.mxu0 0
        %2095 = vmatpush1.bf16.msra.mxu0 0
        %2096 = vmatprep.subr.bf16.mxu0 0
        %2097 = vmatpush1.bf16.msra.mxu0 0
        %2098 = vmatprep.subr.bf16.mxu0 0
        %2099 = vmatpush1.bf16.msra.mxu0 0
        %2100 = vmatprep.mubr.bf16.mxu0 0
        %2101 = vmatmul.mubr.bf16.gmra.mrb[0].mxu0 %v703
        %v2102 = vpop.f32.mrb[0].mxu0
        %v2103 = vadd.f32 %v921, %v2102
        %v2104 = vpop.f32.mrb[0].mxu0
        %v2105 = vadd.f32 %v925, %v2104
        %v2106 = vpop.f32.mrb[0].mxu0
        %v2107 = vadd.f32 %v921, %v2106
        %v2108 = vpop.f32.mrb[0].mxu0
        %v2109 = vadd.f32 %v925, %v2108
        %2110 = vdwg.mxu0
        %2111 = vmatprep.subr.bf16.mxu0 %v1605
        %2112 = vmatpush1.bf16.msra.mxu0 %v1604
        %2113 = vmatprep.subr.bf16.mxu0 %v1629
        %2114 = vmatpush1.bf16.msra.mxu0 %v1628
        %2115 = vmatprep.subr.bf16.mxu0 %v1653
        %2116 = vmatpush1.bf16.msra.mxu0 %v1652
        %2117 = vmatprep.subr.bf16.mxu0 %v1677
        %2118 = vmatpush1.bf16.msra.mxu0 %v1676
        %2119 = vmatprep.subr.bf16.mxu0 %v1701
        %2120 = vmatpush1.bf16.msra.mxu0 %v1700
        %2121 = vmatprep.subr.bf16.mxu0 %v1725
        %2122 = vmatpush1.bf16.msra.mxu0 %v1724
        %2123 = vmatprep.subr.bf16.mxu0 %v1749
        %2124 = vmatpush1.bf16.msra.mxu0 %v1748
        %2125 = vmatprep.subr.bf16.mxu0 %v1773
        %2126 = vmatpush1.bf16.msra.mxu0 %v1772
        %2127 = vmatprep.subr.bf16.mxu0 0
        %2128 = vmatpush1.bf16.msra.mxu0 0
        %2129 = vmatprep.subr.bf16.mxu0 0
        %2130 = vmatpush1.bf16.msra.mxu0 0
        %2131 = vmatprep.subr.bf16.mxu0 0
        %2132 = vmatpush1.bf16.msra.mxu0 0
        %2133 = vmatprep.subr.bf16.mxu0 0
        %2134 = vmatpush1.bf16.msra.mxu0 0
        %2135 = vmatprep.subr.bf16.mxu0 0
        %2136 = vmatpush1.bf16.msra.mxu0 0
        %2137 = vmatprep.subr.bf16.mxu0 0
        %2138 = vmatpush1.bf16.msra.mxu0 0
        %2139 = vmatprep.subr.bf16.mxu0 0
        %2140 = vmatpush1.bf16.msra.mxu0 0
        %2141 = vmatprep.subr.bf16.mxu0 0
        %2142 = vmatpush1.bf16.msra.mxu0 0
        %2143 = vmatprep.mubr.bf16.mxu0 0
        %2144 = vmatmul.mubr.bf16.gmra.mrb[0].mxu0 %v703
        %v2145 = vpop.f32.mrb[0].mxu0
        %v2146 = vadd.f32 %v929, %v2145
        %v2147 = vpop.f32.mrb[0].mxu0
        %v2148 = vadd.f32 %v933, %v2147
        %v2149 = vpop.f32.mrb[0].mxu0
        %v2150 = vadd.f32 %v929, %v2149
        %v2151 = vpop.f32.mrb[0].mxu0
        %v2152 = vadd.f32 %v933, %v2151
        %2153 = vdwg.mxu0
        %2154 = vmatprep.subr.bf16.mxu0 %v1607
        %2155 = vmatpush1.bf16.msra.mxu0 %v1606
        %2156 = vmatprep.subr.bf16.mxu0 %v1631
        %2157 = vmatpush1.bf16.msra.mxu0 %v1630
        %2158 = vmatprep.subr.bf16.mxu0 %v1655
        %2159 = vmatpush1.bf16.msra.mxu0 %v1654
        %2160 = vmatprep.subr.bf16.mxu0 %v1679
        %2161 = vmatpush1.bf16.msra.mxu0 %v1678
        %2162 = vmatprep.subr.bf16.mxu0 %v1703
        %2163 = vmatpush1.bf16.msra.mxu0 %v1702
        %2164 = vmatprep.subr.bf16.mxu0 %v1727
        %2165 = vmatpush1.bf16.msra.mxu0 %v1726
        %2166 = vmatprep.subr.bf16.mxu0 %v1751
        %2167 = vmatpush1.bf16.msra.mxu0 %v1750
        %2168 = vmatprep.subr.bf16.mxu0 %v1775
        %2169 = vmatpush1.bf16.msra.mxu0 %v1774
        %2170 = vmatprep.subr.bf16.mxu0 0
        %2171 = vmatpush1.bf16.msra.mxu0 0
        %2172 = vmatprep.subr.bf16.mxu0 0
        %2173 = vmatpush1.bf16.msra.mxu0 0
        %2174 = vmatprep.subr.bf16.mxu0 0
        %2175 = vmatpush1.bf16.msra.mxu0 0
        %2176 = vmatprep.subr.bf16.mxu0 0
        %2177 = vmatpush1.bf16.msra.mxu0 0
        %2178 = vmatprep.subr.bf16.mxu0 0
        %2179 = vmatpush1.bf16.msra.mxu0 0
        %2180 = vmatprep.subr.bf16.mxu0 0
        %2181 = vmatpush1.bf16.msra.mxu0 0
        %2182 = vmatprep.subr.bf16.mxu0 0
        %2183 = vmatpush1.bf16.msra.mxu0 0
        %2184 = vmatprep.subr.bf16.mxu0 0
        %2185 = vmatpush1.bf16.msra.mxu0 0
        %2186 = vmatprep.mubr.bf16.mxu0 0
        %2187 = vmatmul.mubr.bf16.gmra.mrb[0].mxu0 %v703
        %v2188 = vpop.f32.mrb[0].mxu0
        %v2189 = vadd.f32 %v937, %v2188
        %v2190 = vpop.f32.mrb[0].mxu0
        %v2191 = vadd.f32 %v941, %v2190
        %v2192 = vpop.f32.mrb[0].mxu0
        %v2193 = vadd.f32 %v937, %v2192
        %v2194 = vpop.f32.mrb[0].mxu0
        %v2195 = vadd.f32 %v941, %v2194
        %2196 = vdwg.mxu0
        %2197 = vmatprep.subr.bf16.mxu0 %v1609
        %2198 = vmatpush1.bf16.msra.mxu0 %v1608
        %2199 = vmatprep.subr.bf16.mxu0 %v1633
        %2200 = vmatpush1.bf16.msra.mxu0 %v1632
        %2201 = vmatprep.subr.bf16.mxu0 %v1657
        %2202 = vmatpush1.bf16.msra.mxu0 %v1656
        %2203 = vmatprep.subr.bf16.mxu0 %v1681
        %2204 = vmatpush1.bf16.msra.mxu0 %v1680
        %2205 = vmatprep.subr.bf16.mxu0 %v1705
        %2206 = vmatpush1.bf16.msra.mxu0 %v1704
        %2207 = vmatprep.subr.bf16.mxu0 %v1729
        %2208 = vmatpush1.bf16.msra.mxu0 %v1728
        %2209 = vmatprep.subr.bf16.mxu0 %v1753
        %2210 = vmatpush1.bf16.msra.mxu0 %v1752
        %2211 = vmatprep.subr.bf16.mxu0 %v1777
        %2212 = vmatpush1.bf16.msra.mxu0 %v1776
        %2213 = vmatprep.subr.bf16.mxu0 0
        %2214 = vmatpush1.bf16.msra.mxu0 0
        %2215 = vmatprep.subr.bf16.mxu0 0
        %2216 = vmatpush1.bf16.msra.mxu0 0
        %2217 = vmatprep.subr.bf16.mxu0 0
        %2218 = vmatpush1.bf16.msra.mxu0 0
        %2219 = vmatprep.subr.bf16.mxu0 0
        %2220 = vmatpush1.bf16.msra.mxu0 0
        %2221 = vmatprep.subr.bf16.mxu0 0
        %2222 = vmatpush1.bf16.msra.mxu0 0
        %2223 = vmatprep.subr.bf16.mxu0 0
        %2224 = vmatpush1.bf16.msra.mxu0 0
        %2225 = vmatprep.subr.bf16.mxu0 0
        %2226 = vmatpush1.bf16.msra.mxu0 0
        %2227 = vmatprep.subr.bf16.mxu0 0
        %2228 = vmatpush1.bf16.msra.mxu0 0
        %2229 = vmatprep.mubr.bf16.mxu0 0
        %2230 = vmatmul.mubr.bf16.gmra.mrb[0].mxu0 %v703
        %v2231 = vpop.f32.mrb[0].mxu0
        %v2232 = vadd.f32 %v945, %v2231
        %v2233 = vpop.f32.mrb[0].mxu0
        %v2234 = vadd.f32 %v949, %v2233
        %v2235 = vpop.f32.mrb[0].mxu0
        %v2236 = vadd.f32 %v945, %v2235
        %v2237 = vpop.f32.mrb[0].mxu0
        %v2238 = vadd.f32 %v949, %v2237
        %2239 = vdwg.mxu0
        %2240 = vmatprep.subr.bf16.mxu0 %v1611
        %2241 = vmatpush1.bf16.msra.mxu0 %v1610
        %2242 = vmatprep.subr.bf16.mxu0 %v1635
        %2243 = vmatpush1.bf16.msra.mxu0 %v1634
        %2244 = vmatprep.subr.bf16.mxu0 %v1659
        %2245 = vmatpush1.bf16.msra.mxu0 %v1658
        %2246 = vmatprep.subr.bf16.mxu0 %v1683
        %2247 = vmatpush1.bf16.msra.mxu0 %v1682
        %2248 = vmatprep.subr.bf16.mxu0 %v1707
        %2249 = vmatpush1.bf16.msra.mxu0 %v1706
        %2250 = vmatprep.subr.bf16.mxu0 %v1731
        %2251 = vmatpush1.bf16.msra.mxu0 %v1730
        %2252 = vmatprep.subr.bf16.mxu0 %v1755
        %2253 = vmatpush1.bf16.msra.mxu0 %v1754
        %2254 = vmatprep.subr.bf16.mxu0 %v1779
        %2255 = vmatpush1.bf16.msra.mxu0 %v1778
        %2256 = vmatprep.subr.bf16.mxu0 0
        %2257 = vmatpush1.bf16.msra.mxu0 0
        %2258 = vmatprep.subr.bf16.mxu0 0
        %2259 = vmatpush1.bf16.msra.mxu0 0
        %2260 = vmatprep.subr.bf16.mxu0 0
        %2261 = vmatpush1.bf16.msra.mxu0 0
        %2262 = vmatprep.subr.bf16.mxu0 0
        %2263 = vmatpush1.bf16.msra.mxu0 0
        %2264 = vmatprep.subr.bf16.mxu0 0
        %2265 = vmatpush1.bf16.msra.mxu0 0
        %2266 = vmatprep.subr.bf16.mxu0 0
        %2267 = vmatpush1.bf16.msra.mxu0 0
        %2268 = vmatprep.subr.bf16.mxu0 0
        %2269 = vmatpush1.bf16.msra.mxu0 0
        %2270 = vmatprep.subr.bf16.mxu0 0
        %2271 = vmatpush1.bf16.msra.mxu0 0
        %2272 = vmatprep.mubr.bf16.mxu0 0
        %2273 = vmatmul.mubr.bf16.gmra.mrb[0].mxu0 %v703
        %v2274 = vpop.f32.mrb[0].mxu0
        %v2275 = vadd.f32 %v953, %v2274
        %v2276 = vpop.f32.mrb[0].mxu0
        %v2277 = vadd.f32 %v957, %v2276
        %v2278 = vpop.f32.mrb[0].mxu0
        %v2279 = vadd.f32 %v953, %v2278
        %v2280 = vpop.f32.mrb[0].mxu0
        %v2281 = vadd.f32 %v957, %v2280
        %2282 = vdwg.mxu0
        %2283 = vmatprep.subr.bf16.mxu0 %v1613
        %2284 = vmatpush1.bf16.msra.mxu0 %v1612
        %2285 = vmatprep.subr.bf16.mxu0 %v1637
        %2286 = vmatpush1.bf16.msra.mxu0 %v1636
        %2287 = vmatprep.subr.bf16.mxu0 %v1661
        %2288 = vmatpush1.bf16.msra.mxu0 %v1660
        %2289 = vmatprep.subr.bf16.mxu0 %v1685
        %2290 = vmatpush1.bf16.msra.mxu0 %v1684
        %2291 = vmatprep.subr.bf16.mxu0 %v1709
        %2292 = vmatpush1.bf16.msra.mxu0 %v1708
        %2293 = vmatprep.subr.bf16.mxu0 %v1733
        %2294 = vmatpush1.bf16.msra.mxu0 %v1732
        %2295 = vmatprep.subr.bf16.mxu0 %v1757
        %2296 = vmatpush1.bf16.msra.mxu0 %v1756
        %2297 = vmatprep.subr.bf16.mxu0 %v1781
        %2298 = vmatpush1.bf16.msra.mxu0 %v1780
        %2299 = vmatprep.subr.bf16.mxu0 0
        %2300 = vmatpush1.bf16.msra.mxu0 0
        %2301 = vmatprep.subr.bf16.mxu0 0
        %2302 = vmatpush1.bf16.msra.mxu0 0
        %2303 = vmatprep.subr.bf16.mxu0 0
        %2304 = vmatpush1.bf16.msra.mxu0 0
        %2305 = vmatprep.subr.bf16.mxu0 0
        %2306 = vmatpush1.bf16.msra.mxu0 0
        %2307 = vmatprep.subr.bf16.mxu0 0
        %2308 = vmatpush1.bf16.msra.mxu0 0
        %2309 = vmatprep.subr.bf16.mxu0 0
        %2310 = vmatpush1.bf16.msra.mxu0 0
        %2311 = vmatprep.subr.bf16.mxu0 0
        %2312 = vmatpush1.bf16.msra.mxu0 0
        %2313 = vmatprep.subr.bf16.mxu0 0
        %2314 = vmatpush1.bf16.msra.mxu0 0
        %2315 = vmatprep.mubr.bf16.mxu0 0
        %2316 = vmatmul.mubr.bf16.gmra.mrb[0].mxu0 %v703
        %v2317 = vpop.f32.mrb[0].mxu0
        %v2318 = vadd.f32 %v961, %v2317
        %v2319 = vpop.f32.mrb[0].mxu0
        %v2320 = vadd.f32 %v965, %v2319
        %v2321 = vpop.f32.mrb[0].mxu0
        %v2322 = vadd.f32 %v961, %v2321
        %v2323 = vpop.f32.mrb[0].mxu0
        %v2324 = vadd.f32 %v965, %v2323
        %2325 = vdwg.mxu0
        %2326 = vmatprep.subr.bf16.mxu0 %v1615
        %2327 = vmatpush1.bf16.msra.mxu0 %v1614
        %2328 = vmatprep.subr.bf16.mxu0 %v1639
        %2329 = vmatpush1.bf16.msra.mxu0 %v1638
        %2330 = vmatprep.subr.bf16.mxu0 %v1663
        %2331 = vmatpush1.bf16.msra.mxu0 %v1662
        %2332 = vmatprep.subr.bf16.mxu0 %v1687
        %2333 = vmatpush1.bf16.msra.mxu0 %v1686
        %2334 = vmatprep.subr.bf16.mxu0 %v1711
        %2335 = vmatpush1.bf16.msra.mxu0 %v1710
        %2336 = vmatprep.subr.bf16.mxu0 %v1735
        %2337 = vmatpush1.bf16.msra.mxu0 %v1734
        %2338 = vmatprep.subr.bf16.mxu0 %v1759
        %2339 = vmatpush1.bf16.msra.mxu0 %v1758
        %2340 = vmatprep.subr.bf16.mxu0 %v1783
        %2341 = vmatpush1.bf16.msra.mxu0 %v1782
        %2342 = vmatprep.subr.bf16.mxu0 0
        %2343 = vmatpush1.bf16.msra.mxu0 0
        %2344 = vmatprep.subr.bf16.mxu0 0
        %2345 = vmatpush1.bf16.msra.mxu0 0
        %2346 = vmatprep.subr.bf16.mxu0 0
        %2347 = vmatpush1.bf16.msra.mxu0 0
        %2348 = vmatprep.subr.bf16.mxu0 0
        %2349 = vmatpush1.bf16.msra.mxu0 0
        %2350 = vmatprep.subr.bf16.mxu0 0
        %2351 = vmatpush1.bf16.msra.mxu0 0
        %2352 = vmatprep.subr.bf16.mxu0 0
        %2353 = vmatpush1.bf16.msra.mxu0 0
        %2354 = vmatprep.subr.bf16.mxu0 0
        %2355 = vmatpush1.bf16.msra.mxu0 0
        %2356 = vmatprep.subr.bf16.mxu0 0
        %2357 = vmatpush1.bf16.msra.mxu0 0
        %2358 = vmatprep.mubr.bf16.mxu0 0
        %2359 = vmatmul.mubr.bf16.gmra.mrb[0].mxu0 %v703
        %v2360 = vpop.f32.mrb[0].mxu0
        %v2361 = vadd.f32 %v969, %v2360
        %v2362 = vpop.f32.mrb[0].mxu0
        %v2363 = vadd.f32 %v973, %v2362
        %v2364 = vpop.f32.mrb[0].mxu0
        %v2365 = vadd.f32 %v969, %v2364
        %v2366 = vpop.f32.mrb[0].mxu0
        %v2367 = vadd.f32 %v973, %v2366
        %2368 = vdwg.mxu0
        %2369 = vmatprep.subr.bf16.mxu0 %v1617
        %2370 = vmatpush1.bf16.msra.mxu0 %v1616
        %2371 = vmatprep.subr.bf16.mxu0 %v1641
        %2372 = vmatpush1.bf16.msra.mxu0 %v1640
        %2373 = vmatprep.subr.bf16.mxu0 %v1665
        %2374 = vmatpush1.bf16.msra.mxu0 %v1664
        %2375 = vmatprep.subr.bf16.mxu0 %v1689
        %2376 = vmatpush1.bf16.msra.mxu0 %v1688
        %2377 = vmatprep.subr.bf16.mxu0 %v1713
        %2378 = vmatpush1.bf16.msra.mxu0 %v1712
        %2379 = vmatprep.subr.bf16.mxu0 %v1737
        %2380 = vmatpush1.bf16.msra.mxu0 %v1736
        %2381 = vmatprep.subr.bf16.mxu0 %v1761
        %2382 = vmatpush1.bf16.msra.mxu0 %v1760
        %2383 = vmatprep.subr.bf16.mxu0 %v1785
        %2384 = vmatpush1.bf16.msra.mxu0 %v1784
        %2385 = vmatprep.subr.bf16.mxu0 0
        %2386 = vmatpush1.bf16.msra.mxu0 0
        %2387 = vmatprep.subr.bf16.mxu0 0
        %2388 = vmatpush1.bf16.msra.mxu0 0
        %2389 = vmatprep.subr.bf16.mxu0 0
        %2390 = vmatpush1.bf16.msra.mxu0 0
        %2391 = vmatprep.subr.bf16.mxu0 0
        %2392 = vmatpush1.bf16.msra.mxu0 0
        %2393 = vmatprep.subr.bf16.mxu0 0
        %2394 = vmatpush1.bf16.msra.mxu0 0
        %2395 = vmatprep.subr.bf16.mxu0 0
        %2396 = vmatpush1.bf16.msra.mxu0 0
        %2397 = vmatprep.subr.bf16.mxu0 0
        %2398 = vmatpush1.bf16.msra.mxu0 0
        %2399 = vmatprep.subr.bf16.mxu0 0
        %2400 = vmatpush1.bf16.msra.mxu0 0
        %2401 = vmatprep.mubr.bf16.mxu0 0
        %2402 = vmatmul.mubr.bf16.gmra.mrb[0].mxu0 %v703
        %v2403 = vpop.f32.mrb[0].mxu0
        %v2404 = vadd.f32 %v977, %v2403
        %v2405 = vpop.f32.mrb[0].mxu0
        %v2406 = vadd.f32 %v981, %v2405
        %v2407 = vpop.f32.mrb[0].mxu0
        %v2408 = vadd.f32 %v977, %v2407
        %v2409 = vpop.f32.mrb[0].mxu0
        %v2410 = vadd.f32 %v981, %v2409
        %2411 = vdwg.mxu0
        %2412 = vmatprep.subr.bf16.mxu0 %v1619
        %2413 = vmatpush1.bf16.msra.mxu0 %v1618
        %2414 = vmatprep.subr.bf16.mxu0 %v1643
        %2415 = vmatpush1.bf16.msra.mxu0 %v1642
        %2416 = vmatprep.subr.bf16.mxu0 %v1667
        %2417 = vmatpush1.bf16.msra.mxu0 %v1666
        %2418 = vmatprep.subr.bf16.mxu0 %v1691
        %2419 = vmatpush1.bf16.msra.mxu0 %v1690
        %2420 = vmatprep.subr.bf16.mxu0 %v1715
        %2421 = vmatpush1.bf16.msra.mxu0 %v1714
        %2422 = vmatprep.subr.bf16.mxu0 %v1739
        %2423 = vmatpush1.bf16.msra.mxu0 %v1738
        %2424 = vmatprep.subr.bf16.mxu0 %v1763
        %2425 = vmatpush1.bf16.msra.mxu0 %v1762
        %2426 = vmatprep.subr.bf16.mxu0 %v1787
        %2427 = vmatpush1.bf16.msra.mxu0 %v1786
        %2428 = vmatprep.subr.bf16.mxu0 0
        %2429 = vmatpush1.bf16.msra.mxu0 0
        %2430 = vmatprep.subr.bf16.mxu0 0
        %2431 = vmatpush1.bf16.msra.mxu0 0
        %2432 = vmatprep.subr.bf16.mxu0 0
        %2433 = vmatpush1.bf16.msra.mxu0 0
        %2434 = vmatprep.subr.bf16.mxu0 0
        %2435 = vmatpush1.bf16.msra.mxu0 0
        %2436 = vmatprep.subr.bf16.mxu0 0
        %2437 = vmatpush1.bf16.msra.mxu0 0
        %2438 = vmatprep.subr.bf16.mxu0 0
        %2439 = vmatpush1.bf16.msra.mxu0 0
        %2440 = vmatprep.subr.bf16.mxu0 0
        %2441 = vmatpush1.bf16.msra.mxu0 0
        %2442 = vmatprep.subr.bf16.mxu0 0
        %2443 = vmatpush1.bf16.msra.mxu0 0
        %2444 = vmatprep.mubr.bf16.mxu0 0
        %2445 = vmatmul.mubr.bf16.gmra.mrb[0].mxu0 %v703
        %v2446 = vpop.f32.mrb[0].mxu0
        %v2447 = vadd.f32 %v985, %v2446
        %v2448 = vpop.f32.mrb[0].mxu0
        %v2449 = vadd.f32 %v989, %v2448
        %v2450 = vpop.f32.mrb[0].mxu0
        %v2451 = vadd.f32 %v985, %v2450
        %v2452 = vpop.f32.mrb[0].mxu0
        %v2453 = vadd.f32 %v989, %v2452
        %2454 = vdwg.mxu0
        %2455 = vmatprep.subr.bf16.mxu0 %v1621
        %2456 = vmatpush1.bf16.msra.mxu0 %v1620
        %2457 = vmatprep.subr.bf16.mxu0 %v1645
        %2458 = vmatpush1.bf16.msra.mxu0 %v1644
        %2459 = vmatprep.subr.bf16.mxu0 %v1669
        %2460 = vmatpush1.bf16.msra.mxu0 %v1668
        %2461 = vmatprep.subr.bf16.mxu0 %v1693
        %2462 = vmatpush1.bf16.msra.mxu0 %v1692
        %2463 = vmatprep.subr.bf16.mxu0 %v1717
        %2464 = vmatpush1.bf16.msra.mxu0 %v1716
        %2465 = vmatprep.subr.bf16.mxu0 %v1741
        %2466 = vmatpush1.bf16.msra.mxu0 %v1740
        %2467 = vmatprep.subr.bf16.mxu0 %v1765
        %2468 = vmatpush1.bf16.msra.mxu0 %v1764
        %2469 = vmatprep.subr.bf16.mxu0 %v1789
        %2470 = vmatpush1.bf16.msra.mxu0 %v1788
        %2471 = vmatprep.subr.bf16.mxu0 0
        %2472 = vmatpush1.bf16.msra.mxu0 0
        %2473 = vmatprep.subr.bf16.mxu0 0
        %2474 = vmatpush1.bf16.msra.mxu0 0
        %2475 = vmatprep.subr.bf16.mxu0 0
        %2476 = vmatpush1.bf16.msra.mxu0 0
        %2477 = vmatprep.subr.bf16.mxu0 0
        %2478 = vmatpush1.bf16.msra.mxu0 0
        %2479 = vmatprep.subr.bf16.mxu0 0
        %2480 = vmatpush1.bf16.msra.mxu0 0
        %2481 = vmatprep.subr.bf16.mxu0 0
        %2482 = vmatpush1.bf16.msra.mxu0 0
        %2483 = vmatprep.subr.bf16.mxu0 0
        %2484 = vmatpush1.bf16.msra.mxu0 0
        %2485 = vmatprep.subr.bf16.mxu0 0
        %2486 = vmatpush1.bf16.msra.mxu0 0
        %2487 = vmatprep.mubr.bf16.mxu0 0
        %2488 = vmatmul.mubr.bf16.gmra.mrb[0].mxu0 %v703
        %v2489 = vpop.f32.mrb[0].mxu0
        %v2490 = vadd.f32 %v993, %v2489
        %v2491 = vpop.f32.mrb[0].mxu0
        %v2492 = vadd.f32 %v997, %v2491
        %v2493 = vpop.f32.mrb[0].mxu0
        %v2494 = vadd.f32 %v993, %v2493
        %v2495 = vpop.f32.mrb[0].mxu0
        %v2496 = vadd.f32 %v997, %v2495
        %2497 = vdwg.mxu0
        %v2498 = vpack.c.bf16 %v2021, %v2017
        %v2499 = vpack.c.bf16 %v2023, %v2019
        %v2500 = vpack.c.bf16 %v2064, %v2060
        %v2501 = vpack.c.bf16 %v2066, %v2062
        %v2502 = vpack.c.bf16 %v2107, %v2103
        %v2503 = vpack.c.bf16 %v2109, %v2105
        %v2504 = vpack.c.bf16 %v2150, %v2146
        %v2505 = vpack.c.bf16 %v2152, %v2148
        %v2506 = vpack.c.bf16 %v2193, %v2189
        %v2507 = vpack.c.bf16 %v2195, %v2191
        %v2508 = vpack.c.bf16 %v2236, %v2232
        %v2509 = vpack.c.bf16 %v2238, %v2234
        %v2510 = vpack.c.bf16 %v2279, %v2275
        %v2511 = vpack.c.bf16 %v2281, %v2277
        %v2512 = vpack.c.bf16 %v2322, %v2318
        %v2513 = vpack.c.bf16 %v2324, %v2320
        %v2514 = vpack.c.bf16 %v2365, %v2361
        %v2515 = vpack.c.bf16 %v2367, %v2363
        %v2516 = vpack.c.bf16 %v2408, %v2404
        %v2517 = vpack.c.bf16 %v2410, %v2406
        %v2518 = vpack.c.bf16 %v2451, %v2447
        %v2519 = vpack.c.bf16 %v2453, %v2449
        %v2520 = vpack.c.bf16 %v2494, %v2490
        %v2521 = vpack.c.bf16 %v2496, %v2492
        %v2522 = vtanh.bf16.pop %v2498
        %v2523 = vtanh.bf16.pop %v2499
        %v2524 = vtanh.bf16.pop %v2500
        %v2525 = vtanh.bf16.pop %v2501
        %v2526 = vtanh.bf16.pop %v2502
        %v2527 = vtanh.bf16.pop %v2503
        %v2528 = vtanh.bf16.pop %v2504
        %v2529 = vtanh.bf16.pop %v2505
        %v2530 = vtanh.bf16.pop %v2506
        %v2531 = vtanh.bf16.pop %v2507
        %v2532 = vtanh.bf16.pop %v2508
        %v2533 = vtanh.bf16.pop %v2509
        %v2534 = vtanh.bf16.pop %v2510
        %v2535 = vtanh.bf16.pop %v2511
        %v2536 = vtanh.bf16.pop %v2512
        %v2537 = vtanh.bf16.pop %v2513
        %v2538 = vtanh.bf16.pop %v2514
        %v2539 = vtanh.bf16.pop %v2515
        %v2540 = vtanh.bf16.pop %v2516
        %v2541 = vtanh.bf16.pop %v2517
        %v2542 = vtanh.bf16.pop %v2518
        %v2543 = vtanh.bf16.pop %v2519
        %v2544 = vtanh.bf16.pop %v2520
        %v2545 = vtanh.bf16.pop %v2521
        %v2570 = vunpack.c.l.b16 %v2522
        %v2571 = vunpack.c.l.b16 %v2523
        %v2572 = vunpack.c.l.b16 %v2524
        %v2573 = vunpack.c.l.b16 %v2525
        %v2574 = vunpack.c.l.b16 %v2526
        %v2575 = vunpack.c.l.b16 %v2527
        %v2576 = vunpack.c.l.b16 %v2528
        %v2577 = vunpack.c.l.b16 %v2529
        %v2578 = vunpack.c.l.b16 %v2530
        %v2579 = vunpack.c.l.b16 %v2531
        %v2580 = vunpack.c.l.b16 %v2532
        %v2581 = vunpack.c.l.b16 %v2533
        %v2582 = vunpack.c.l.b16 %v2534
        %v2583 = vunpack.c.l.b16 %v2535
        %v2584 = vunpack.c.l.b16 %v2536
        %v2585 = vunpack.c.l.b16 %v2537
        %v2586 = vunpack.c.l.b16 %v2538
        %v2587 = vunpack.c.l.b16 %v2539
        %v2588 = vunpack.c.l.b16 %v2540
        %v2589 = vunpack.c.l.b16 %v2541
        %v2590 = vunpack.c.l.b16 %v2542
        %v2591 = vunpack.c.l.b16 %v2543
        %v2592 = vunpack.c.l.b16 %v2544
        %v2593 = vunpack.c.l.b16 %v2545
        %v2594 = vunpack.c.h.b16 %v2522
        %v2595 = vunpack.c.h.b16 %v2523
        %v2596 = vunpack.c.h.b16 %v2524
        %v2597 = vunpack.c.h.b16 %v2525
        %v2598 = vunpack.c.h.b16 %v2526
        %v2599 = vunpack.c.h.b16 %v2527
        %v2600 = vunpack.c.h.b16 %v2528
        %v2601 = vunpack.c.h.b16 %v2529
        %v2602 = vunpack.c.h.b16 %v2530
        %v2603 = vunpack.c.h.b16 %v2531
        %v2604 = vunpack.c.h.b16 %v2532
        %v2605 = vunpack.c.h.b16 %v2533
        %v2606 = vunpack.c.h.b16 %v2534
        %v2607 = vunpack.c.h.b16 %v2535
        %v2608 = vunpack.c.h.b16 %v2536
        %v2609 = vunpack.c.h.b16 %v2537
        %v2610 = vunpack.c.h.b16 %v2538
        %v2611 = vunpack.c.h.b16 %v2539
        %v2612 = vunpack.c.h.b16 %v2540
        %v2613 = vunpack.c.h.b16 %v2541
        %v2614 = vunpack.c.h.b16 %v2542
        %v2615 = vunpack.c.h.b16 %v2543
        %v2616 = vunpack.c.h.b16 %v2544
        %v2617 = vunpack.c.h.b16 %v2545
        %v2618 = vpack.c.b16 %v2571, %v2570
        %v2619 = vpack.c.b16 %v2573, %v2572
        %v2620 = vpack.c.b16 %v2575, %v2574
        %v2621 = vpack.c.b16 %v2577, %v2576
        %v2622 = vpack.c.b16 %v2579, %v2578
        %v2623 = vpack.c.b16 %v2581, %v2580
        %v2624 = vpack.c.b16 %v2583, %v2582
        %v2625 = vpack.c.b16 %v2585, %v2584
        %v2626 = vpack.c.b16 %v2587, %v2586
        %v2627 = vpack.c.b16 %v2589, %v2588
        %v2628 = vpack.c.b16 %v2591, %v2590
        %v2629 = vpack.c.b16 %v2593, %v2592
        %v2630 = vpack.c.b16 %v2595, %v2594
        %v2631 = vpack.c.b16 %v2597, %v2596
        %v2632 = vpack.c.b16 %v2599, %v2598
        %v2633 = vpack.c.b16 %v2601, %v2600
        %v2634 = vpack.c.b16 %v2603, %v2602
        %v2635 = vpack.c.b16 %v2605, %v2604
        %v2636 = vpack.c.b16 %v2607, %v2606
        %v2637 = vpack.c.b16 %v2609, %v2608
        %v2638 = vpack.c.b16 %v2611, %v2610
        %v2639 = vpack.c.b16 %v2613, %v2612
        %v2640 = vpack.c.b16 %v2615, %v2614
        %v2641 = vpack.c.b16 %v2617, %v2616
        %2666 = vst [vmem:[%s381] sm:$0xff] %v2618
        %2667 = vst [vmem:[%s381 + $0x8] sm:$0xff] %v2619
        %2668 = vst [vmem:[%s381 + $0x10] sm:$0xff] %v2620
        %2669 = vst [vmem:[%s381 + $0x18] sm:$0xff] %v2621
        %2670 = vst [vmem:[%s381 + $0x20] sm:$0xff] %v2622
        %2671 = vst [vmem:[%s381 + $0x28] sm:$0xff] %v2623
        %2672 = vst [vmem:[%s381 + $0x30] sm:$0xff] %v2624
        %2673 = vst [vmem:[%s381 + $0x38] sm:$0xff] %v2625
        %2674 = vst [vmem:[%s381 + $0x40] sm:$0xff] %v2626
        %2675 = vst [vmem:[%s381 + $0x48] sm:$0xff] %v2627
        %2676 = vst [vmem:[%s381 + $0x50] sm:$0xff] %v2628
        %2677 = vst [vmem:[%s381 + $0x58] sm:$0xff] %v2629
        %2678 = vst [vmem:[%s381 + $0x60] sm:$0xff] %v2630
        %2679 = vst [vmem:[%s381 + $0x68] sm:$0xff] %v2631
        %2680 = vst [vmem:[%s381 + $0x70] sm:$0xff] %v2632
        %2681 = vst [vmem:[%s381 + $0x78] sm:$0xff] %v2633
        %2682 = vst [vmem:[%s381 + $0x80] sm:$0xff] %v2634
        %2683 = vst [vmem:[%s381 + $0x88] sm:$0xff] %v2635
        %2684 = vst [vmem:[%s381 + $0x90] sm:$0xff] %v2636
        %2685 = vst [vmem:[%s381 + $0x98] sm:$0xff] %v2637
        %2686 = vst [vmem:[%s381 + $0xa0] sm:$0xff] %v2638
        %2687 = vst [vmem:[%s381 + $0xa8] sm:$0xff] %v2639
        %2688 = vst [vmem:[%s381 + $0xb0] sm:$0xff] %v2640
        %2689 = vst [vmem:[%s381 + $0xb8] sm:$0xff] %v2641
        %s2690 = sand.u32 %s207, 1
        %s2691 = scalar_lea.sflag [#allocation4], %s2690
        %s2692 = sand.u32 %s207, 1
        %s2693 = smul.addr %s2692, 192
        %s2694 = scalar_lea.vmem [#allocation11], %s2693
        // Predicated region
        $region69: #{tpu_custom_call.1} parent=47 // pred_check
          %p2695 = pneg %p217
        $region70: #{tpu_custom_call.1} parent=47 // pred_check_branch
          %2697 = sbr.rel (%p2695) target = $region72
        $region71: #{tpu_custom_call.1} parent=47 // pred_region
          %s2698 = smul.u32 2, %s31
          %s2700 = ssub.s32 3072, 3072
          %2701 = vsyncadd %s2691, %s2700
          %s2702 = smul.addr %s2698, 24
          %s2703 = smul.addr %s30, 48
          %s2704 = sadd.s32 %s2702, %s2703
          %s2705 = smul.addr %s2704, 64
          %s2706 = scalar_lea.hbm %s7, %s2705
          %s2707 = sshll.u32 %s2694, 4
          %s2708 = int_to_ptr.vmem [resolvable:$true] %s2707
          %2713 = dma.vmem_to_hbm [thread:$0]  %s2708, 3072, %s2706, %s2691, 1536, 1536, 96
        $region72: #{tpu_custom_call.1} parent=47 // pred_fallthru
          _
      $region48: #{tpu_custom_call.1} parent=5 // pred_fallthru
        _
      %p2714 = scmp.le.s32.totalorder 2, %s21
      // Predicated region
      $region73: #{tpu_custom_call.1} parent=5 // pred_check
        %p2715 = pneg %p2714
      $region74: #{tpu_custom_call.1} parent=5 // pred_check_branch
        %2717 = sbr.rel (%p2715) target = $region76
      $region75: #{tpu_custom_call.1} parent=5 // pred_region
        %s2718 = ssub.s32 %s21, 2
        // Predicated region
        $region77: #{tpu_custom_call.1} parent=75 // pred_check
          %p2719 = pneg %p223
        $region78: #{tpu_custom_call.1} parent=75 // pred_check_branch
          %2721 = sbr.rel (%p2719) target = $region80
        $region79: #{tpu_custom_call.1} parent=75 // pred_region
          %s2722 = sand.u32 %s208, 1
          %s2723 = scalar_lea.sflag [#allocation4], %s2722
          %s2724 = sand.u32 %s208, 1
          %s2725 = smul.addr %s2724, 192
          %s2726 = scalar_lea.vmem [#allocation11], %s2725
          %2727 = dma.done %s2723, 3072
        $region80: #{tpu_custom_call.1} parent=75 // pred_fallthru
          _
      $region76: #{tpu_custom_call.1} parent=5 // pred_fallthru
        _
    $region6: #{tpu_custom_call.1} parent=1 // loop_footer
      %s25 = sadd.s32 1, %s21
    $region7: #{tpu_custom_call.1} parent=1 // loop_footer_branch
      %20 = sbr.rel target = $region3
    $region8: #{tpu_custom_call.1} parent=1 // loop_exit
      _
    %2728 = vsyncpa [#allocation3], 1
    %s2729 = scalar_lea.sflag [#allocation3], 1
    %2730 = vsyncpa %s2729, 1
    %2731 = vsyncpa [#allocation6], 1
    %2732 = vsyncpa [#allocation9], 1
    %2733 = vsyncpa [#allocation4], 1
    %s2734 = scalar_lea.sflag [#allocation4], 1
    %2735 = vsyncpa %s2734, 1

// kernel: tpu_custom_call.1
$region0: #{tpu_custom_call.1}
  #allocation0 [shape = 'u32[]', space=smem, size = 0x4, offset = 0x4, fixed_abs, tag = 'smem constant byte address 0x4 - core index']
  #allocation1 [shape = 'u32[144,128]{1,0:T(1,128)}', space=vmem, size = 0x12000, scoped, tag = 'internal scratch']
  %s0 = inlined_call_operand.hbm [shape: f32[2,16,128], index: 0, kind: input, shape index: {}]
  %s1 = inlined_call_operand.vmem [shape: f32[2,1,128], index: 1, kind: input, shape index: {}]
  %s2 = inlined_call_operand.hbm [shape: bf16[128,128], index: 2, kind: input, shape index: {}]
  %s3 = inlined_call_operand.hbm [shape: bf16[256,128], index: 3, kind: input, shape index: {}]
  %s4 = inlined_call_operand.vmem [shape: f32[1,128], index: 4, kind: input, shape index: {}]
  %s5 = inlined_call_operand.hbm [shape: bf16[128,3072], index: 5, kind: input, shape index: {}]
  %s6 = inlined_call_operand.hbm [shape: f32[1,3072], index: 6, kind: input, shape index: {}]
  %s7 = inlined_call_operand.hbm [shape: bf16[2,16,3072], index: 7, kind: output, shape index: {}]
  %s8 = sld [smem:[#allocation0]]
  $region81: #{tpu_custom_call.1} parent=0
    _
  %s10 = ssub.s32 1, %s8
  %s11 = scalar_select 0, %s10, %s8
  $region1: #{tpu_custom_call.1} parent=0
    #allocation2 [shape = 'u8[16384]{0}', space=vmem, size = 0x4000, scoped, tag = 'input window, operand 0']
    #allocation3 [shape = 's32[2]{0}', space=sflag, size = 0x8, scoped, tag = 'scoped memory for tpu_custom_call.1']
    #allocation4 [shape = 's32[2]{0}', space=sflag, size = 0x8, scoped, tag = 'scoped memory for tpu_custom_call.1']
    #allocation5 [shape = 'u8[32768]{0}', space=vmem, size = 0x8000, scoped, tag = 'input window, operand 2, single buffered']
    #allocation6 [shape = 's32[1]{0}', space=sflag, size = 0x4, scoped, tag = 'scoped memory for tpu_custom_call.1']
    #allocation7 [shape = 'u8[65536]{0}', space=vmem, size = 0x10000, scoped, tag = 'input window, operand 3, single buffered']
    #allocation8 [shape = 'u8[786432]{0}', space=vmem, size = 0xc0000, scoped, tag = 'input window, operand 5, single buffered']
    #allocation9 [shape = 's32[1]{0}', space=sflag, size = 0x4, scoped, tag = 'scoped memory for tpu_custom_call.1']
    #allocation10 [shape = 'u8[12288]{0}', space=vmem, size = 0x3000, scoped, tag = 'input window, operand 6, single buffered']
    #allocation11 [shape = 'u8[196608]{0}', space=vmem, size = 0x30000, scoped, tag = 'output window, operand 0']
    %12 = vsyncpa [#allocation3], 0
    %s13 = scalar_lea.sflag [#allocation3], 1
    %14 = vsyncpa %s13, 0
    %15 = vsyncpa [#allocation6], 0
    %16 = vsyncpa [#allocation9], 0
    %17 = vsyncpa [#allocation4], 0
    %s18 = scalar_lea.sflag [#allocation4], 1
    %19 = vsyncpa %s18, 0
    loop: start=0, step=1, limit=4
    $region2: #{tpu_custom_call.1} parent=1 // loop_pre_header
      _
    $region3: #{tpu_custom_call.1} parent=1 // loop_header
      %s21 = sphi 0, %s25
      %p22 = scmp.ge.s32.totalorder %s21, 4
      %s28 = sphi 0, %s40
      %s29 = sphi 0, %s36
      %s30 = sphi 0, %s28
      %s31 = sphi 0, %s29
      %s32 = sphi 0, %s30
      %s33 = sphi 0, %s31
      %s45 = sphi 0, %s47
      %s48 = sphi 0, %s45
      %s49 = sphi 0, %s48
      %s65 = sphi 0, %s49
      %s71 = sphi 0, %s73
      %s74 = sphi 0, %s71
      %s75 = sphi 0, %s74
      %s91 = sphi 0, %s75
      %s95 = sphi 0, %s95
      %s97 = sphi 0, %s95
      %s98 = sphi 0, %s97
      %s112 = sphi 0, %s98
      %s116 = sphi 0, %s116
      %s118 = sphi 0, %s116
      %s119 = sphi 0, %s118
      %s133 = sphi 0, %s119
      %s137 = sphi 0, %s137
      %s139 = sphi 0, %s137
      %s140 = sphi 0, %s139
      %s154 = sphi 0, %s140
      %s158 = sphi 0, %s158
      %s160 = sphi 0, %s158
      %s161 = sphi 0, %s160
      %s175 = sphi 0, %s161
      %s179 = sphi 0, %s179
      %s181 = sphi 0, %s179
      %s182 = sphi 0, %s181
      %s196 = sphi 0, %s182
      %s204 = sphi 0, %s206
      %s207 = sphi 0, %s204
      %s208 = sphi 0, %s207
      %s224 = sphi 0, %s208
    $region4: #{tpu_custom_call.1} parent=1 // loop_header_branch
      %24 = sbr.rel (%p22) target = $region8
    $region5: #{tpu_custom_call.1} parent=1 // loop_body
      %s26 = ssub.s32 %s21, 1
      %s27 = ssub.s32 %s21, 2
      %s34 = sadd.s32 1, %s29
      %p35 = scmp.ge.s32.totalorder %s34, 1
      %s36 = scalar_select %p35, 0, %s34
      %s37 = sadd.s32 1, %s28
      %s38 = scalar_select %p35, %s37, %s28
      %p39 = scmp.ge.s32.totalorder %s38, 2
      %s40 = scalar_select %p39, 0, %s38
      %s41 = ssub.s32 %s28, %s40
      %s42 = ssub.s32 %s29, %s36
      %s43 = sor.u32 %s41, %s42
      %p44 = scmp.eq.s32.totalorder %s43, 0
      %s46 = sadd.s32 %s45, 1
      %s47 = scalar_select %p44, %s45, %s46
      %p50 = pneg %p44
      %p51 = scmp.eq.s32.totalorder %s21, 1
      %p52 = por %p50, %p51
      %p53 = scmp.ne.s32.totalorder %s45, %s48
      %p54 = scmp.eq.s32.totalorder %s21, 0
      %p55 = por %p53, %p54
      %p56 = scmp.ne.s32.totalorder %s45, %s48
      %p57 = scmp.eq.s32.totalorder %s26, 1
      %p58 = por %p56, %p57
      %p59 = scmp.ne.s32.totalorder %s48, %s49
      %p60 = scmp.eq.s32.totalorder %s26, 0
      %p61 = por %p59, %p60
      %p62 = scmp.ne.s32.totalorder %s48, %s49
      %p63 = scmp.eq.s32.totalorder %s27, 1
      %p64 = por %p62, %p63
      %p66 = scmp.ne.s32.totalorder %s49, %s65
      %p67 = scmp.eq.s32.totalorder %s27, 0
      %p68 = por %p66, %p67
      %s69 = ssub.s32 %s28, %s40
      %p70 = scmp.eq.s32.totalorder %s69, 0
      %s72 = sadd.s32 %s71, 1
      %s73 = scalar_select %p70, %s71, %s72
      %p76 = pneg %p70
      %p77 = scmp.eq.s32.totalorder %s21, 1
      %p78 = por %p76, %p77
      %p79 = scmp.ne.s32.totalorder %s71, %s74
      %p80 = scmp.eq.s32.totalorder %s21, 0
      %p81 = por %p79, %p80
      %p82 = scmp.ne.s32.totalorder %s71, %s74
      %p83 = scmp.eq.s32.totalorder %s26, 1
      %p84 = por %p82, %p83
      %p85 = scmp.ne.s32.totalorder %s74, %s75
      %p86 = scmp.eq.s32.totalorder %s26, 0
      %p87 = por %p85, %p86
      %p88 = scmp.ne.s32.totalorder %s74, %s75
      %p89 = scmp.eq.s32.totalorder %s27, 1
      %p90 = por %p88, %p89
      %p92 = scmp.ne.s32.totalorder %s75, %s91
      %p93 = scmp.eq.s32.totalorder %s27, 0
      %p94 = por %p92, %p93
      %s96 = sadd.s32 %s95, 1
      %p99 = scmp.eq.s32.totalorder %s21, 1
      %p100 = scmp.ne.s32.totalorder %s95, %s97
      %p101 = scmp.eq.s32.totalorder %s21, 0
      %p102 = por %p100, %p101
      %p103 = scmp.ne.s32.totalorder %s95, %s97
      %p104 = scmp.eq.s32.totalorder %s26, 1
      %p105 = por %p103, %p104
      %p106 = scmp.ne.s32.totalorder %s97, %s98
      %p107 = scmp.eq.s32.totalorder %s26, 0
      %p108 = por %p106, %p107
      %p109 = scmp.ne.s32.totalorder %s97, %s98
      %p110 = scmp.eq.s32.totalorder %s27, 1
      %p111 = por %p109, %p110
      %p113 = scmp.ne.s32.totalorder %s98, %s112
      %p114 = scmp.eq.s32.totalorder %s27, 0
      %p115 = por %p113, %p114
      %s117 = sadd.s32 %s116, 1
      %p120 = scmp.eq.s32.totalorder %s21, 1
      %p121 = scmp.ne.s32.totalorder %s116, %s118
      %p122 = scmp.eq.s32.totalorder %s21, 0
      %p123 = por %p121, %p122
      %p124 = scmp.ne.s32.totalorder %s116, %s118
      %p125 = scmp.eq.s32.totalorder %s26, 1
      %p126 = por %p124, %p125
      %p127 = scmp.ne.s32.totalorder %s118, %s119
      %p128 = scmp.eq.s32.totalorder %s26, 0
      %p129 = por %p127, %p128
      %p130 = scmp.ne.s32.totalorder %s118, %s119
      %p131 = scmp.eq.s32.totalorder %s27, 1
      %p132 = por %p130, %p131
      %p134 = scmp.ne.s32.totalorder %s119, %s133
      %p135 = scmp.eq.s32.totalorder %s27, 0
      %p136 = por %p134, %p135
      %s138 = sadd.s32 %s137, 1
      %p141 = scmp.eq.s32.totalorder %s21, 1
      %p142 = scmp.ne.s32.totalorder %s137, %s139
      %p143 = scmp.eq.s32.totalorder %s21, 0
      %p144 = por %p142, %p143
      %p145 = scmp.ne.s32.totalorder %s137, %s139
      %p146 = scmp.eq.s32.totalorder %s26, 1
      %p147 = por %p145, %p146
      %p148 = scmp.ne.s32.totalorder %s139, %s140
      %p149 = scmp.eq.s32.totalorder %s26, 0
      %p150 = por %p148, %p149
      %p151 = scmp.ne.s32.totalorder %s139, %s140
      %p152 = scmp.eq.s32.totalorder %s27, 1
      %p153 = por %p151, %p152
      %p155 = scmp.ne.s32.totalorder %s140, %s154
      %p156 = scmp.eq.s32.totalorder %s27, 0
      %p157 = por %p155, %p156
      %s159 = sadd.s32 %s158, 1
      %p162 = scmp.eq.s32.totalorder %s21, 1
      %p163 = scmp.ne.s32.totalorder %s158, %s160
      %p164 = scmp.eq.s32.totalorder %s21, 0
      %p165 = por %p163, %p164
      %p166 = scmp.ne.s32.totalorder %s158, %s160
      %p167 = scmp.eq.s32.totalorder %s26, 1
      %p168 = por %p166, %p167
      %p169 = scmp.ne.s32.totalorder %s160, %s161
      %p170 = scmp.eq.s32.totalorder %s26, 0
      %p171 = por %p169, %p170
      %p172 = scmp.ne.s32.totalorder %s160, %s161
      %p173 = scmp.eq.s32.totalorder %s27, 1
      %p174 = por %p172, %p173
      %p176 = scmp.ne.s32.totalorder %s161, %s175
      %p177 = scmp.eq.s32.totalorder %s27, 0
      %p178 = por %p176, %p177
      %s180 = sadd.s32 %s179, 1
      %p183 = scmp.eq.s32.totalorder %s21, 1
      %p184 = scmp.ne.s32.totalorder %s179, %s181
      %p185 = scmp.eq.s32.totalorder %s21, 0
      %p186 = por %p184, %p185
      %p187 = scmp.ne.s32.totalorder %s179, %s181
      %p188 = scmp.eq.s32.totalorder %s26, 1
      %p189 = por %p187, %p188
      %p190 = scmp.ne.s32.totalorder %s181, %s182
      %p191 = scmp.eq.s32.totalorder %s26, 0
      %p192 = por %p190, %p191
      %p193 = scmp.ne.s32.totalorder %s181, %s182
      %p194 = scmp.eq.s32.totalorder %s27, 1
      %p195 = por %p193, %p194
      %p197 = scmp.ne.s32.totalorder %s182, %s196
      %p198 = scmp.eq.s32.totalorder %s27, 0
      %p199 = por %p197, %p198
      %s200 = ssub.s32 %s28, %s40
      %s201 = ssub.s32 %s29, %s36
      %s202 = sor.u32 %s200, %s201
      %p203 = scmp.eq.s32.totalorder %s202, 0
      %s205 = sadd.s32 %s204, 1
      %s206 = scalar_select %p203, %s204, %s205
      %p209 = pneg %p203
      %p210 = scmp.eq.s32.totalorder %s21, 1
      %p211 = por %p209, %p210
      %p212 = scmp.ne.s32.totalorder %s204, %s207
      %p213 = scmp.eq.s32.totalorder %s21, 0
      %p214 = por %p212, %p213
      %p215 = scmp.ne.s32.totalorder %s204, %s207
      %p216 = scmp.eq.s32.totalorder %s26, 1
      %p217 = por %p215, %p216
      %p218 = scmp.ne.s32.totalorder %s207, %s208
      %p219 = scmp.eq.s32.totalorder %s26, 0
      %p220 = por %p218, %p219
      %p221 = scmp.ne.s32.totalorder %s207, %s208
      %p222 = scmp.eq.s32.totalorder %s27, 1
      %p223 = por %p221, %p222
      %p225 = scmp.ne.s32.totalorder %s208, %s224
      %p226 = scmp.eq.s32.totalorder %s27, 0
      %p227 = por %p225, %p226
      %p228 = scmp.le.s32.totalorder 1, %s21
      %p229 = scmp.lt.s32.totalorder %s21, 3
      %p230 = pnand %p228, %p229
      %p231 = pneg %p230
      // Predicated region
      $region9: #{tpu_custom_call.1} parent=5 // pred_check
        _
      $region10: #{tpu_custom_call.1} parent=5 // pred_check_branch
        %233 = sbr.rel (%p230) target = $region12
      $region11: #{tpu_custom_call.1} parent=5 // pred_region
        %s234 = ssub.s32 %s21, 1
        // Predicated region
        $region13: #{tpu_custom_call.1} parent=11 // pred_check
          %p235 = pneg %p108
        $region14: #{tpu_custom_call.1} parent=11 // pred_check_branch
          %237 = sbr.rel (%p235) target = $region16
        $region15: #{tpu_custom_call.1} parent=11 // pred_region
          %s239 = ssub.s32 1024, 1024
          %240 = vsyncadd [#allocation6], %s239
          %s241 = sshll.u32 [#allocation5], 4
          %s242 = int_to_ptr.vmem [resolvable:$true] %s241
          %247 = dma.hbm_to_vmem [thread:$0]  %s2, 1024, %s242, [#allocation6], 64, 64, 4
        $region16: #{tpu_custom_call.1} parent=11 // pred_fallthru
          _
        // Predicated region
        $region17: #{tpu_custom_call.1} parent=11 // pred_check
          %p248 = pneg %p129
        $region18: #{tpu_custom_call.1} parent=11 // pred_check_branch
          %250 = sbr.rel (%p248) target = $region20
        $region19: #{tpu_custom_call.1} parent=11 // pred_region
          %s252 = ssub.s32 2048, 2048
          %253 = vsyncadd [#allocation6], %s252
          %s254 = sshll.u32 [#allocation7], 4
          %s255 = int_to_ptr.vmem [resolvable:$true] %s254
          %260 = dma.hbm_to_vmem [thread:$0]  %s3, 2048, %s255, [#allocation6], 64, 64, 4
        $region20: #{tpu_custom_call.1} parent=11 // pred_fallthru
          _
        // Predicated region
        $region21: #{tpu_custom_call.1} parent=11 // pred_check
          %p261 = pneg %p150
        $region22: #{tpu_custom_call.1} parent=11 // pred_check_branch
          %263 = sbr.rel (%p261) target = $region24
        $region23: #{tpu_custom_call.1} parent=11 // pred_region
          _
        $region24: #{tpu_custom_call.1} parent=11 // pred_fallthru
          _
        // Predicated region
        $region25: #{tpu_custom_call.1} parent=11 // pred_check
          %p264 = pneg %p171
        $region26: #{tpu_custom_call.1} parent=11 // pred_check_branch
          %266 = sbr.rel (%p264) target = $region28
        $region27: #{tpu_custom_call.1} parent=11 // pred_region
          %s268 = ssub.s32 24576, 24576
          %269 = vsyncadd [#allocation9], %s268
          %s270 = sshll.u32 [#allocation8], 4
          %s271 = int_to_ptr.vmem [resolvable:$true] %s270
          %276 = dma.hbm_to_vmem [thread:$0]  %s5, 24576, %s271, [#allocation9], 1536, 1536, 96
        $region28: #{tpu_custom_call.1} parent=11 // pred_fallthru
          _
        // Predicated region
        $region29: #{tpu_custom_call.1} parent=11 // pred_check
          %p277 = pneg %p192
        $region30: #{tpu_custom_call.1} parent=11 // pred_check_branch
          %279 = sbr.rel (%p277) target = $region32
        $region31: #{tpu_custom_call.1} parent=11 // pred_region
          %s281 = ssub.s32 384, 384
          %282 = vsyncadd [#allocation9], %s281
          %s284 = sshll.u32 [#allocation10], 4
          %s285 = int_to_ptr.vmem [resolvable:$true] %s284
          %287 = dma.hbm_to_vmem [thread:$0]  %s6, 384, %s285, [#allocation9]
        $region32: #{tpu_custom_call.1} parent=11 // pred_fallthru
          _
      $region12: #{tpu_custom_call.1} parent=5 // pred_fallthru
        _
      %p288 = scmp.lt.s32.totalorder %s21, 2
      // Predicated region
      $region33: #{tpu_custom_call.1} parent=5 // pred_check
        %p289 = pneg %p288
      $region34: #{tpu_custom_call.1} parent=5 // pred_check_branch
        %291 = sbr.rel (%p289) target = $region36
      $region35: #{tpu_custom_call.1} parent=5 // pred_region
        // Predicated region
        $region37: #{tpu_custom_call.1} parent=35 // pred_check
          %p292 = pneg %p55
        $region38: #{tpu_custom_call.1} parent=35 // pred_check_branch
          %294 = sbr.rel (%p292) target = $region40
        $region39: #{tpu_custom_call.1} parent=35 // pred_region
          %s295 = sand.u32 %s45, 1
          %s296 = scalar_lea.sflag [#allocation3], %s295
          %s297 = sand.u32 %s45, 1
          %s298 = smul.addr %s297, 16
          %s299 = scalar_lea.vmem [#allocation2], %s298
          %s300 = smul.u32 2, %s29
          %s302 = ssub.s32 256, 256
          %303 = vsyncadd %s296, %s302
          %s304 = smul.addr %s28, 2
          %s305 = sadd.s32 %s300, %s304
          %s306 = smul.addr %s305, 128
          %s307 = scalar_lea.hbm %s0, %s306
          %s308 = sshll.u32 %s299, 4
          %s309 = int_to_ptr.vmem [resolvable:$true] %s308
          %314 = dma.hbm_to_vmem [thread:$0]  %s307, 256, %s309, %s296, 128, 128, 8
        $region40: #{tpu_custom_call.1} parent=35 // pred_fallthru
          _
        // Predicated region
        $region41: #{tpu_custom_call.1} parent=35 // pred_check
          %p315 = pneg %p81
        $region42: #{tpu_custom_call.1} parent=35 // pred_check_branch
          %317 = sbr.rel (%p315) target = $region44
        $region43: #{tpu_custom_call.1} parent=35 // pred_region
          %p318 = scmp.lt.s32.totalorder %s28, 1
          %s319 = scalar_select %p318, %s28, 1
          %s320 = scalar_lea.vmem %s1, %s319
        $region44: #{tpu_custom_call.1} parent=35 // pred_fallthru
          _
      $region36: #{tpu_custom_call.1} parent=5 // pred_fallthru
        _
      %p321 = scmp.le.s32.totalorder 1, %s21
      %p322 = scmp.lt.s32.totalorder %s21, 3
      %p323 = pnand %p321, %p322
      %p324 = pneg %p323
      // Predicated region
      $region45: #{tpu_custom_call.1} parent=5 // pred_check
        _
      $region46: #{tpu_custom_call.1} parent=5 // pred_check_branch
        %326 = sbr.rel (%p323) target = $region48
      $region47: #{tpu_custom_call.1} parent=5 // pred_region
        %s327 = ssub.s32 %s21, 1
        %s328 = sand.u32 %s48, 1
        %s329 = scalar_lea.sflag [#allocation3], %s328
        %s330 = sand.u32 %s48, 1
        %s331 = smul.addr %s330, 16
        %s332 = scalar_lea.vmem [#allocation2], %s331
        // Predicated region
        $region49: #{tpu_custom_call.1} parent=47 // pred_check
          %p333 = pneg %p61
        $region50: #{tpu_custom_call.1} parent=47 // pred_check_branch
          %335 = sbr.rel (%p333) target = $region52
        $region51: #{tpu_custom_call.1} parent=47 // pred_region
          %336 = dma.done %s329, 256
        $region52: #{tpu_custom_call.1} parent=47 // pred_fallthru
          _
        // Predicated region
        $region53: #{tpu_custom_call.1} parent=47 // pred_check
          %p337 = pneg %p108
        $region54: #{tpu_custom_call.1} parent=47 // pred_check_branch
          %339 = sbr.rel (%p337) target = $region56
        $region55: #{tpu_custom_call.1} parent=47 // pred_region
          %340 = dma.done [#allocation6], 1024
        $region56: #{tpu_custom_call.1} parent=47 // pred_fallthru
          _
        // Predicated region
        $region57: #{tpu_custom_call.1} parent=47 // pred_check
          %p341 = pneg %p129
        $region58: #{tpu_custom_call.1} parent=47 // pred_check_branch
          %343 = sbr.rel (%p341) target = $region60
        $region59: #{tpu_custom_call.1} parent=47 // pred_region
          %344 = dma.done [#allocation6], 2048
        $region60: #{tpu_custom_call.1} parent=47 // pred_fallthru
          _
        // Predicated region
        $region61: #{tpu_custom_call.1} parent=47 // pred_check
          %p345 = pneg %p171
        $region62: #{tpu_custom_call.1} parent=47 // pred_check_branch
          %347 = sbr.rel (%p345) target = $region64
        $region63: #{tpu_custom_call.1} parent=47 // pred_region
          %348 = dma.done [#allocation9], 24576
        $region64: #{tpu_custom_call.1} parent=47 // pred_fallthru
          _
        // Predicated region
        $region65: #{tpu_custom_call.1} parent=47 // pred_check
          %p349 = pneg %p192
        $region66: #{tpu_custom_call.1} parent=47 // pred_check_branch
          %351 = sbr.rel (%p349) target = $region68
        $region67: #{tpu_custom_call.1} parent=47 // pred_region
          %352 = dma.done [#allocation9], 384
        $region68: #{tpu_custom_call.1} parent=47 // pred_fallthru
          _
        %s353 = sand.u32 %s48, 1
        %s354 = scalar_lea.sflag [#allocation3], %s353
        %s355 = sand.u32 %s48, 1
        %s356 = smul.addr %s355, 16
        %s357 = scalar_lea.vmem [#allocation2], %s356
        %p358 = pneg %p61
        %p359 = pneg %p58
        %p360 = scmp.lt.s32.totalorder %s30, 1
        %s361 = scalar_select %p360, %s30, 1
        %s362 = scalar_lea.vmem %s1, %s361
        %p363 = pneg %p87
        %p364 = pneg %p84
        %p365 = pneg %p108
        %p366 = pneg %p105
        %p367 = pneg %p129
        %p368 = pneg %p126
        %p369 = pneg %p150
        %p370 = pneg %p147
        %p371 = pneg %p171
        %p372 = pneg %p168
        %p373 = pneg %p192
        %p374 = pneg %p189
        %p375 = pneg %p220
        %p376 = pneg %p217
        %s377 = sand.u32 %s207, 1
        %s378 = scalar_lea.sflag [#allocation4], %s377
        %s379 = sand.u32 %s207, 1
        %s380 = smul.addr %s379, 192
        %s381 = scalar_lea.vmem [#allocation11], %s380
        %s382 = smul.u32 2, %s31
        %p383 = scmp.lt.s32.totalorder %s30, 1
        %s384 = scalar_select %p383, %s30, 1
        %s385 = scalar_lea.vmem %s1, %s384
        %s386 = smul.u32 2, %s31
        %v388 = vld [vmem:[%s332] sm:$0xff]
        %v389 = vld [vmem:[%s332 + $0x8] sm:$0xff]
        %v390 = vpack.c.bf16 %v389, %v388
        %v391 = vld [vmem:[#allocation5] sm:$0xf]
        %v392 = vld [vmem:[#allocation5 + $0x4] sm:$0xf]
        %v393 = vld [vmem:[#allocation5 + $0x8] sm:$0xf]
        %v394 = vld [vmem:[#allocation5 + $0xc] sm:$0xf]
        %v395 = vld [vmem:[#allocation5 + $0x10] sm:$0xf]
        %v396 = vld [vmem:[#allocation5 + $0x14] sm:$0xf]
        %v397 = vld [vmem:[#allocation5 + $0x18] sm:$0xf]
        %v398 = vld [vmem:[#allocation5 + $0x1c] sm:$0xf]
        %v399 = vld [vmem:[#allocation5 + $0x20] sm:$0xf]
        %v400 = vld [vmem:[#allocation5 + $0x24] sm:$0xf]
        %v401 = vld [vmem:[#allocation5 + $0x28] sm:$0xf]
        %v402 = vld [vmem:[#allocation5 + $0x2c] sm:$0xf]
        %v403 = vld [vmem:[#allocation5 + $0x30] sm:$0xf]
        %v404 = vld [vmem:[#allocation5 + $0x34] sm:$0xf]
        %v405 = vld [vmem:[#allocation5 + $0x38] sm:$0xf]
        %v406 = vld [vmem:[#allocation5 + $0x3c] sm:$0xf]
        %v407 = vld [vmem:[%s385] sm:$0x1]
        %v409 = vlaneseq
        %v410 = vshrl.u32 %v409, 7
        %v411 = vsub.s32 0, %v410
        %v412 = vrot.slane %v407, %v411
        %v430 = vunpack.c.l.b16 %v391
        %v431 = vunpack.c.l.b16 %v392
        %v432 = vunpack.c.l.b16 %v393
        %v433 = vunpack.c.l.b16 %v394
        %v434 = vunpack.c.l.b16 %v395
        %v435 = vunpack.c.l.b16 %v396
        %v436 = vunpack.c.l.b16 %v397
        %v437 = vunpack.c.l.b16 %v398
        %v438 = vunpack.c.l.b16 %v399
        %v439 = vunpack.c.l.b16 %v400
        %v440 = vunpack.c.l.b16 %v401
        %v441 = vunpack.c.l.b16 %v402
        %v442 = vunpack.c.l.b16 %v403
        %v443 = vunpack.c.l.b16 %v404
        %v444 = vunpack.c.l.b16 %v405
        %v445 = vunpack.c.l.b16 %v406
        %v446 = vpack.c.b16 %v431, %v430
        %v447 = vpack.c.b16 %v433, %v432
        %v448 = vpack.c.b16 %v435, %v434
        %v449 = vpack.c.b16 %v437, %v436
        %v450 = vpack.c.b16 %v439, %v438
        %v451 = vpack.c.b16 %v441, %v440
        %v452 = vpack.c.b16 %v443, %v442
        %v453 = vpack.c.b16 %v445, %v444
        %462 = vmatprep.subr.bf16.mxu0 0
        %463 = vmatpush1.bf16.msra.mxu0 %v446
        %464 = vmatprep.subr.bf16.mxu0 0
        %465 = vmatpush1.bf16.msra.mxu0 %v447
        %466 = vmatprep.subr.bf16.mxu0 0
        %467 = vmatpush1.bf16.msra.mxu0 %v448
        %468 = vmatprep.subr.bf16.mxu0 0
        %469 = vmatpush1.bf16.msra.mxu0 %v449
        %470 = vmatprep.subr.bf16.mxu0 0
        %471 = vmatpush1.bf16.msra.mxu0 %v450
        %472 = vmatprep.subr.bf16.mxu0 0
        %473 = vmatpush1.bf16.msra.mxu0 %v451
        %474 = vmatprep.subr.bf16.mxu0 0
        %475 = vmatpush1.bf16.msra.mxu0 %v452
        %476 = vmatprep.subr.bf16.mxu0 0
        %477 = vmatpush1.bf16.msra.mxu0 %v453
        %478 = vmatprep.subr.bf16.mxu0 0
        %479 = vmatpush1.bf16.msra.mxu0 0
        %480 = vmatprep.subr.bf16.mxu0 0
        %481 = vmatpush1.bf16.msra.mxu0 0
        %482 = vmatprep.subr.bf16.mxu0 0
        %483 = vmatpush1.bf16.msra.mxu0 0
        %484 = vmatprep.subr.bf16.mxu0 0
        %485 = vmatpush1.bf16.msra.mxu0 0
        %486 = vmatprep.subr.bf16.mxu0 0
        %487 = vmatpush1.bf16.msra.mxu0 0
        %488 = vmatprep.subr.bf16.mxu0 0
        %489 = vmatpush1.bf16.msra.mxu0 0
        %490 = vmatprep.subr.bf16.mxu0 0
        %491 = vmatpush1.bf16.msra.mxu0 0
        %492 = vmatprep.subr.bf16.mxu0 0
        %493 = vmatpush1.bf16.msra.mxu0 0
        %494 = vmatprep.mubr.bf16.mxu0 0
        %495 = vmatmul.mubr.bf16.gmra.mrb[0].mxu0 %v390
        %v496 = vpop.f32.mrb[0].mxu0
        %v497 = vadd.f32 %v412, %v496
        %v498 = vpop.f32.mrb[0].mxu0
        %v499 = vpop.f32.mrb[0].mxu0
        %v500 = vadd.f32 %v412, %v499
        %v501 = vpop.f32.mrb[0].mxu0
        %502 = vdwg.mxu0
        %503 = vadd.xlane.f32.xlu0 %v497
        %v504 = vpop.xlane.xlu0 %503
        %505 = vadd.xlane.f32.xlu0 %v500
        %v506 = vpop.xlane.xlu0 %505
        %v507 = vrcp.pop 128.0
        %v508 = vmul.f32 %v504, %v507
        %v509 = vmul.f32 %v506, %v507
        %v510 = vsub.f32 %v497, %v508
        %v511 = vsub.f32 %v500, %v509
        %v512 = vmul.f32 %v510, %v510
        %v513 = vmul.f32 %v511, %v511
        %514 = vadd.xlane.f32.xlu0 %v512
        %v515 = vpop.xlane.xlu0 %514
        %516 = vadd.xlane.f32.xlu0 %v513
        %v517 = vpop.xlane.xlu0 %516
        %v518 = vmul.f32 %v515, %v507
        %v519 = vmul.f32 %v517, %v507
        %v520 = vadd.f32 %v518, 1e-05
        %v521 = vadd.f32 %v519, 1e-05
        %v522 = vrsqrt.pop %v520
        %v523 = vrsqrt.pop %v521
        %v524 = vmul.f32 %v510, %v522
        %v525 = vmul.f32 %v511, %v523
        %v526 = vpack.c.bf16 %v525, %v524
        %v527 = vld [vmem:[#allocation7] sm:$0xf]
        %v528 = vld [vmem:[#allocation7 + $0x4] sm:$0xf]
        %v529 = vld [vmem:[#allocation7 + $0x8] sm:$0xf]
        %v530 = vld [vmem:[#allocation7 + $0xc] sm:$0xf]
        %v531 = vld [vmem:[#allocation7 + $0x10] sm:$0xf]
        %v532 = vld [vmem:[#allocation7 + $0x14] sm:$0xf]
        %v533 = vld [vmem:[#allocation7 + $0x18] sm:$0xf]
        %v534 = vld [vmem:[#allocation7 + $0x1c] sm:$0xf]
        %v535 = vld [vmem:[#allocation7 + $0x20] sm:$0xf]
        %v536 = vld [vmem:[#allocation7 + $0x24] sm:$0xf]
        %v537 = vld [vmem:[#allocation7 + $0x28] sm:$0xf]
        %v538 = vld [vmem:[#allocation7 + $0x2c] sm:$0xf]
        %v539 = vld [vmem:[#allocation7 + $0x30] sm:$0xf]
        %v540 = vld [vmem:[#allocation7 + $0x34] sm:$0xf]
        %v541 = vld [vmem:[#allocation7 + $0x38] sm:$0xf]
        %v542 = vld [vmem:[#allocation7 + $0x3c] sm:$0xf]
        %v543 = vld [vmem:[#allocation7 + $0x40] sm:$0xf]
        %v544 = vld [vmem:[#allocation7 + $0x44] sm:$0xf]
        %v545 = vld [vmem:[#allocation7 + $0x48] sm:$0xf]
        %v546 = vld [vmem:[#allocation7 + $0x4c] sm:$0xf]
        %v547 = vld [vmem:[#allocation7 + $0x50] sm:$0xf]
        %v548 = vld [vmem:[#allocation7 + $0x54] sm:$0xf]
        %v549 = vld [vmem:[#allocation7 + $0x58] sm:$0xf]
        %v550 = vld [vmem:[#allocation7 + $0x5c] sm:$0xf]
        %v551 = vld [vmem:[#allocation7 + $0x60] sm:$0xf]
        %v552 = vld [vmem:[#allocation7 + $0x64] sm:$0xf]
        %v553 = vld [vmem:[#allocation7 + $0x68] sm:$0xf]
        %v554 = vld [vmem:[#allocation7 + $0x6c] sm:$0xf]
        %v555 = vld [vmem:[#allocation7 + $0x70] sm:$0xf]
        %v556 = vld [vmem:[#allocation7 + $0x74] sm:$0xf]
        %v557 = vld [vmem:[#allocation7 + $0x78] sm:$0xf]
        %v558 = vld [vmem:[#allocation7 + $0x7c] sm:$0xf]
        %v559 = vld [vmem:[%s4] sm:$0x1]
        %v561 = vlaneseq
        %v562 = vshrl.u32 %v561, 7
        %v563 = vsub.s32 0, %v562
        %v564 = vrot.slane %v559, %v563
        %v598 = vunpack.c.l.b16 %v527
        %v599 = vunpack.c.l.b16 %v528
        %v600 = vunpack.c.l.b16 %v529
        %v601 = vunpack.c.l.b16 %v530
        %v602 = vunpack.c.l.b16 %v531
        %v603 = vunpack.c.l.b16 %v532
        %v604 = vunpack.c.l.b16 %v533
        %v605 = vunpack.c.l.b16 %v534
        %v606 = vunpack.c.l.b16 %v535
        %v607 = vunpack.c.l.b16 %v536
        %v608 = vunpack.c.l.b16 %v537
        %v609 = vunpack.c.l.b16 %v538
        %v610 = vunpack.c.l.b16 %v539
        %v611 = vunpack.c.l.b16 %v540
        %v612 = vunpack.c.l.b16 %v541
        %v613 = vunpack.c.l.b16 %v542
        %v614 = vunpack.c.l.b16 %v543
        %v615 = vunpack.c.l.b16 %v544
        %v616 = vunpack.c.l.b16 %v545
        %v617 = vunpack.c.l.b16 %v546
        %v618 = vunpack.c.l.b16 %v547
        %v619 = vunpack.c.l.b16 %v548
        %v620 = vunpack.c.l.b16 %v549
        %v621 = vunpack.c.l.b16 %v550
        %v622 = vunpack.c.l.b16 %v551
        %v623 = vunpack.c.l.b16 %v552
        %v624 = vunpack.c.l.b16 %v553
        %v625 = vunpack.c.l.b16 %v554
        %v626 = vunpack.c.l.b16 %v555
        %v627 = vunpack.c.l.b16 %v556
        %v628 = vunpack.c.l.b16 %v557
        %v629 = vunpack.c.l.b16 %v558
        %v630 = vpack.c.b16 %v599, %v598
        %v631 = vpack.c.b16 %v601, %v600
        %v632 = vpack.c.b16 %v603, %v602
        %v633 = vpack.c.b16 %v605, %v604
        %v634 = vpack.c.b16 %v607, %v606
        %v635 = vpack.c.b16 %v609, %v608
        %v636 = vpack.c.b16 %v611, %v610
        %v637 = vpack.c.b16 %v613, %v612
        %v638 = vpack.c.b16 %v615, %v614
        %v639 = vpack.c.b16 %v617, %v616
        %v640 = vpack.c.b16 %v619, %v618
        %v641 = vpack.c.b16 %v621, %v620
        %v642 = vpack.c.b16 %v623, %v622
        %v643 = vpack.c.b16 %v625, %v624
        %v644 = vpack.c.b16 %v627, %v626
        %v645 = vpack.c.b16 %v629, %v628
        %662 = vmatprep.subr.bf16.mxu0 0
        %663 = vmatpush1.bf16.msra.mxu0 %v630
        %664 = vmatprep.subr.bf16.mxu0 0
        %665 = vmatpush1.bf16.msra.mxu0 %v631
        %666 = vmatprep.subr.bf16.mxu0 0
        %667 = vmatpush1.bf16.msra.mxu0 %v632
        %668 = vmatprep.subr.bf16.mxu0 0
        %669 = vmatpush1.bf16.msra.mxu0 %v633
        %670 = vmatprep.subr.bf16.mxu0 0
        %671 = vmatpush1.bf16.msra.mxu0 %v634
        %672 = vmatprep.subr.bf16.mxu0 0
        %673 = vmatpush1.bf16.msra.mxu0 %v635
        %674 = vmatprep.subr.bf16.mxu0 0
        %675 = vmatpush1.bf16.msra.mxu0 %v636
        %676 = vmatprep.subr.bf16.mxu0 0
        %677 = vmatpush1.bf16.msra.mxu0 %v637
        %678 = vmatprep.subr.bf16.mxu0 0
        %679 = vmatpush1.bf16.msra.mxu0 %v638
        %680 = vmatprep.subr.bf16.mxu0 0
        %681 = vmatpush1.bf16.msra.mxu0 %v639
        %682 = vmatprep.subr.bf16.mxu0 0
        %683 = vmatpush1.bf16.msra.mxu0 %v640
        %684 = vmatprep.subr.bf16.mxu0 0
        %685 = vmatpush1.bf16.msra.mxu0 %v641
        %686 = vmatprep.subr.bf16.mxu0 0
        %687 = vmatpush1.bf16.msra.mxu0 %v642
        %688 = vmatprep.subr.bf16.mxu0 0
        %689 = vmatpush1.bf16.msra.mxu0 %v643
        %690 = vmatprep.subr.bf16.mxu0 0
        %691 = vmatpush1.bf16.msra.mxu0 %v644
        %692 = vmatprep.subr.bf16.mxu0 0
        %693 = vmatpush1.bf16.msra.mxu0 %v645
        %694 = vmatprep.mubr.bf16.mxu0 %v390
        %695 = vmatmul.mubr.bf16.gmra.mrb[0].mxu0 %v526
        %v696 = vpop.f32.mrb[0].mxu0
        %v697 = vadd.f32 %v564, %v696
        %v698 = vpop.f32.mrb[0].mxu0
        %v699 = vpop.f32.mrb[0].mxu0
        %v700 = vadd.f32 %v564, %v699
        %v701 = vpop.f32.mrb[0].mxu0
        %702 = vdwg.mxu0
        %v703 = vpack.c.bf16 %v700, %v697
        %v704 = vld [vmem:[#allocation8] sm:$0xff]
        %v705 = vld [vmem:[#allocation8 + $0x8] sm:$0xff]
        %v706 = vld [vmem:[#allocation8 + $0x10] sm:$0xff]
        %v707 = vld [vmem:[#allocation8 + $0x18] sm:$0xff]
        %v708 = vld [vmem:[#allocation8 + $0x20] sm:$0xff]
        %v709 = vld [vmem:[#allocation8 + $0x28] sm:$0xff]
        %v710 = vld [vmem:[#allocation8 + $0x30] sm:$0xff]
        %v711 = vld [vmem:[#allocation8 + $0x38] sm:$0xff]
        %v712 = vld [vmem:[#allocation8 + $0x40] sm:$0xff]
        %v713 = vld [vmem:[#allocation8 + $0x48] sm:$0xff]
        %v714 = vld [vmem:[#allocation8 + $0x50] sm:$0xff]
        %v715 = vld [vmem:[#allocation8 + $0x58] sm:$0xff]
        %v716 = vld [vmem:[#allocation8 + $0x60] sm:$0xff]
        %v717 = vld [vmem:[#allocation8 + $0x68] sm:$0xff]
        %v718 = vld [vmem:[#allocation8 + $0x70] sm:$0xff]
        %v719 = vld [vmem:[#allocation8 + $0x78] sm:$0xff]
        %v720 = vld [vmem:[#allocation8 + $0x80] sm:$0xff]
        %v721 = vld [vmem:[#allocation8 + $0x88] sm:$0xff]
        %v722 = vld [vmem:[#allocation8 + $0x90] sm:$0xff]
        %v723 = vld [vmem:[#allocation8 + $0x98] sm:$0xff]
        %v724 = vld [vmem:[#allocation8 + $0xa0] sm:$0xff]
        %v725 = vld [vmem:[#allocation8 + $0xa8] sm:$0xff]
        %v726 = vld [vmem:[#allocation8 + $0xb0] sm:$0xff]
        %v727 = vld [vmem:[#allocation8 + $0xb8] sm:$0xff]
        %v728 = vld [vmem:[#allocation8 + $0xc0] sm:$0xff]
        %v729 = vld [vmem:[#allocation8 + $0xc8] sm:$0xff]
        %v730 = vld [vmem:[#allocation8 + $0xd0] sm:$0xff]
        %v731 = vld [vmem:[#allocation8 + $0xd8] sm:$0xff]
        %v732 = vld [vmem:[#allocation8 + $0xe0] sm:$0xff]
        %v733 = vld [vmem:[#allocation8 + $0xe8] sm:$0xff]
        %v734 = vld [vmem:[#allocation8 + $0xf0] sm:$0xff]
        %v735 = vld [vmem:[#allocation8 + $0xf8] sm:$0xff]
        %v736 = vld [vmem:[#allocation8 + $0x100] sm:$0xff]
        %v737 = vld [vmem:[#allocation8 + $0x108] sm:$0xff]
        %v738 = vld [vmem:[#allocation8 + $0x110] sm:$0xff]
        %v739 = vld [vmem:[#allocation8 + $0x118] sm:$0xff]
        %v740 = vld [vmem:[#allocation8 + $0x120] sm:$0xff]
        %v741 = vld [vmem:[#allocation8 + $0x128] sm:$0xff]
        %v742 = vld [vmem:[#allocation8 + $0x130] sm:$0xff]
        %v743 = vld [vmem:[#allocation8 + $0x138] sm:$0xff]
        %v744 = vld [vmem:[#allocation8 + $0x140] sm:$0xff]
        %v745 = vld [vmem:[#allocation8 + $0x148] sm:$0xff]
        %v746 = vld [vmem:[#allocation8 + $0x150] sm:$0xff]
        %v747 = vld [vmem:[#allocation8 + $0x158] sm:$0xff]
        %v748 = vld [vmem:[#allocation8 + $0x160] sm:$0xff]
        %v749 = vld [vmem:[#allocation8 + $0x168] sm:$0xff]
        %v750 = vld [vmem:[#allocation8 + $0x170] sm:$0xff]
        %v751 = vld [vmem:[#allocation8 + $0x178] sm:$0xff]
        %v752 = vld [vmem:[#allocation8 + $0x180] sm:$0xff]
        %v753 = vld [vmem:[#allocation8 + $0x188] sm:$0xff]
        %v754 = vld [vmem:[#allocation8 + $0x190] sm:$0xff]
        %v755 = vld [vmem:[#allocation8 + $0x198] sm:$0xff]
        %v756 = vld [vmem:[#allocation8 + $0x1a0] sm:$0xff]
        %v757 = vld [vmem:[#allocation8 + $0x1a8] sm:$0xff]
        %v758 = vld [vmem:[#allocation8 + $0x1b0] sm:$0xff]
        %v759 = vld [vmem:[#allocation8 + $0x1b8] sm:$0xff]
        %v760 = vld [vmem:[#allocation8 + $0x1c0] sm:$0xff]
        %v761 = vld [vmem:[#allocation8 + $0x1c8] sm:$0xff]
        %v762 = vld [vmem:[#allocation8 + $0x1d0] sm:$0xff]
        %v763 = vld [vmem:[#allocation8 + $0x1d8] sm:$0xff]
        %v764 = vld [vmem:[#allocation8 + $0x1e0] sm:$0xff]
        %v765 = vld [vmem:[#allocation8 + $0x1e8] sm:$0xff]
        %v766 = vld [vmem:[#allocation8 + $0x1f0] sm:$0xff]
        %v767 = vld [vmem:[#allocation8 + $0x1f8] sm:$0xff]
        %v768 = vld [vmem:[#allocation8 + $0x200] sm:$0xff]
        %v769 = vld [vmem:[#allocation8 + $0x208] sm:$0xff]
        %v770 = vld [vmem:[#allocation8 + $0x210] sm:$0xff]
        %v771 = vld [vmem:[#allocation8 + $0x218] sm:$0xff]
        %v772 = vld [vmem:[#allocation8 + $0x220] sm:$0xff]
        %v773 = vld [vmem:[#allocation8 + $0x228] sm:$0xff]
        %v774 = vld [vmem:[#allocation8 + $0x230] sm:$0xff]
        %v775 = vld [vmem:[#allocation8 + $0x238] sm:$0xff]
        %v776 = vld [vmem:[#allocation8 + $0x240] sm:$0xff]
        %v777 = vld [vmem:[#allocation8 + $0x248] sm:$0xff]
        %v778 = vld [vmem:[#allocation8 + $0x250] sm:$0xff]
        %v779 = vld [vmem:[#allocation8 + $0x258] sm:$0xff]
        %v780 = vld [vmem:[#allocation8 + $0x260] sm:$0xff]
        %v781 = vld [vmem:[#allocation8 + $0x268] sm:$0xff]
        %v782 = vld [vmem:[#allocation8 + $0x270] sm:$0xff]
        %v783 = vld [vmem:[#allocation8 + $0x278] sm:$0xff]
        %v784 = vld [vmem:[#allocation8 + $0x280] sm:$0xff]
        %v785 = vld [vmem:[#allocation8 + $0x288] sm:$0xff]
        %v786 = vld [vmem:[#allocation8 + $0x290] sm:$0xff]
        %v787 = vld [vmem:[#allocation8 + $0x298] sm:$0xff]
        %v788 = vld [vmem:[#allocation8 + $0x2a0] sm:$0xff]
        %v789 = vld [vmem:[#allocation8 + $0x2a8] sm:$0xff]
        %v790 = vld [vmem:[#allocation8 + $0x2b0] sm:$0xff]
        %v791 = vld [vmem:[#allocation8 + $0x2b8] sm:$0xff]
        %v792 = vld [vmem:[#allocation8 + $0x2c0] sm:$0xff]
        %v793 = vld [vmem:[#allocation8 + $0x2c8] sm:$0xff]
        %v794 = vld [vmem:[#allocation8 + $0x2d0] sm:$0xff]
        %v795 = vld [vmem:[#allocation8 + $0x2d8] sm:$0xff]
        %v796 = vld [vmem:[#allocation8 + $0x2e0] sm:$0xff]
        %v797 = vld [vmem:[#allocation8 + $0x2e8] sm:$0xff]
        %v798 = vld [vmem:[#allocation8 + $0x2f0] sm:$0xff]
        %v799 = vld [vmem:[#allocation8 + $0x2f8] sm:$0xff]
        %v800 = vld [vmem:[#allocation8 + $0x300] sm:$0xff]
        %v801 = vld [vmem:[#allocation8 + $0x308] sm:$0xff]
        %v802 = vld [vmem:[#allocation8 + $0x310] sm:$0xff]
        %v803 = vld [vmem:[#allocation8 + $0x318] sm:$0xff]
        %v804 = vld [vmem:[#allocation8 + $0x320] sm:$0xff]
        %v805 = vld [vmem:[#allocation8 + $0x328] sm:$0xff]
        %v806 = vld [vmem:[#allocation8 + $0x330] sm:$0xff]
        %v807 = vld [vmem:[#allocation8 + $0x338] sm:$0xff]
        %v808 = vld [vmem:[#allocation8 + $0x340] sm:$0xff]
        %v809 = vld [vmem:[#allocation8 + $0x348] sm:$0xff]
        %v810 = vld [vmem:[#allocation8 + $0x350] sm:$0xff]
        %v811 = vld [vmem:[#allocation8 + $0x358] sm:$0xff]
        %v812 = vld [vmem:[#allocation8 + $0x360] sm:$0xff]
        %v813 = vld [vmem:[#allocation8 + $0x368] sm:$0xff]
        %v814 = vld [vmem:[#allocation8 + $0x370] sm:$0xff]
        %v815 = vld [vmem:[#allocation8 + $0x378] sm:$0xff]
        %v816 = vld [vmem:[#allocation8 + $0x380] sm:$0xff]
        %v817 = vld [vmem:[#allocation8 + $0x388] sm:$0xff]
        %v818 = vld [vmem:[#allocation8 + $0x390] sm:$0xff]
        %v819 = vld [vmem:[#allocation8 + $0x398] sm:$0xff]
        %v820 = vld [vmem:[#allocation8 + $0x3a0] sm:$0xff]
        %v821 = vld [vmem:[#allocation8 + $0x3a8] sm:$0xff]
        %v822 = vld [vmem:[#allocation8 + $0x3b0] sm:$0xff]
        %v823 = vld [vmem:[#allocation8 + $0x3b8] sm:$0xff]
        %v824 = vld [vmem:[#allocation8 + $0x3c0] sm:$0xff]
        %v825 = vld [vmem:[#allocation8 + $0x3c8] sm:$0xff]
        %v826 = vld [vmem:[#allocation8 + $0x3d0] sm:$0xff]
        %v827 = vld [vmem:[#allocation8 + $0x3d8] sm:$0xff]
        %v828 = vld [vmem:[#allocation8 + $0x3e0] sm:$0xff]
        %v829 = vld [vmem:[#allocation8 + $0x3e8] sm:$0xff]
        %v830 = vld [vmem:[#allocation8 + $0x3f0] sm:$0xff]
        %v831 = vld [vmem:[#allocation8 + $0x3f8] sm:$0xff]
        %v832 = vld [vmem:[#allocation8 + $0x400] sm:$0xff]
        %v833 = vld [vmem:[#allocation8 + $0x408] sm:$0xff]
        %v834 = vld [vmem:[#allocation8 + $0x410] sm:$0xff]
        %v835 = vld [vmem:[#allocation8 + $0x418] sm:$0xff]
        %v836 = vld [vmem:[#allocation8 + $0x420] sm:$0xff]
        %v837 = vld [vmem:[#allocation8 + $0x428] sm:$0xff]
        %v838 = vld [vmem:[#allocation8 + $0x430] sm:$0xff]
        %v839 = vld [vmem:[#allocation8 + $0x438] sm:$0xff]
        %v840 = vld [vmem:[#allocation8 + $0x440] sm:$0xff]
        %v841 = vld [vmem:[#allocation8 + $0x448] sm:$0xff]
        %v842 = vld [vmem:[#allocation8 + $0x450] sm:$0xff]
        %v843 = vld [vmem:[#allocation8 + $0x458] sm:$0xff]
        %v844 = vld [vmem:[#allocation8 + $0x460] sm:$0xff]
        %v845 = vld [vmem:[#allocation8 + $0x468] sm:$0xff]
        %v846 = vld [vmem:[#allocation8 + $0x470] sm:$0xff]
        %v847 = vld [vmem:[#allocation8 + $0x478] sm:$0xff]
        %v848 = vld [vmem:[#allocation8 + $0x480] sm:$0xff]
        %v849 = vld [vmem:[#allocation8 + $0x488] sm:$0xff]
        %v850 = vld [vmem:[#allocation8 + $0x490] sm:$0xff]
        %v851 = vld [vmem:[#allocation8 + $0x498] sm:$0xff]
        %v852 = vld [vmem:[#allocation8 + $0x4a0] sm:$0xff]
        %v853 = vld [vmem:[#allocation8 + $0x4a8] sm:$0xff]
        %v854 = vld [vmem:[#allocation8 + $0x4b0] sm:$0xff]
        %v855 = vld [vmem:[#allocation8 + $0x4b8] sm:$0xff]
        %v856 = vld [vmem:[#allocation8 + $0x4c0] sm:$0xff]
        %v857 = vld [vmem:[#allocation8 + $0x4c8] sm:$0xff]
        %v858 = vld [vmem:[#allocation8 + $0x4d0] sm:$0xff]
        %v859 = vld [vmem:[#allocation8 + $0x4d8] sm:$0xff]
        %v860 = vld [vmem:[#allocation8 + $0x4e0] sm:$0xff]
        %v861 = vld [vmem:[#allocation8 + $0x4e8] sm:$0xff]
        %v862 = vld [vmem:[#allocation8 + $0x4f0] sm:$0xff]
        %v863 = vld [vmem:[#allocation8 + $0x4f8] sm:$0xff]
        %v864 = vld [vmem:[#allocation8 + $0x500] sm:$0xff]
        %v865 = vld [vmem:[#allocation8 + $0x508] sm:$0xff]
        %v866 = vld [vmem:[#allocation8 + $0x510] sm:$0xff]
        %v867 = vld [vmem:[#allocation8 + $0x518] sm:$0xff]
        %v868 = vld [vmem:[#allocation8 + $0x520] sm:$0xff]
        %v869 = vld [vmem:[#allocation8 + $0x528] sm:$0xff]
        %v870 = vld [vmem:[#allocation8 + $0x530] sm:$0xff]
        %v871 = vld [vmem:[#allocation8 + $0x538] sm:$0xff]
        %v872 = vld [vmem:[#allocation8 + $0x540] sm:$0xff]
        %v873 = vld [vmem:[#allocation8 + $0x548] sm:$0xff]
        %v874 = vld [vmem:[#allocation8 + $0x550] sm:$0xff]
        %v875 = vld [vmem:[#allocation8 + $0x558] sm:$0xff]
        %v876 = vld [vmem:[#allocation8 + $0x560] sm:$0xff]
        %v877 = vld [vmem:[#allocation8 + $0x568] sm:$0xff]
        %v878 = vld [vmem:[#allocation8 + $0x570] sm:$0xff]
        %v879 = vld [vmem:[#allocation8 + $0x578] sm:$0xff]
        %v880 = vld [vmem:[#allocation8 + $0x580] sm:$0xff]
        %v881 = vld [vmem:[#allocation8 + $0x588] sm:$0xff]
        %v882 = vld [vmem:[#allocation8 + $0x590] sm:$0xff]
        %v883 = vld [vmem:[#allocation8 + $0x598] sm:$0xff]
        %v884 = vld [vmem:[#allocation8 + $0x5a0] sm:$0xff]
        %v885 = vld [vmem:[#allocation8 + $0x5a8] sm:$0xff]
        %v886 = vld [vmem:[#allocation8 + $0x5b0] sm:$0xff]
        %v887 = vld [vmem:[#allocation8 + $0x5b8] sm:$0xff]
        %v888 = vld [vmem:[#allocation8 + $0x5c0] sm:$0xff]
        %v889 = vld [vmem:[#allocation8 + $0x5c8] sm:$0xff]
        %v890 = vld [vmem:[#allocation8 + $0x5d0] sm:$0xff]
        %v891 = vld [vmem:[#allocation8 + $0x5d8] sm:$0xff]
        %v892 = vld [vmem:[#allocation8 + $0x5e0] sm:$0xff]
        %v893 = vld [vmem:[#allocation8 + $0x5e8] sm:$0xff]
        %v894 = vld [vmem:[#allocation8 + $0x5f0] sm:$0xff]
        %v895 = vld [vmem:[#allocation8 + $0x5f8] sm:$0xff]
        %v896 = vld [vmem:[#allocation10] sm:$0xff]
        %v897 = vld [vmem:[#allocation10 + $0x8] sm:$0xff]
        %v898 = vld [vmem:[#allocation10 + $0x10] sm:$0xff]
        %v902 = vlaneseq
        %v903 = vshrl.u32 %v902, 7
        %v904 = vsub.s32 0, %v903
        %v905 = vrot.slane %v896, %v904
        %v906 = vlaneseq
        %v907 = vshrl.u32 %v906, 7
        %v908 = vsub.s32 1, %v907
        %v909 = vrot.slane %v896, %v908
        %v910 = vlaneseq
        %v911 = vshrl.u32 %v910, 7
        %v912 = vsub.s32 2, %v911
        %v913 = vrot.slane %v896, %v912
        %v914 = vlaneseq
        %v915 = vshrl.u32 %v914, 7
        %v916 = vsub.s32 3, %v915
        %v917 = vrot.slane %v896, %v916
        %v918 = vlaneseq
        %v919 = vshrl.u32 %v918, 7
        %v920 = vsub.s32 4, %v919
        %v921 = vrot.slane %v896, %v920
        %v922 = vlaneseq
        %v923 = vshrl.u32 %v922, 7
        %v924 = vsub.s32 5, %v923
        %v925 = vrot.slane %v896, %v924
        %v926 = vlaneseq
        %v927 = vshrl.u32 %v926, 7
        %v928 = vsub.s32 6, %v927
        %v929 = vrot.slane %v896, %v928
        %v930 = vlaneseq
        %v931 = vshrl.u32 %v930, 7
        %v932 = vsub.s32 7, %v931
        %v933 = vrot.slane %v896, %v932
        %v934 = vlaneseq
        %v935 = vshrl.u32 %v934, 7
        %v936 = vsub.s32 0, %v935
        %v937 = vrot.slane %v897, %v936
        %v938 = vlaneseq
        %v939 = vshrl.u32 %v938, 7
        %v940 = vsub.s32 1, %v939
        %v941 = vrot.slane %v897, %v940
        %v942 = vlaneseq
        %v943 = vshrl.u32 %v942, 7
        %v944 = vsub.s32 2, %v943
        %v945 = vrot.slane %v897, %v944
        %v946 = vlaneseq
        %v947 = vshrl.u32 %v946, 7
        %v948 = vsub.s32 3, %v947
        %v949 = vrot.slane %v897, %v948
        %v950 = vlaneseq
        %v951 = vshrl.u32 %v950, 7
        %v952 = vsub.s32 4, %v951
        %v953 = vrot.slane %v897, %v952
        %v954 = vlaneseq
        %v955 = vshrl.u32 %v954, 7
        %v956 = vsub.s32 5, %v955
        %v957 = vrot.slane %v897, %v956
        %v958 = vlaneseq
        %v959 = vshrl.u32 %v958, 7
        %v960 = vsub.s32 6, %v959
        %v961 = vrot.slane %v897, %v960
        %v962 = vlaneseq
        %v963 = vshrl.u32 %v962, 7
        %v964 = vsub.s32 7, %v963
        %v965 = vrot.slane %v897, %v964
        %v966 = vlaneseq
        %v967 = vshrl.u32 %v966, 7
        %v968 = vsub.s32 0, %v967
        %v969 = vrot.slane %v898, %v968
        %v970 = vlaneseq
        %v971 = vshrl.u32 %v970, 7
        %v972 = vsub.s32 1, %v971
        %v973 = vrot.slane %v898, %v972
        %v974 = vlaneseq
        %v975 = vshrl.u32 %v974, 7
        %v976 = vsub.s32 2, %v975
        %v977 = vrot.slane %v898, %v976
        %v978 = vlaneseq
        %v979 = vshrl.u32 %v978, 7
        %v980 = vsub.s32 3, %v979
        %v981 = vrot.slane %v898, %v980
        %v982 = vlaneseq
        %v983 = vshrl.u32 %v982, 7
        %v984 = vsub.s32 4, %v983
        %v985 = vrot.slane %v898, %v984
        %v986 = vlaneseq
        %v987 = vshrl.u32 %v986, 7
        %v988 = vsub.s32 5, %v987
        %v989 = vrot.slane %v898, %v988
        %v990 = vlaneseq
        %v991 = vshrl.u32 %v990, 7
        %v992 = vsub.s32 6, %v991
        %v993 = vrot.slane %v898, %v992
        %v994 = vlaneseq
        %v995 = vshrl.u32 %v994, 7
        %v996 = vsub.s32 7, %v995
        %v997 = vrot.slane %v898, %v996
        %v1214 = vunpack.c.l.b16 %v704
        %v1215 = vunpack.c.h.b16 %v704
        %v1216 = vunpack.c.l.b16 %v705
        %v1217 = vunpack.c.h.b16 %v705
        %v1218 = vunpack.c.l.b16 %v706
        %v1219 = vunpack.c.h.b16 %v706
        %v1220 = vunpack.c.l.b16 %v707
        %v1221 = vunpack.c.h.b16 %v707
        %v1222 = vunpack.c.l.b16 %v708
        %v1223 = vunpack.c.h.b16 %v708
        %v1224 = vunpack.c.l.b16 %v709
        %v1225 = vunpack.c.h.b16 %v709
        %v1226 = vunpack.c.l.b16 %v710
        %v1227 = vunpack.c.h.b16 %v710
        %v1228 = vunpack.c.l.b16 %v711
        %v1229 = vunpack.c.h.b16 %v711
        %v1230 = vunpack.c.l.b16 %v712
        %v1231 = vunpack.c.h.b16 %v712
        %v1232 = vunpack.c.l.b16 %v713
        %v1233 = vunpack.c.h.b16 %v713
        %v1234 = vunpack.c.l.b16 %v714
        %v1235 = vunpack.c.h.b16 %v714
        %v1236 = vunpack.c.l.b16 %v715
        %v1237 = vunpack.c.h.b16 %v715
        %v1238 = vunpack.c.l.b16 %v716
        %v1239 = vunpack.c.h.b16 %v716
        %v1240 = vunpack.c.l.b16 %v717
        %v1241 = vunpack.c.h.b16 %v717
        %v1242 = vunpack.c.l.b16 %v718
        %v1243 = vunpack.c.h.b16 %v718
        %v1244 = vunpack.c.l.b16 %v719
        %v1245 = vunpack.c.h.b16 %v719
        %v1246 = vunpack.c.l.b16 %v720
        %v1247 = vunpack.c.h.b16 %v720
        %v1248 = vunpack.c.l.b16 %v721
        %v1249 = vunpack.c.h.b16 %v721
        %v1250 = vunpack.c.l.b16 %v722
        %v1251 = vunpack.c.h.b16 %v722
        %v1252 = vunpack.c.l.b16 %v723
        %v1253 = vunpack.c.h.b16 %v723
        %v1254 = vunpack.c.l.b16 %v724
        %v1255 = vunpack.c.h.b16 %v724
        %v1256 = vunpack.c.l.b16 %v725
        %v1257 = vunpack.c.h.b16 %v725
        %v1258 = vunpack.c.l.b16 %v726
        %v1259 = vunpack.c.h.b16 %v726
        %v1260 = vunpack.c.l.b16 %v727
        %v1261 = vunpack.c.h.b16 %v727
        %v1262 = vunpack.c.l.b16 %v728
        %v1263 = vunpack.c.h.b16 %v728
        %v1264 = vunpack.c.l.b16 %v729
        %v1265 = vunpack.c.h.b16 %v729
        %v1266 = vunpack.c.l.b16 %v730
        %v1267 = vunpack.c.h.b16 %v730
        %v1268 = vunpack.c.l.b16 %v731
        %v1269 = vunpack.c.h.b16 %v731
        %v1270 = vunpack.c.l.b16 %v732
        %v1271 = vunpack.c.h.b16 %v732
        %v1272 = vunpack.c.l.b16 %v733
        %v1273 = vunpack.c.h.b16 %v733
        %v1274 = vunpack.c.l.b16 %v734
        %v1275 = vunpack.c.h.b16 %v734
        %v1276 = vunpack.c.l.b16 %v735
        %v1277 = vunpack.c.h.b16 %v735
        %v1278 = vunpack.c.l.b16 %v736
        %v1279 = vunpack.c.h.b16 %v736
        %v1280 = vunpack.c.l.b16 %v737
        %v1281 = vunpack.c.h.b16 %v737
        %v1282 = vunpack.c.l.b16 %v738
        %v1283 = vunpack.c.h.b16 %v738
        %v1284 = vunpack.c.l.b16 %v739
        %v1285 = vunpack.c.h.b16 %v739
        %v1286 = vunpack.c.l.b16 %v740
        %v1287 = vunpack.c.h.b16 %v740
        %v1288 = vunpack.c.l.b16 %v741
        %v1289 = vunpack.c.h.b16 %v741
        %v1290 = vunpack.c.l.b16 %v742
        %v1291 = vunpack.c.h.b16 %v742
        %v1292 = vunpack.c.l.b16 %v743
        %v1293 = vunpack.c.h.b16 %v743
        %v1294 = vunpack.c.l.b16 %v744
        %v1295 = vunpack.c.h.b16 %v744
        %v1296 = vunpack.c.l.b16 %v745
        %v1297 = vunpack.c.h.b16 %v745
        %v1298 = vunpack.c.l.b16 %v746
        %v1299 = vunpack.c.h.b16 %v746
        %v1300 = vunpack.c.l.b16 %v747
        %v1301 = vunpack.c.h.b16 %v747
        %v1302 = vunpack.c.l.b16 %v748
        %v1303 = vunpack.c.h.b16 %v748
        %v1304 = vunpack.c.l.b16 %v749
        %v1305 = vunpack.c.h.b16 %v749
        %v1306 = vunpack.c.l.b16 %v750
        %v1307 = vunpack.c.h.b16 %v750
        %v1308 = vunpack.c.l.b16 %v751
        %v1309 = vunpack.c.h.b16 %v751
        %v1310 = vunpack.c.l.b16 %v752
        %v1311 = vunpack.c.h.b16 %v752
        %v1312 = vunpack.c.l.b16 %v753
        %v1313 = vunpack.c.h.b16 %v753
        %v1314 = vunpack.c.l.b16 %v754
        %v1315 = vunpack.c.h.b16 %v754
        %v1316 = vunpack.c.l.b16 %v755
        %v1317 = vunpack.c.h.b16 %v755
        %v1318 = vunpack.c.l.b16 %v756
        %v1319 = vunpack.c.h.b16 %v756
        %v1320 = vunpack.c.l.b16 %v757
        %v1321 = vunpack.c.h.b16 %v757
        %v1322 = vunpack.c.l.b16 %v758
        %v1323 = vunpack.c.h.b16 %v758
        %v1324 = vunpack.c.l.b16 %v759
        %v1325 = vunpack.c.h.b16 %v759
        %v1326 = vunpack.c.l.b16 %v760
        %v1327 = vunpack.c.h.b16 %v760
        %v1328 = vunpack.c.l.b16 %v761
        %v1329 = vunpack.c.h.b16 %v761
        %v1330 = vunpack.c.l.b16 %v762
        %v1331 = vunpack.c.h.b16 %v762
        %v1332 = vunpack.c.l.b16 %v763
        %v1333 = vunpack.c.h.b16 %v763
        %v1334 = vunpack.c.l.b16 %v764
        %v1335 = vunpack.c.h.b16 %v764
        %v1336 = vunpack.c.l.b16 %v765
        %v1337 = vunpack.c.h.b16 %v765
        %v1338 = vunpack.c.l.b16 %v766
        %v1339 = vunpack.c.h.b16 %v766
        %v1340 = vunpack.c.l.b16 %v767
        %v1341 = vunpack.c.h.b16 %v767
        %v1342 = vunpack.c.l.b16 %v768
        %v1343 = vunpack.c.h.b16 %v768
        %v1344 = vunpack.c.l.b16 %v769
        %v1345 = vunpack.c.h.b16 %v769
        %v1346 = vunpack.c.l.b16 %v770
        %v1347 = vunpack.c.h.b16 %v770
        %v1348 = vunpack.c.l.b16 %v771
        %v1349 = vunpack.c.h.b16 %v771
        %v1350 = vunpack.c.l.b16 %v772
        %v1351 = vunpack.c.h.b16 %v772
        %v1352 = vunpack.c.l.b16 %v773
        %v1353 = vunpack.c.h.b16 %v773
        %v1354 = vunpack.c.l.b16 %v774
        %v1355 = vunpack.c.h.b16 %v774
        %v1356 = vunpack.c.l.b16 %v775
        %v1357 = vunpack.c.h.b16 %v775
        %v1358 = vunpack.c.l.b16 %v776
        %v1359 = vunpack.c.h.b16 %v776
        %v1360 = vunpack.c.l.b16 %v777
        %v1361 = vunpack.c.h.b16 %v777
        %v1362 = vunpack.c.l.b16 %v778
        %v1363 = vunpack.c.h.b16 %v778
        %v1364 = vunpack.c.l.b16 %v779
        %v1365 = vunpack.c.h.b16 %v779
        %v1366 = vunpack.c.l.b16 %v780
        %v1367 = vunpack.c.h.b16 %v780
        %v1368 = vunpack.c.l.b16 %v781
        %v1369 = vunpack.c.h.b16 %v781
        %v1370 = vunpack.c.l.b16 %v782
        %v1371 = vunpack.c.h.b16 %v782
        %v1372 = vunpack.c.l.b16 %v783
        %v1373 = vunpack.c.h.b16 %v783
        %v1374 = vunpack.c.l.b16 %v784
        %v1375 = vunpack.c.h.b16 %v784
        %v1376 = vunpack.c.l.b16 %v785
        %v1377 = vunpack.c.h.b16 %v785
        %v1378 = vunpack.c.l.b16 %v786
        %v1379 = vunpack.c.h.b16 %v786
        %v1380 = vunpack.c.l.b16 %v787
        %v1381 = vunpack.c.h.b16 %v787
        %v1382 = vunpack.c.l.b16 %v788
        %v1383 = vunpack.c.h.b16 %v788
        %v1384 = vunpack.c.l.b16 %v789
        %v1385 = vunpack.c.h.b16 %v789
        %v1386 = vunpack.c.l.b16 %v790
        %v1387 = vunpack.c.h.b16 %v790
        %v1388 = vunpack.c.l.b16 %v791
        %v1389 = vunpack.c.h.b16 %v791
        %v1390 = vunpack.c.l.b16 %v792
        %v1391 = vunpack.c.h.b16 %v792
        %v1392 = vunpack.c.l.b16 %v793
        %v1393 = vunpack.c.h.b16 %v793
        %v1394 = vunpack.c.l.b16 %v794
        %v1395 = vunpack.c.h.b16 %v794
        %v1396 = vunpack.c.l.b16 %v795
        %v1397 = vunpack.c.h.b16 %v795
        %v1398 = vunpack.c.l.b16 %v796
        %v1399 = vunpack.c.h.b16 %v796
        %v1400 = vunpack.c.l.b16 %v797
        %v1401 = vunpack.c.h.b16 %v797
        %v1402 = vunpack.c.l.b16 %v798
        %v1403 = vunpack.c.h.b16 %v798
        %v1404 = vunpack.c.l.b16 %v799
        %v1405 = vunpack.c.h.b16 %v799
        %v1406 = vunpack.c.l.b16 %v800
        %v1407 = vunpack.c.h.b16 %v800
        %v1408 = vunpack.c.l.b16 %v801
        %v1409 = vunpack.c.h.b16 %v801
        %v1410 = vunpack.c.l.b16 %v802
        %v1411 = vunpack.c.h.b16 %v802
        %v1412 = vunpack.c.l.b16 %v803
        %v1413 = vunpack.c.h.b16 %v803
        %v1414 = vunpack.c.l.b16 %v804
        %v1415 = vunpack.c.h.b16 %v804
        %v1416 = vunpack.c.l.b16 %v805
        %v1417 = vunpack.c.h.b16 %v805
        %v1418 = vunpack.c.l.b16 %v806
        %v1419 = vunpack.c.h.b16 %v806
        %v1420 = vunpack.c.l.b16 %v807
        %v1421 = vunpack.c.h.b16 %v807
        %v1422 = vunpack.c.l.b16 %v808
        %v1423 = vunpack.c.h.b16 %v808
        %v1424 = vunpack.c.l.b16 %v809
        %v1425 = vunpack.c.h.b16 %v809
        %v1426 = vunpack.c.l.b16 %v810
        %v1427 = vunpack.c.h.b16 %v810
        %v1428 = vunpack.c.l.b16 %v811
        %v1429 = vunpack.c.h.b16 %v811
        %v1430 = vunpack.c.l.b16 %v812
        %v1431 = vunpack.c.h.b16 %v812
        %v1432 = vunpack.c.l.b16 %v813
        %v1433 = vunpack.c.h.b16 %v813
        %v1434 = vunpack.c.l.b16 %v814
        %v1435 = vunpack.c.h.b16 %v814
        %v1436 = vunpack.c.l.b16 %v815
        %v1437 = vunpack.c.h.b16 %v815
        %v1438 = vunpack.c.l.b16 %v816
        %v1439 = vunpack.c.h.b16 %v816
        %v1440 = vunpack.c.l.b16 %v817
        %v1441 = vunpack.c.h.b16 %v817
        %v1442 = vunpack.c.l.b16 %v818
        %v1443 = vunpack.c.h.b16 %v818
        %v1444 = vunpack.c.l.b16 %v819
        %v1445 = vunpack.c.h.b16 %v819
        %v1446 = vunpack.c.l.b16 %v820
        %v1447 = vunpack.c.h.b16 %v820
        %v1448 = vunpack.c.l.b16 %v821
        %v1449 = vunpack.c.h.b16 %v821
        %v1450 = vunpack.c.l.b16 %v822
        %v1451 = vunpack.c.h.b16 %v822
        %v1452 = vunpack.c.l.b16 %v823
        %v1453 = vunpack.c.h.b16 %v823
        %v1454 = vunpack.c.l.b16 %v824
        %v1455 = vunpack.c.h.b16 %v824
        %v1456 = vunpack.c.l.b16 %v825
        %v1457 = vunpack.c.h.b16 %v825
        %v1458 = vunpack.c.l.b16 %v826
        %v1459 = vunpack.c.h.b16 %v826
        %v1460 = vunpack.c.l.b16 %v827
        %v1461 = vunpack.c.h.b16 %v827
        %v1462 = vunpack.c.l.b16 %v828
        %v1463 = vunpack.c.h.b16 %v828
        %v1464 = vunpack.c.l.b16 %v829
        %v1465 = vunpack.c.h.b16 %v829
        %v1466 = vunpack.c.l.b16 %v830
        %v1467 = vunpack.c.h.b16 %v830
        %v1468 = vunpack.c.l.b16 %v831
        %v1469 = vunpack.c.h.b16 %v831
        %v1470 = vunpack.c.l.b16 %v832
        %v1471 = vunpack.c.h.b16 %v832
        %v1472 = vunpack.c.l.b16 %v833
        %v1473 = vunpack.c.h.b16 %v833
        %v1474 = vunpack.c.l.b16 %v834
        %v1475 = vunpack.c.h.b16 %v834
        %v1476 = vunpack.c.l.b16 %v835
        %v1477 = vunpack.c.h.b16 %v835
        %v1478 = vunpack.c.l.b16 %v836
        %v1479 = vunpack.c.h.b16 %v836
        %v1480 = vunpack.c.l.b16 %v837
        %v1481 = vunpack.c.h.b16 %v837
        %v1482 = vunpack.c.l.b16 %v838
        %v1483 = vunpack.c.h.b16 %v838
        %v1484 = vunpack.c.l.b16 %v839
        %v1485 = vunpack.c.h.b16 %v839
        %v1486 = vunpack.c.l.b16 %v840
        %v1487 = vunpack.c.h.b16 %v840
        %v1488 = vunpack.c.l.b16 %v841
        %v1489 = vunpack.c.h.b16 %v841
        %v1490 = vunpack.c.l.b16 %v842
        %v1491 = vunpack.c.h.b16 %v842
        %v1492 = vunpack.c.l.b16 %v843
        %v1493 = vunpack.c.h.b16 %v843
        %v1494 = vunpack.c.l.b16 %v844
        %v1495 = vunpack.c.h.b16 %v844
        %v1496 = vunpack.c.l.b16 %v845
        %v1497 = vunpack.c.h.b16 %v845
        %v1498 = vunpack.c.l.b16 %v846
        %v1499 = vunpack.c.h.b16 %v846
        %v1500 = vunpack.c.l.b16 %v847
        %v1501 = vunpack.c.h.b16 %v847
        %v1502 = vunpack.c.l.b16 %v848
        %v1503 = vunpack.c.h.b16 %v848
        %v1504 = vunpack.c.l.b16 %v849
        %v1505 = vunpack.c.h.b16 %v849
        %v1506 = vunpack.c.l.b16 %v850
        %v1507 = vunpack.c.h.b16 %v850
        %v1508 = vunpack.c.l.b16 %v851
        %v1509 = vunpack.c.h.b16 %v851
        %v1510 = vunpack.c.l.b16 %v852
        %v1511 = vunpack.c.h.b16 %v852
        %v1512 = vunpack.c.l.b16 %v853
        %v1513 = vunpack.c.h.b16 %v853
        %v1514 = vunpack.c.l.b16 %v854
        %v1515 = vunpack.c.h.b16 %v854
        %v1516 = vunpack.c.l.b16 %v855
        %v1517 = vunpack.c.h.b16 %v855
        %v1518 = vunpack.c.l.b16 %v856
        %v1519 = vunpack.c.h.b16 %v856
        %v1520 = vunpack.c.l.b16 %v857
        %v1521 = vunpack.c.h.b16 %v857
        %v1522 = vunpack.c.l.b16 %v858
        %v1523 = vunpack.c.h.b16 %v858
        %v1524 = vunpack.c.l.b16 %v859
        %v1525 = vunpack.c.h.b16 %v859
        %v1526 = vunpack.c.l.b16 %v860
        %v1527 = vunpack.c.h.b16 %v860
        %v1528 = vunpack.c.l.b16 %v861
        %v1529 = vunpack.c.h.b16 %v861
        %v1530 = vunpack.c.l.b16 %v862
        %v1531 = vunpack.c.h.b16 %v862
        %v1532 = vunpack.c.l.b16 %v863
        %v1533 = vunpack.c.h.b16 %v863
        %v1534 = vunpack.c.l.b16 %v864
        %v1535 = vunpack.c.h.b16 %v864
        %v1536 = vunpack.c.l.b16 %v865
        %v1537 = vunpack.c.h.b16 %v865
        %v1538 = vunpack.c.l.b16 %v866
        %v1539 = vunpack.c.h.b16 %v866
        %v1540 = vunpack.c.l.b16 %v867
        %v1541 = vunpack.c.h.b16 %v867
        %v1542 = vunpack.c.l.b16 %v868
        %v1543 = vunpack.c.h.b16 %v868
        %v1544 = vunpack.c.l.b16 %v869
        %v1545 = vunpack.c.h.b16 %v869
        %v1546 = vunpack.c.l.b16 %v870
        %v1547 = vunpack.c.h.b16 %v870
        %v1548 = vunpack.c.l.b16 %v871
        %v1549 = vunpack.c.h.b16 %v871
        %v1550 = vunpack.c.l.b16 %v872
        %v1551 = vunpack.c.h.b16 %v872
        %v1552 = vunpack.c.l.b16 %v873
        %v1553 = vunpack.c.h.b16 %v873
        %v1554 = vunpack.c.l.b16 %v874
        %v1555 = vunpack.c.h.b16 %v874
        %v1556 = vunpack.c.l.b16 %v875
        %v1557 = vunpack.c.h.b16 %v875
        %v1558 = vunpack.c.l.b16 %v876
        %v1559 = vunpack.c.h.b16 %v876
        %v1560 = vunpack.c.l.b16 %v877
        %v1561 = vunpack.c.h.b16 %v877
        %v1562 = vunpack.c.l.b16 %v878
        %v1563 = vunpack.c.h.b16 %v878
        %v1564 = vunpack.c.l.b16 %v879
        %v1565 = vunpack.c.h.b16 %v879
        %v1566 = vunpack.c.l.b16 %v880
        %v1567 = vunpack.c.h.b16 %v880
        %v1568 = vunpack.c.l.b16 %v881
        %v1569 = vunpack.c.h.b16 %v881
        %v1570 = vunpack.c.l.b16 %v882
        %v1571 = vunpack.c.h.b16 %v882
        %v1572 = vunpack.c.l.b16 %v883
        %v1573 = vunpack.c.h.b16 %v883
        %v1574 = vunpack.c.l.b16 %v884
        %v1575 = vunpack.c.h.b16 %v884
        %v1576 = vunpack.c.l.b16 %v885
        %v1577 = vunpack.c.h.b16 %v885
        %v1578 = vunpack.c.l.b16 %v886
        %v1579 = vunpack.c.h.b16 %v886
        %v1580 = vunpack.c.l.b16 %v887
        %v1581 = vunpack.c.h.b16 %v887
        %v1582 = vunpack.c.l.b16 %v888
        %v1583 = vunpack.c.h.b16 %v888
        %v1584 = vunpack.c.l.b16 %v889
        %v1585 = vunpack.c.h.b16 %v889
        %v1586 = vunpack.c.l.b16 %v890
        %v1587 = vunpack.c.h.b16 %v890
        %v1588 = vunpack.c.l.b16 %v891
        %v1589 = vunpack.c.h.b16 %v891
        %v1590 = vunpack.c.l.b16 %v892
        %v1591 = vunpack.c.h.b16 %v892
        %v1592 = vunpack.c.l.b16 %v893
        %v1593 = vunpack.c.h.b16 %v893
        %v1594 = vunpack.c.l.b16 %v894
        %v1595 = vunpack.c.h.b16 %v894
        %v1596 = vunpack.c.l.b16 %v895
        %v1597 = vunpack.c.h.b16 %v895
        %v1598 = vpack.c.b16 %v1238, %v1214
        %v1599 = vpack.c.b16 %v1239, %v1215
        %v1600 = vpack.c.b16 %v1240, %v1216
        %v1601 = vpack.c.b16 %v1241, %v1217
        %v1602 = vpack.c.b16 %v1242, %v1218
        %v1603 = vpack.c.b16 %v1243, %v1219
        %v1604 = vpack.c.b16 %v1244, %v1220
        %v1605 = vpack.c.b16 %v1245, %v1221
        %v1606 = vpack.c.b16 %v1246, %v1222
        %v1607 = vpack.c.b16 %v1247, %v1223
        %v1608 = vpack.c.b16 %v1248, %v1224
        %v1609 = vpack.c.b16 %v1249, %v1225
        %v1610 = vpack.c.b16 %v1250, %v1226
        %v1611 = vpack.c.b16 %v1251, %v1227
        %v1612 = vpack.c.b16 %v1252, %v1228
        %v1613 = vpack.c.b16 %v1253, %v1229
        %v1614 = vpack.c.b16 %v1254, %v1230
        %v1615 = vpack.c.b16 %v1255, %v1231
        %v1616 = vpack.c.b16 %v1256, %v1232
        %v1617 = vpack.c.b16 %v1257, %v1233
        %v1618 = vpack.c.b16 %v1258, %v1234
        %v1619 = vpack.c.b16 %v1259, %v1235
        %v1620 = vpack.c.b16 %v1260, %v1236
        %v1621 = vpack.c.b16 %v1261, %v1237
        %v1622 = vpack.c.b16 %v1286, %v1262
        %v1623 = vpack.c.b16 %v1287, %v1263
        %v1624 = vpack.c.b16 %v1288, %v1264
        %v1625 = vpack.c.b16 %v1289, %v1265
        %v1626 = vpack.c.b16 %v1290, %v1266
        %v1627 = vpack.c.b16 %v1291, %v1267
        %v1628 = vpack.c.b16 %v1292, %v1268
        %v1629 = vpack.c.b16 %v1293, %v1269
        %v1630 = vpack.c.b16 %v1294, %v1270
        %v1631 = vpack.c.b16 %v1295, %v1271
        %v1632 = vpack.c.b16 %v1296, %v1272
        %v1633 = vpack.c.b16 %v1297, %v1273
        %v1634 = vpack.c.b16 %v1298, %v1274
        %v1635 = vpack.c.b16 %v1299, %v1275
        %v1636 = vpack.c.b16 %v1300, %v1276
        %v1637 = vpack.c.b16 %v1301, %v1277
        %v1638 = vpack.c.b16 %v1302, %v1278
        %v1639 = vpack.c.b16 %v1303, %v1279
        %v1640 = vpack.c.b16 %v1304, %v1280
        %v1641 = vpack.c.b16 %v1305, %v1281
        %v1642 = vpack.c.b16 %v1306, %v1282
        %v1643 = vpack.c.b16 %v1307, %v1283
        %v1644 = vpack.c.b16 %v1308, %v1284
        %v1645 = vpack.c.b16 %v1309, %v1285
        %v1646 = vpack.c.b16 %v1334, %v1310
        %v1647 = vpack.c.b16 %v1335, %v1311
        %v1648 = vpack.c.b16 %v1336, %v1312
        %v1649 = vpack.c.b16 %v1337, %v1313
        %v1650 = vpack.c.b16 %v1338, %v1314
        %v1651 = vpack.c.b16 %v1339, %v1315
        %v1652 = vpack.c.b16 %v1340, %v1316
        %v1653 = vpack.c.b16 %v1341, %v1317
        %v1654 = vpack.c.b16 %v1342, %v1318
        %v1655 = vpack.c.b16 %v1343, %v1319
        %v1656 = vpack.c.b16 %v1344, %v1320
        %v1657 = vpack.c.b16 %v1345, %v1321
        %v1658 = vpack.c.b16 %v1346, %v1322
        %v1659 = vpack.c.b16 %v1347, %v1323
        %v1660 = vpack.c.b16 %v1348, %v1324
        %v1661 = vpack.c.b16 %v1349, %v1325
        %v1662 = vpack.c.b16 %v1350, %v1326
        %v1663 = vpack.c.b16 %v1351, %v1327
        %v1664 = vpack.c.b16 %v1352, %v1328
        %v1665 = vpack.c.b16 %v1353, %v1329
        %v1666 = vpack.c.b16 %v1354, %v1330
        %v1667 = vpack.c.b16 %v1355, %v1331
        %v1668 = vpack.c.b16 %v1356, %v1332
        %v1669 = vpack.c.b16 %v1357, %v1333
        %v1670 = vpack.c.b16 %v1382, %v1358
        %v1671 = vpack.c.b16 %v1383, %v1359
        %v1672 = vpack.c.b16 %v1384, %v1360
        %v1673 = vpack.c.b16 %v1385, %v1361
        %v1674 = vpack.c.b16 %v1386, %v1362
        %v1675 = vpack.c.b16 %v1387, %v1363
        %v1676 = vpack.c.b16 %v1388, %v1364
        %v1677 = vpack.c.b16 %v1389, %v1365
        %v1678 = vpack.c.b16 %v1390, %v1366
        %v1679 = vpack.c.b16 %v1391, %v1367
        %v1680 = vpack.c.b16 %v1392, %v1368
        %v1681 = vpack.c.b16 %v1393, %v1369
        %v1682 = vpack.c.b16 %v1394, %v1370
        %v1683 = vpack.c.b16 %v1395, %v1371
        %v1684 = vpack.c.b16 %v1396, %v1372
        %v1685 = vpack.c.b16 %v1397, %v1373
        %v1686 = vpack.c.b16 %v1398, %v1374
        %v1687 = vpack.c.b16 %v1399, %v1375
        %v1688 = vpack.c.b16 %v1400, %v1376
        %v1689 = vpack.c.b16 %v1401, %v1377
        %v1690 = vpack.c.b16 %v1402, %v1378
        %v1691 = vpack.c.b16 %v1403, %v1379
        %v1692 = vpack.c.b16 %v1404, %v1380
        %v1693 = vpack.c.b16 %v1405, %v1381
        %v1694 = vpack.c.b16 %v1430, %v1406
        %v1695 = vpack.c.b16 %v1431, %v1407
        %v1696 = vpack.c.b16 %v1432, %v1408
        %v1697 = vpack.c.b16 %v1433, %v1409
        %v1698 = vpack.c.b16 %v1434, %v1410
        %v1699 = vpack.c.b16 %v1435, %v1411
        %v1700 = vpack.c.b16 %v1436, %v1412
        %v1701 = vpack.c.b16 %v1437, %v1413
        %v1702 = vpack.c.b16 %v1438, %v1414
        %v1703 = vpack.c.b16 %v1439, %v1415
        %v1704 = vpack.c.b16 %v1440, %v1416
        %v1705 = vpack.c.b16 %v1441, %v1417
        %v1706 = vpack.c.b16 %v1442, %v1418
        %v1707 = vpack.c.b16 %v1443, %v1419
        %v1708 = vpack.c.b16 %v1444, %v1420
        %v1709 = vpack.c.b16 %v1445, %v1421
        %v1710 = vpack.c.b16 %v1446, %v1422
        %v1711 = vpack.c.b16 %v1447, %v1423
        %v1712 = vpack.c.b16 %v1448, %v1424
        %v1713 = vpack.c.b16 %v1449, %v1425
        %v1714 = vpack.c.b16 %v1450, %v1426
        %v1715 = vpack.c.b16 %v1451, %v1427
        %v1716 = vpack.c.b16 %v1452, %v1428
        %v1717 = vpack.c.b16 %v1453, %v1429
        %v1718 = vpack.c.b16 %v1478, %v1454
        %v1719 = vpack.c.b16 %v1479, %v1455
        %v1720 = vpack.c.b16 %v1480, %v1456
        %v1721 = vpack.c.b16 %v1481, %v1457
        %v1722 = vpack.c.b16 %v1482, %v1458
        %v1723 = vpack.c.b16 %v1483, %v1459
        %v1724 = vpack.c.b16 %v1484, %v1460
        %v1725 = vpack.c.b16 %v1485, %v1461
        %v1726 = vpack.c.b16 %v1486, %v1462
        %v1727 = vpack.c.b16 %v1487, %v1463
        %v1728 = vpack.c.b16 %v1488, %v1464
        %v1729 = vpack.c.b16 %v1489, %v1465
        %v1730 = vpack.c.b16 %v1490, %v1466
        %v1731 = vpack.c.b16 %v1491, %v1467
        %v1732 = vpack.c.b16 %v1492, %v1468
        %v1733 = vpack.c.b16 %v1493, %v1469
        %v1734 = vpack.c.b16 %v1494, %v1470
        %v1735 = vpack.c.b16 %v1495, %v1471
        %v1736 = vpack.c.b16 %v1496, %v1472
        %v1737 = vpack.c.b16 %v1497, %v1473
        %v1738 = vpack.c.b16 %v1498, %v1474
        %v1739 = vpack.c.b16 %v1499, %v1475
        %v1740 = vpack.c.b16 %v1500, %v1476
        %v1741 = vpack.c.b16 %v1501, %v1477
        %v1742 = vpack.c.b16 %v1526, %v1502
        %v1743 = vpack.c.b16 %v1527, %v1503
        %v1744 = vpack.c.b16 %v1528, %v1504
        %v1745 = vpack.c.b16 %v1529, %v1505
        %v1746 = vpack.c.b16 %v1530, %v1506
        %v1747 = vpack.c.b16 %v1531, %v1507
        %v1748 = vpack.c.b16 %v1532, %v1508
        %v1749 = vpack.c.b16 %v1533, %v1509
        %v1750 = vpack.c.b16 %v1534, %v1510
        %v1751 = vpack.c.b16 %v1535, %v1511
        %v1752 = vpack.c.b16 %v1536, %v1512
        %v1753 = vpack.c.b16 %v1537, %v1513
        %v1754 = vpack.c.b16 %v1538, %v1514
        %v1755 = vpack.c.b16 %v1539, %v1515
        %v1756 = vpack.c.b16 %v1540, %v1516
        %v1757 = vpack.c.b16 %v1541, %v1517
        %v1758 = vpack.c.b16 %v1542, %v1518
        %v1759 = vpack.c.b16 %v1543, %v1519
        %v1760 = vpack.c.b16 %v1544, %v1520
        %v1761 = vpack.c.b16 %v1545, %v1521
        %v1762 = vpack.c.b16 %v1546, %v1522
        %v1763 = vpack.c.b16 %v1547, %v1523
        %v1764 = vpack.c.b16 %v1548, %v1524
        %v1765 = vpack.c.b16 %v1549, %v1525
        %v1766 = vpack.c.b16 %v1574, %v1550
        %v1767 = vpack.c.b16 %v1575, %v1551
        %v1768 = vpack.c.b16 %v1576, %v1552
        %v1769 = vpack.c.b16 %v1577, %v1553
        %v1770 = vpack.c.b16 %v1578, %v1554
        %v1771 = vpack.c.b16 %v1579, %v1555
        %v1772 = vpack.c.b16 %v1580, %v1556
        %v1773 = vpack.c.b16 %v1581, %v1557
        %v1774 = vpack.c.b16 %v1582, %v1558
        %v1775 = vpack.c.b16 %v1583, %v1559
        %v1776 = vpack.c.b16 %v1584, %v1560
        %v1777 = vpack.c.b16 %v1585, %v1561
        %v1778 = vpack.c.b16 %v1586, %v1562
        %v1779 = vpack.c.b16 %v1587, %v1563
        %v1780 = vpack.c.b16 %v1588, %v1564
        %v1781 = vpack.c.b16 %v1589, %v1565
        %v1782 = vpack.c.b16 %v1590, %v1566
        %v1783 = vpack.c.b16 %v1591, %v1567
        %v1784 = vpack.c.b16 %v1592, %v1568
        %v1785 = vpack.c.b16 %v1593, %v1569
        %v1786 = vpack.c.b16 %v1594, %v1570
        %v1787 = vpack.c.b16 %v1595, %v1571
        %v1788 = vpack.c.b16 %v1596, %v1572
        %v1789 = vpack.c.b16 %v1597, %v1573
        %1982 = vmatprep.subr.bf16.mxu0 %v1599
        %1983 = vmatpush1.bf16.msra.mxu0 %v1598
        %1984 = vmatprep.subr.bf16.mxu0 %v1623
        %1985 = vmatpush1.bf16.msra.mxu0 %v1622
        %1986 = vmatprep.subr.bf16.mxu0 %v1647
        %1987 = vmatpush1.bf16.msra.mxu0 %v1646
        %1988 = vmatprep.subr.bf16.mxu0 %v1671
        %1989 = vmatpush1.bf16.msra.mxu0 %v1670
        %1990 = vmatprep.subr.bf16.mxu0 %v1695
        %1991 = vmatpush1.bf16.msra.mxu0 %v1694
        %1992 = vmatprep.subr.bf16.mxu0 %v1719
        %1993 = vmatpush1.bf16.msra.mxu0 %v1718
        %1994 = vmatprep.subr.bf16.mxu0 %v1743
        %1995 = vmatpush1.bf16.msra.mxu0 %v1742
        %1996 = vmatprep.subr.bf16.mxu0 %v1767
        %1997 = vmatpush1.bf16.msra.mxu0 %v1766
        %1998 = vmatprep.subr.bf16.mxu0 0
        %1999 = vmatpush1.bf16.msra.mxu0 0
        %2000 = vmatprep.subr.bf16.mxu0 0
        %2001 = vmatpush1.bf16.msra.mxu0 0
        %2002 = vmatprep.subr.bf16.mxu0 0
        %2003 = vmatpush1.bf16.msra.mxu0 0
        %2004 = vmatprep.subr.bf16.mxu0 0
        %2005 = vmatpush1.bf16.msra.mxu0 0
        %2006 = vmatprep.subr.bf16.mxu0 0
        %2007 = vmatpush1.bf16.msra.mxu0 0
        %2008 = vmatprep.subr.bf16.mxu0 0
        %2009 = vmatpush1.bf16.msra.mxu0 0
        %2010 = vmatprep.subr.bf16.mxu0 0
        %2011 = vmatpush1.bf16.msra.mxu0 0
        %2012 = vmatprep.subr.bf16.mxu0 0
        %2013 = vmatpush1.bf16.msra.mxu0 0
        %2014 = vmatprep.mubr.bf16.mxu0 0
        %2015 = vmatmul.mubr.bf16.gmra.mrb[0].mxu0 %v703
        %v2016 = vpop.f32.mrb[0].mxu0
        %v2017 = vadd.f32 %v905, %v2016
        %v2018 = vpop.f32.mrb[0].mxu0
        %v2019 = vadd.f32 %v909, %v2018
        %v2020 = vpop.f32.mrb[0].mxu0
        %v2021 = vadd.f32 %v905, %v2020
        %v2022 = vpop.f32.mrb[0].mxu0
        %v2023 = vadd.f32 %v909, %v2022
        %2024 = vdwg.mxu0
        %2025 = vmatprep.subr.bf16.mxu0 %v1601
        %2026 = vmatpush1.bf16.msra.mxu0 %v1600
        %2027 = vmatprep.subr.bf16.mxu0 %v1625
        %2028 = vmatpush1.bf16.msra.mxu0 %v1624
        %2029 = vmatprep.subr.bf16.mxu0 %v1649
        %2030 = vmatpush1.bf16.msra.mxu0 %v1648
        %2031 = vmatprep.subr.bf16.mxu0 %v1673
        %2032 = vmatpush1.bf16.msra.mxu0 %v1672
        %2033 = vmatprep.subr.bf16.mxu0 %v1697
        %2034 = vmatpush1.bf16.msra.mxu0 %v1696
        %2035 = vmatprep.subr.bf16.mxu0 %v1721
        %2036 = vmatpush1.bf16.msra.mxu0 %v1720
        %2037 = vmatprep.subr.bf16.mxu0 %v1745
        %2038 = vmatpush1.bf16.msra.mxu0 %v1744
        %2039 = vmatprep.subr.bf16.mxu0 %v1769
        %2040 = vmatpush1.bf16.msra.mxu0 %v1768
        %2041 = vmatprep.subr.bf16.mxu0 0
        %2042 = vmatpush1.bf16.msra.mxu0 0
        %2043 = vmatprep.subr.bf16.mxu0 0
        %2044 = vmatpush1.bf16.msra.mxu0 0
        %2045 = vmatprep.subr.bf16.mxu0 0
        %2046 = vmatpush1.bf16.msra.mxu0 0
        %2047 = vmatprep.subr.bf16.mxu0 0
        %2048 = vmatpush1.bf16.msra.mxu0 0
        %2049 = vmatprep.subr.bf16.mxu0 0
        %2050 = vmatpush1.bf16.msra.mxu0 0
        %2051 = vmatprep.subr.bf16.mxu0 0
        %2052 = vmatpush1.bf16.msra.mxu0 0
        %2053 = vmatprep.subr.bf16.mxu0 0
        %2054 = vmatpush1.bf16.msra.mxu0 0
        %2055 = vmatprep.subr.bf16.mxu0 0
        %2056 = vmatpush1.bf16.msra.mxu0 0
        %2057 = vmatprep.mubr.bf16.mxu0 0
        %2058 = vmatmul.mubr.bf16.gmra.mrb[0].mxu0 %v703
        %v2059 = vpop.f32.mrb[0].mxu0
        %v2060 = vadd.f32 %v913, %v2059
        %v2061 = vpop.f32.mrb[0].mxu0
        %v2062 = vadd.f32 %v917, %v2061
        %v2063 = vpop.f32.mrb[0].mxu0
        %v2064 = vadd.f32 %v913, %v2063
        %v2065 = vpop.f32.mrb[0].mxu0
        %v2066 = vadd.f32 %v917, %v2065
        %2067 = vdwg.mxu0
        %2068 = vmatprep.subr.bf16.mxu0 %v1603
        %2069 = vmatpush1.bf16.msra.mxu0 %v1602
        %2070 = vmatprep.subr.bf16.mxu0 %v1627
        %2071 = vmatpush1.bf16.msra.mxu0 %v1626
        %2072 = vmatprep.subr.bf16.mxu0 %v1651
        %2073 = vmatpush1.bf16.msra.mxu0 %v1650
        %2074 = vmatprep.subr.bf16.mxu0 %v1675
        %2075 = vmatpush1.bf16.msra.mxu0 %v1674
        %2076 = vmatprep.subr.bf16.mxu0 %v1699
        %2077 = vmatpush1.bf16.msra.mxu0 %v1698
        %2078 = vmatprep.subr.bf16.mxu0 %v1723
        %2079 = vmatpush1.bf16.msra.mxu0 %v1722
        %2080 = vmatprep.subr.bf16.mxu0 %v1747
        %2081 = vmatpush1.bf16.msra.mxu0 %v1746
        %2082 = vmatprep.subr.bf16.mxu0 %v1771
        %2083 = vmatpush1.bf16.msra.mxu0 %v1770
        %2084 = vmatprep.subr.bf16.mxu0 0
        %2085 = vmatpush1.bf16.msra.mxu0 0
        %2086 = vmatprep.subr.bf16.mxu0 0
        %2087 = vmatpush1.bf16.msra.mxu0 0
        %2088 = vmatprep.subr.bf16.mxu0 0
        %2089 = vmatpush1.bf16.msra.mxu0 0
        %2090 = vmatprep.subr.bf16.mxu0 0
        %2091 = vmatpush1.bf16.msra.mxu0 0
        %2092 = vmatprep.subr.bf16.mxu0 0
        %2093 = vmatpush1.bf16.msra.mxu0 0
        %2094 = vmatprep.subr.bf16.mxu0 0
        %2095 = vmatpush1.bf16.msra.mxu0 0
        %2096 = vmatprep.subr.bf16.mxu0 0
        %2097 = vmatpush1.bf16.msra.mxu0 0
        %2098 = vmatprep.subr.bf16.mxu0 0
        %2099 = vmatpush1.bf16.msra.mxu0 0
        %2100 = vmatprep.mubr.bf16.mxu0 0
        %2101 = vmatmul.mubr.bf16.gmra.mrb[0].mxu0 %v703
        %v2102 = vpop.f32.mrb[0].mxu0
        %v2103 = vadd.f32 %v921, %v2102
        %v2104 = vpop.f32.mrb[0].mxu0
        %v2105 = vadd.f32 %v925, %v2104
        %v2106 = vpop.f32.mrb[0].mxu0
        %v2107 = vadd.f32 %v921, %v2106
        %v2108 = vpop.f32.mrb[0].mxu0
        %v2109 = vadd.f32 %v925, %v2108
        %2110 = vdwg.mxu0
        %2111 = vmatprep.subr.bf16.mxu0 %v1605
        %2112 = vmatpush1.bf16.msra.mxu0 %v1604
        %2113 = vmatprep.subr.bf16.mxu0 %v1629
        %2114 = vmatpush1.bf16.msra.mxu0 %v1628
        %2115 = vmatprep.subr.bf16.mxu0 %v1653
        %2116 = vmatpush1.bf16.msra.mxu0 %v1652
        %2117 = vmatprep.subr.bf16.mxu0 %v1677
        %2118 = vmatpush1.bf16.msra.mxu0 %v1676
        %2119 = vmatprep.subr.bf16.mxu0 %v1701
        %2120 = vmatpush1.bf16.msra.mxu0 %v1700
        %2121 = vmatprep.subr.bf16.mxu0 %v1725
        %2122 = vmatpush1.bf16.msra.mxu0 %v1724
        %2123 = vmatprep.subr.bf16.mxu0 %v1749
        %2124 = vmatpush1.bf16.msra.mxu0 %v1748
        %2125 = vmatprep.subr.bf16.mxu0 %v1773
        %2126 = vmatpush1.bf16.msra.mxu0 %v1772
        %2127 = vmatprep.subr.bf16.mxu0 0
        %2128 = vmatpush1.bf16.msra.mxu0 0
        %2129 = vmatprep.subr.bf16.mxu0 0
        %2130 = vmatpush1.bf16.msra.mxu0 0
        %2131 = vmatprep.subr.bf16.mxu0 0
        %2132 = vmatpush1.bf16.msra.mxu0 0
        %2133 = vmatprep.subr.bf16.mxu0 0
        %2134 = vmatpush1.bf16.msra.mxu0 0
        %2135 = vmatprep.subr.bf16.mxu0 0
        %2136 = vmatpush1.bf16.msra.mxu0 0
        %2137 = vmatprep.subr.bf16.mxu0 0
        %2138 = vmatpush1.bf16.msra.mxu0 0
        %2139 = vmatprep.subr.bf16.mxu0 0
        %2140 = vmatpush1.bf16.msra.mxu0 0
        %2141 = vmatprep.subr.bf16.mxu0 0
        %2142 = vmatpush1.bf16.msra.mxu0 0
        %2143 = vmatprep.mubr.bf16.mxu0 0
        %2144 = vmatmul.mubr.bf16.gmra.mrb[0].mxu0 %v703
        %v2145 = vpop.f32.mrb[0].mxu0
        %v2146 = vadd.f32 %v929, %v2145
        %v2147 = vpop.f32.mrb[0].mxu0
        %v2148 = vadd.f32 %v933, %v2147
        %v2149 = vpop.f32.mrb[0].mxu0
        %v2150 = vadd.f32 %v929, %v2149
        %v2151 = vpop.f32.mrb[0].mxu0
        %v2152 = vadd.f32 %v933, %v2151
        %2153 = vdwg.mxu0
        %2154 = vmatprep.subr.bf16.mxu0 %v1607
        %2155 = vmatpush1.bf16.msra.mxu0 %v1606
        %2156 = vmatprep.subr.bf16.mxu0 %v1631
        %2157 = vmatpush1.bf16.msra.mxu0 %v1630
        %2158 = vmatprep.subr.bf16.mxu0 %v1655
        %2159 = vmatpush1.bf16.msra.mxu0 %v1654
        %2160 = vmatprep.subr.bf16.mxu0 %v1679
        %2161 = vmatpush1.bf16.msra.mxu0 %v1678
        %2162 = vmatprep.subr.bf16.mxu0 %v1703
        %2163 = vmatpush1.bf16.msra.mxu0 %v1702
        %2164 = vmatprep.subr.bf16.mxu0 %v1727
        %2165 = vmatpush1.bf16.msra.mxu0 %v1726
        %2166 = vmatprep.subr.bf16.mxu0 %v1751
        %2167 = vmatpush1.bf16.msra.mxu0 %v1750
        %2168 = vmatprep.subr.bf16.mxu0 %v1775
        %2169 = vmatpush1.bf16.msra.mxu0 %v1774
        %2170 = vmatprep.subr.bf16.mxu0 0
        %2171 = vmatpush1.bf16.msra.mxu0 0
        %2172 = vmatprep.subr.bf16.mxu0 0
        %2173 = vmatpush1.bf16.msra.mxu0 0
        %2174 = vmatprep.subr.bf16.mxu0 0
        %2175 = vmatpush1.bf16.msra.mxu0 0
        %2176 = vmatprep.subr.bf16.mxu0 0
        %2177 = vmatpush1.bf16.msra.mxu0 0
        %2178 = vmatprep.subr.bf16.mxu0 0
        %2179 = vmatpush1.bf16.msra.mxu0 0
        %2180 = vmatprep.subr.bf16.mxu0 0
        %2181 = vmatpush1.bf16.msra.mxu0 0
        %2182 = vmatprep.subr.bf16.mxu0 0
        %2183 = vmatpush1.bf16.msra.mxu0 0
        %2184 = vmatprep.subr.bf16.mxu0 0
        %2185 = vmatpush1.bf16.msra.mxu0 0
        %2186 = vmatprep.mubr.bf16.mxu0 0
        %2187 = vmatmul.mubr.bf16.gmra.mrb[0].mxu0 %v703
        %v2188 = vpop.f32.mrb[0].mxu0
        %v2189 = vadd.f32 %v937, %v2188
        %v2190 = vpop.f32.mrb[0].mxu0
        %v2191 = vadd.f32 %v941, %v2190
        %v2192 = vpop.f32.mrb[0].mxu0
        %v2193 = vadd.f32 %v937, %v2192
        %v2194 = vpop.f32.mrb[0].mxu0
        %v2195 = vadd.f32 %v941, %v2194
        %2196 = vdwg.mxu0
        %2197 = vmatprep.subr.bf16.mxu0 %v1609
        %2198 = vmatpush1.bf16.msra.mxu0 %v1608
        %2199 = vmatprep.subr.bf16.mxu0 %v1633
        %2200 = vmatpush1.bf16.msra.mxu0 %v1632
        %2201 = vmatprep.subr.bf16.mxu0 %v1657
        %2202 = vmatpush1.bf16.msra.mxu0 %v1656
        %2203 = vmatprep.subr.bf16.mxu0 %v1681
        %2204 = vmatpush1.bf16.msra.mxu0 %v1680
        %2205 = vmatprep.subr.bf16.mxu0 %v1705
        %2206 = vmatpush1.bf16.msra.mxu0 %v1704
        %2207 = vmatprep.subr.bf16.mxu0 %v1729
        %2208 = vmatpush1.bf16.msra.mxu0 %v1728
        %2209 = vmatprep.subr.bf16.mxu0 %v1753
        %2210 = vmatpush1.bf16.msra.mxu0 %v1752
        %2211 = vmatprep.subr.bf16.mxu0 %v1777
        %2212 = vmatpush1.bf16.msra.mxu0 %v1776
        %2213 = vmatprep.subr.bf16.mxu0 0
        %2214 = vmatpush1.bf16.msra.mxu0 0
        %2215 = vmatprep.subr.bf16.mxu0 0
        %2216 = vmatpush1.bf16.msra.mxu0 0
        %2217 = vmatprep.subr.bf16.mxu0 0
        %2218 = vmatpush1.bf16.msra.mxu0 0
        %2219 = vmatprep.subr.bf16.mxu0 0
        %2220 = vmatpush1.bf16.msra.mxu0 0
        %2221 = vmatprep.subr.bf16.mxu0 0
        %2222 = vmatpush1.bf16.msra.mxu0 0
        %2223 = vmatprep.subr.bf16.mxu0 0
        %2224 = vmatpush1.bf16.msra.mxu0 0
        %2225 = vmatprep.subr.bf16.mxu0 0
        %2226 = vmatpush1.bf16.msra.mxu0 0
        %2227 = vmatprep.subr.bf16.mxu0 0
        %2228 = vmatpush1.bf16.msra.mxu0 0
        %2229 = vmatprep.mubr.bf16.mxu0 0
        %2230 = vmatmul.mubr.bf16.gmra.mrb[0].mxu0 %v703
        %v2231 = vpop.f32.mrb[0].mxu0
        %v2232 = vadd.f32 %v945, %v2231
        %v2233 = vpop.f32.mrb[0].mxu0
        %v2234 = vadd.f32 %v949, %v2233
        %v2235 = vpop.f32.mrb[0].mxu0
        %v2236 = vadd.f32 %v945, %v2235
        %v2237 = vpop.f32.mrb[0].mxu0
        %v2238 = vadd.f32 %v949, %v2237
        %2239 = vdwg.mxu0
        %2240 = vmatprep.subr.bf16.mxu0 %v1611
        %2241 = vmatpush1.bf16.msra.mxu0 %v1610
        %2242 = vmatprep.subr.bf16.mxu0 %v1635
        %2243 = vmatpush1.bf16.msra.mxu0 %v1634
        %2244 = vmatprep.subr.bf16.mxu0 %v1659
        %2245 = vmatpush1.bf16.msra.mxu0 %v1658
        %2246 = vmatprep.subr.bf16.mxu0 %v1683
        %2247 = vmatpush1.bf16.msra.mxu0 %v1682
        %2248 = vmatprep.subr.bf16.mxu0 %v1707
        %2249 = vmatpush1.bf16.msra.mxu0 %v1706
        %2250 = vmatprep.subr.bf16.mxu0 %v1731
        %2251 = vmatpush1.bf16.msra.mxu0 %v1730
        %2252 = vmatprep.subr.bf16.mxu0 %v1755
        %2253 = vmatpush1.bf16.msra.mxu0 %v1754
        %2254 = vmatprep.subr.bf16.mxu0 %v1779
        %2255 = vmatpush1.bf16.msra.mxu0 %v1778
        %2256 = vmatprep.subr.bf16.mxu0 0
        %2257 = vmatpush1.bf16.msra.mxu0 0
        %2258 = vmatprep.subr.bf16.mxu0 0
        %2259 = vmatpush1.bf16.msra.mxu0 0
        %2260 = vmatprep.subr.bf16.mxu0 0
        %2261 = vmatpush1.bf16.msra.mxu0 0
        %2262 = vmatprep.subr.bf16.mxu0 0
        %2263 = vmatpush1.bf16.msra.mxu0 0
        %2264 = vmatprep.subr.bf16.mxu0 0
        %2265 = vmatpush1.bf16.msra.mxu0 0
        %2266 = vmatprep.subr.bf16.mxu0 0
        %2267 = vmatpush1.bf16.msra.mxu0 0
        %2268 = vmatprep.subr.bf16.mxu0 0
        %2269 = vmatpush1.bf16.msra.mxu0 0
        %2270 = vmatprep.subr.bf16.mxu0 0
        %2271 = vmatpush1.bf16.msra.mxu0 0
        %2272 = vmatprep.mubr.bf16.mxu0 0
        %2273 = vmatmul.mubr.bf16.gmra.mrb[0].mxu0 %v703
        %v2274 = vpop.f32.mrb[0].mxu0
        %v2275 = vadd.f32 %v953, %v2274
        %v2276 = vpop.f32.mrb[0].mxu0
        %v2277 = vadd.f32 %v957, %v2276
        %v2278 = vpop.f32.mrb[0].mxu0
        %v2279 = vadd.f32 %v953, %v2278
        %v2280 = vpop.f32.mrb[0].mxu0
        %v2281 = vadd.f32 %v957, %v2280
        %2282 = vdwg.mxu0
        %2283 = vmatprep.subr.bf16.mxu0 %v1613
        %2284 = vmatpush1.bf16.msra.mxu0 %v1612
        %2285 = vmatprep.subr.bf16.mxu0 %v1637
        %2286 = vmatpush1.bf16.msra.mxu0 %v1636
        %2287 = vmatprep.subr.bf16.mxu0 %v1661
        %2288 = vmatpush1.bf16.msra.mxu0 %v1660
        %2289 = vmatprep.subr.bf16.mxu0 %v1685
        %2290 = vmatpush1.bf16.msra.mxu0 %v1684
        %2291 = vmatprep.subr.bf16.mxu0 %v1709
        %2292 = vmatpush1.bf16.msra.mxu0 %v1708
        %2293 = vmatprep.subr.bf16.mxu0 %v1733
        %2294 = vmatpush1.bf16.msra.mxu0 %v1732
        %2295 = vmatprep.subr.bf16.mxu0 %v1757
        %2296 = vmatpush1.bf16.msra.mxu0 %v1756
        %2297 = vmatprep.subr.bf16.mxu0 %v1781
        %2298 = vmatpush1.bf16.msra.mxu0 %v1780
        %2299 = vmatprep.subr.bf16.mxu0 0
        %2300 = vmatpush1.bf16.msra.mxu0 0
        %2301 = vmatprep.subr.bf16.mxu0 0
        %2302 = vmatpush1.bf16.msra.mxu0 0
        %2303 = vmatprep.subr.bf16.mxu0 0
        %2304 = vmatpush1.bf16.msra.mxu0 0
        %2305 = vmatprep.subr.bf16.mxu0 0
        %2306 = vmatpush1.bf16.msra.mxu0 0
        %2307 = vmatprep.subr.bf16.mxu0 0
        %2308 = vmatpush1.bf16.msra.mxu0 0
        %2309 = vmatprep.subr.bf16.mxu0 0
        %2310 = vmatpush1.bf16.msra.mxu0 0
        %2311 = vmatprep.subr.bf16.mxu0 0
        %2312 = vmatpush1.bf16.msra.mxu0 0
        %2313 = vmatprep.subr.bf16.mxu0 0
        %2314 = vmatpush1.bf16.msra.mxu0 0
        %2315 = vmatprep.mubr.bf16.mxu0 0
        %2316 = vmatmul.mubr.bf16.gmra.mrb[0].mxu0 %v703
        %v2317 = vpop.f32.mrb[0].mxu0
        %v2318 = vadd.f32 %v961, %v2317
        %v2319 = vpop.f32.mrb[0].mxu0
        %v2320 = vadd.f32 %v965, %v2319
        %v2321 = vpop.f32.mrb[0].mxu0
        %v2322 = vadd.f32 %v961, %v2321
        %v2323 = vpop.f32.mrb[0].mxu0
        %v2324 = vadd.f32 %v965, %v2323
        %2325 = vdwg.mxu0
        %2326 = vmatprep.subr.bf16.mxu0 %v1615
        %2327 = vmatpush1.bf16.msra.mxu0 %v1614
        %2328 = vmatprep.subr.bf16.mxu0 %v1639
        %2329 = vmatpush1.bf16.msra.mxu0 %v1638
        %2330 = vmatprep.subr.bf16.mxu0 %v1663
        %2331 = vmatpush1.bf16.msra.mxu0 %v1662
        %2332 = vmatprep.subr.bf16.mxu0 %v1687
        %2333 = vmatpush1.bf16.msra.mxu0 %v1686
        %2334 = vmatprep.subr.bf16.mxu0 %v1711
        %2335 = vmatpush1.bf16.msra.mxu0 %v1710
        %2336 = vmatprep.subr.bf16.mxu0 %v1735
        %2337 = vmatpush1.bf16.msra.mxu0 %v1734
        %2338 = vmatprep.subr.bf16.mxu0 %v1759
        %2339 = vmatpush1.bf16.msra.mxu0 %v1758
        %2340 = vmatprep.subr.bf16.mxu0 %v1783
        %2341 = vmatpush1.bf16.msra.mxu0 %v1782
        %2342 = vmatprep.subr.bf16.mxu0 0
        %2343 = vmatpush1.bf16.msra.mxu0 0
        %2344 = vmatprep.subr.bf16.mxu0 0
        %2345 = vmatpush1.bf16.msra.mxu0 0
        %2346 = vmatprep.subr.bf16.mxu0 0
        %2347 = vmatpush1.bf16.msra.mxu0 0
        %2348 = vmatprep.subr.bf16.mxu0 0
        %2349 = vmatpush1.bf16.msra.mxu0 0
        %2350 = vmatprep.subr.bf16.mxu0 0
        %2351 = vmatpush1.bf16.msra.mxu0 0
        %2352 = vmatprep.subr.bf16.mxu0 0
        %2353 = vmatpush1.bf16.msra.mxu0 0
        %2354 = vmatprep.subr.bf16.mxu0 0
        %2355 = vmatpush1.bf16.msra.mxu0 0
        %2356 = vmatprep.subr.bf16.mxu0 0
        %2357 = vmatpush1.bf16.msra.mxu0 0
        %2358 = vmatprep.mubr.bf16.mxu0 0
        %2359 = vmatmul.mubr.bf16.gmra.mrb[0].mxu0 %v703
        %v2360 = vpop.f32.mrb[0].mxu0
        %v2361 = vadd.f32 %v969, %v2360
        %v2362 = vpop.f32.mrb[0].mxu0
        %v2363 = vadd.f32 %v973, %v2362
        %v2364 = vpop.f32.mrb[0].mxu0
        %v2365 = vadd.f32 %v969, %v2364
        %v2366 = vpop.f32.mrb[0].mxu0
        %v2367 = vadd.f32 %v973, %v2366
        %2368 = vdwg.mxu0
        %2369 = vmatprep.subr.bf16.mxu0 %v1617
        %2370 = vmatpush1.bf16.msra.mxu0 %v1616
        %2371 = vmatprep.subr.bf16.mxu0 %v1641
        %2372 = vmatpush1.bf16.msra.mxu0 %v1640
        %2373 = vmatprep.subr.bf16.mxu0 %v1665
        %2374 = vmatpush1.bf16.msra.mxu0 %v1664
        %2375 = vmatprep.subr.bf16.mxu0 %v1689
        %2376 = vmatpush1.bf16.msra.mxu0 %v1688
        %2377 = vmatprep.subr.bf16.mxu0 %v1713
        %2378 = vmatpush1.bf16.msra.mxu0 %v1712
        %2379 = vmatprep.subr.bf16.mxu0 %v1737
        %2380 = vmatpush1.bf16.msra.mxu0 %v1736
        %2381 = vmatprep.subr.bf16.mxu0 %v1761
        %2382 = vmatpush1.bf16.msra.mxu0 %v1760
        %2383 = vmatprep.subr.bf16.mxu0 %v1785
        %2384 = vmatpush1.bf16.msra.mxu0 %v1784
        %2385 = vmatprep.subr.bf16.mxu0 0
        %2386 = vmatpush1.bf16.msra.mxu0 0
        %2387 = vmatprep.subr.bf16.mxu0 0
        %2388 = vmatpush1.bf16.msra.mxu0 0
        %2389 = vmatprep.subr.bf16.mxu0 0
        %2390 = vmatpush1.bf16.msra.mxu0 0
        %2391 = vmatprep.subr.bf16.mxu0 0
        %2392 = vmatpush1.bf16.msra.mxu0 0
        %2393 = vmatprep.subr.bf16.mxu0 0
        %2394 = vmatpush1.bf16.msra.mxu0 0
        %2395 = vmatprep.subr.bf16.mxu0 0
        %2396 = vmatpush1.bf16.msra.mxu0 0
        %2397 = vmatprep.subr.bf16.mxu0 0
        %2398 = vmatpush1.bf16.msra.mxu0 0
        %2399 = vmatprep.subr.bf16.mxu0 0
        %2400 = vmatpush1.bf16.msra.mxu0 0
        %2401 = vmatprep.mubr.bf16.mxu0 0
        %2402 = vmatmul.mubr.bf16.gmra.mrb[0].mxu0 %v703
        %v2403 = vpop.f32.mrb[0].mxu0
        %v2404 = vadd.f32 %v977, %v2403
        %v2405 = vpop.f32.mrb[0].mxu0
        %v2406 = vadd.f32 %v981, %v2405
        %v2407 = vpop.f32.mrb[0].mxu0
        %v2408 = vadd.f32 %v977, %v2407
        %v2409 = vpop.f32.mrb[0].mxu0
        %v2410 = vadd.f32 %v981, %v2409
        %2411 = vdwg.mxu0
        %2412 = vmatprep.subr.bf16.mxu0 %v1619
        %2413 = vmatpush1.bf16.msra.mxu0 %v1618
        %2414 = vmatprep.subr.bf16.mxu0 %v1643
        %2415 = vmatpush1.bf16.msra.mxu0 %v1642
        %2416 = vmatprep.subr.bf16.mxu0 %v1667
        %2417 = vmatpush1.bf16.msra.mxu0 %v1666
        %2418 = vmatprep.subr.bf16.mxu0 %v1691
        %2419 = vmatpush1.bf16.msra.mxu0 %v1690
        %2420 = vmatprep.subr.bf16.mxu0 %v1715
        %2421 = vmatpush1.bf16.msra.mxu0 %v1714
        %2422 = vmatprep.subr.bf16.mxu0 %v1739
        %2423 = vmatpush1.bf16.msra.mxu0 %v1738
        %2424 = vmatprep.subr.bf16.mxu0 %v1763
        %2425 = vmatpush1.bf16.msra.mxu0 %v1762
        %2426 = vmatprep.subr.bf16.mxu0 %v1787
        %2427 = vmatpush1.bf16.msra.mxu0 %v1786
        %2428 = vmatprep.subr.bf16.mxu0 0
        %2429 = vmatpush1.bf16.msra.mxu0 0
        %2430 = vmatprep.subr.bf16.mxu0 0
        %2431 = vmatpush1.bf16.msra.mxu0 0
        %2432 = vmatprep.subr.bf16.mxu0 0
        %2433 = vmatpush1.bf16.msra.mxu0 0
        %2434 = vmatprep.subr.bf16.mxu0 0
        %2435 = vmatpush1.bf16.msra.mxu0 0
        %2436 = vmatprep.subr.bf16.mxu0 0
        %2437 = vmatpush1.bf16.msra.mxu0 0
        %2438 = vmatprep.subr.bf16.mxu0 0
        %2439 = vmatpush1.bf16.msra.mxu0 0
        %2440 = vmatprep.subr.bf16.mxu0 0
        %2441 = vmatpush1.bf16.msra.mxu0 0
        %2442 = vmatprep.subr.bf16.mxu0 0
        %2443 = vmatpush1.bf16.msra.mxu0 0
        %2444 = vmatprep.mubr.bf16.mxu0 0
        %2445 = vmatmul.mubr.bf16.gmra.mrb[0].mxu0 %v703
        %v2446 = vpop.f32.mrb[0].mxu0
        %v2447 = vadd.f32 %v985, %v2446
        %v2448 = vpop.f32.mrb[0].mxu0
        %v2449 = vadd.f32 %v989, %v2448
        %v2450 = vpop.f32.mrb[0].mxu0
        %v2451 = vadd.f32 %v985, %v2450
        %v2452 = vpop.f32.mrb[0].mxu0
        %v2453 = vadd.f32 %v989, %v2452
        %2454 = vdwg.mxu0
        %2455 = vmatprep.subr.bf16.mxu0 %v1621
        %2456 = vmatpush1.bf16.msra.mxu0 %v1620
        %2457 = vmatprep.subr.bf16.mxu0 %v1645
        %2458 = vmatpush1.bf16.msra.mxu0 %v1644
        %2459 = vmatprep.subr.bf16.mxu0 %v1669
        %2460 = vmatpush1.bf16.msra.mxu0 %v1668
        %2461 = vmatprep.subr.bf16.mxu0 %v1693
        %2462 = vmatpush1.bf16.msra.mxu0 %v1692
        %2463 = vmatprep.subr.bf16.mxu0 %v1717
        %2464 = vmatpush1.bf16.msra.mxu0 %v1716
        %2465 = vmatprep.subr.bf16.mxu0 %v1741
        %2466 = vmatpush1.bf16.msra.mxu0 %v1740
        %2467 = vmatprep.subr.bf16.mxu0 %v1765
        %2468 = vmatpush1.bf16.msra.mxu0 %v1764
        %2469 = vmatprep.subr.bf16.mxu0 %v1789
        %2470 = vmatpush1.bf16.msra.mxu0 %v1788
        %2471 = vmatprep.subr.bf16.mxu0 0
        %2472 = vmatpush1.bf16.msra.mxu0 0
        %2473 = vmatprep.subr.bf16.mxu0 0
        %2474 = vmatpush1.bf16.msra.mxu0 0
        %2475 = vmatprep.subr.bf16.mxu0 0
        %2476 = vmatpush1.bf16.msra.mxu0 0
        %2477 = vmatprep.subr.bf16.mxu0 0
        %2478 = vmatpush1.bf16.msra.mxu0 0
        %2479 = vmatprep.subr.bf16.mxu0 0
        %2480 = vmatpush1.bf16.msra.mxu0 0
        %2481 = vmatprep.subr.bf16.mxu0 0
        %2482 = vmatpush1.bf16.msra.mxu0 0
        %2483 = vmatprep.subr.bf16.mxu0 0
        %2484 = vmatpush1.bf16.msra.mxu0 0
        %2485 = vmatprep.subr.bf16.mxu0 0
        %2486 = vmatpush1.bf16.msra.mxu0 0
        %2487 = vmatprep.mubr.bf16.mxu0 0
        %2488 = vmatmul.mubr.bf16.gmra.mrb[0].mxu0 %v703
        %v2489 = vpop.f32.mrb[0].mxu0
        %v2490 = vadd.f32 %v993, %v2489
        %v2491 = vpop.f32.mrb[0].mxu0
        %v2492 = vadd.f32 %v997, %v2491
        %v2493 = vpop.f32.mrb[0].mxu0
        %v2494 = vadd.f32 %v993, %v2493
        %v2495 = vpop.f32.mrb[0].mxu0
        %v2496 = vadd.f32 %v997, %v2495
        %2497 = vdwg.mxu0
        %v2498 = vtanh.pop %v2017
        %v2499 = vtanh.pop %v2019
        %v2500 = vtanh.pop %v2060
        %v2501 = vtanh.pop %v2062
        %v2502 = vtanh.pop %v2103
        %v2503 = vtanh.pop %v2105
        %v2504 = vtanh.pop %v2146
        %v2505 = vtanh.pop %v2148
        %v2506 = vtanh.pop %v2189
        %v2507 = vtanh.pop %v2191
        %v2508 = vtanh.pop %v2232
        %v2509 = vtanh.pop %v2234
        %v2510 = vtanh.pop %v2275
        %v2511 = vtanh.pop %v2277
        %v2512 = vtanh.pop %v2318
        %v2513 = vtanh.pop %v2320
        %v2514 = vtanh.pop %v2361
        %v2515 = vtanh.pop %v2363
        %v2516 = vtanh.pop %v2404
        %v2517 = vtanh.pop %v2406
        %v2518 = vtanh.pop %v2447
        %v2519 = vtanh.pop %v2449
        %v2520 = vtanh.pop %v2490
        %v2521 = vtanh.pop %v2492
        %v2522 = vtanh.pop %v2021
        %v2523 = vtanh.pop %v2023
        %v2524 = vtanh.pop %v2064
        %v2525 = vtanh.pop %v2066
        %v2526 = vtanh.pop %v2107
        %v2527 = vtanh.pop %v2109
        %v2528 = vtanh.pop %v2150
        %v2529 = vtanh.pop %v2152
        %v2530 = vtanh.pop %v2193
        %v2531 = vtanh.pop %v2195
        %v2532 = vtanh.pop %v2236
        %v2533 = vtanh.pop %v2238
        %v2534 = vtanh.pop %v2279
        %v2535 = vtanh.pop %v2281
        %v2536 = vtanh.pop %v2322
        %v2537 = vtanh.pop %v2324
        %v2538 = vtanh.pop %v2365
        %v2539 = vtanh.pop %v2367
        %v2540 = vtanh.pop %v2408
        %v2541 = vtanh.pop %v2410
        %v2542 = vtanh.pop %v2451
        %v2543 = vtanh.pop %v2453
        %v2544 = vtanh.pop %v2494
        %v2545 = vtanh.pop %v2496
        %v2546 = vpack.c.bf16 %v2522, %v2498
        %v2547 = vpack.c.bf16 %v2523, %v2499
        %v2548 = vpack.c.bf16 %v2524, %v2500
        %v2549 = vpack.c.bf16 %v2525, %v2501
        %v2550 = vpack.c.bf16 %v2526, %v2502
        %v2551 = vpack.c.bf16 %v2527, %v2503
        %v2552 = vpack.c.bf16 %v2528, %v2504
        %v2553 = vpack.c.bf16 %v2529, %v2505
        %v2554 = vpack.c.bf16 %v2530, %v2506
        %v2555 = vpack.c.bf16 %v2531, %v2507
        %v2556 = vpack.c.bf16 %v2532, %v2508
        %v2557 = vpack.c.bf16 %v2533, %v2509
        %v2558 = vpack.c.bf16 %v2534, %v2510
        %v2559 = vpack.c.bf16 %v2535, %v2511
        %v2560 = vpack.c.bf16 %v2536, %v2512
        %v2561 = vpack.c.bf16 %v2537, %v2513
        %v2562 = vpack.c.bf16 %v2538, %v2514
        %v2563 = vpack.c.bf16 %v2539, %v2515
        %v2564 = vpack.c.bf16 %v2540, %v2516
        %v2565 = vpack.c.bf16 %v2541, %v2517
        %v2566 = vpack.c.bf16 %v2542, %v2518
        %v2567 = vpack.c.bf16 %v2543, %v2519
        %v2568 = vpack.c.bf16 %v2544, %v2520
        %v2569 = vpack.c.bf16 %v2545, %v2521
        %v2594 = vunpack.c.l.b16 %v2546
        %v2595 = vunpack.c.l.b16 %v2547
        %v2596 = vunpack.c.l.b16 %v2548
        %v2597 = vunpack.c.l.b16 %v2549
        %v2598 = vunpack.c.l.b16 %v2550
        %v2599 = vunpack.c.l.b16 %v2551
        %v2600 = vunpack.c.l.b16 %v2552
        %v2601 = vunpack.c.l.b16 %v2553
        %v2602 = vunpack.c.l.b16 %v2554
        %v2603 = vunpack.c.l.b16 %v2555
        %v2604 = vunpack.c.l.b16 %v2556
        %v2605 = vunpack.c.l.b16 %v2557
        %v2606 = vunpack.c.l.b16 %v2558
        %v2607 = vunpack.c.l.b16 %v2559
        %v2608 = vunpack.c.l.b16 %v2560
        %v2609 = vunpack.c.l.b16 %v2561
        %v2610 = vunpack.c.l.b16 %v2562
        %v2611 = vunpack.c.l.b16 %v2563
        %v2612 = vunpack.c.l.b16 %v2564
        %v2613 = vunpack.c.l.b16 %v2565
        %v2614 = vunpack.c.l.b16 %v2566
        %v2615 = vunpack.c.l.b16 %v2567
        %v2616 = vunpack.c.l.b16 %v2568
        %v2617 = vunpack.c.l.b16 %v2569
        %v2618 = vunpack.c.h.b16 %v2546
        %v2619 = vunpack.c.h.b16 %v2547
        %v2620 = vunpack.c.h.b16 %v2548
        %v2621 = vunpack.c.h.b16 %v2549
        %v2622 = vunpack.c.h.b16 %v2550
        %v2623 = vunpack.c.h.b16 %v2551
        %v2624 = vunpack.c.h.b16 %v2552
        %v2625 = vunpack.c.h.b16 %v2553
        %v2626 = vunpack.c.h.b16 %v2554
        %v2627 = vunpack.c.h.b16 %v2555
        %v2628 = vunpack.c.h.b16 %v2556
        %v2629 = vunpack.c.h.b16 %v2557
        %v2630 = vunpack.c.h.b16 %v2558
        %v2631 = vunpack.c.h.b16 %v2559
        %v2632 = vunpack.c.h.b16 %v2560
        %v2633 = vunpack.c.h.b16 %v2561
        %v2634 = vunpack.c.h.b16 %v2562
        %v2635 = vunpack.c.h.b16 %v2563
        %v2636 = vunpack.c.h.b16 %v2564
        %v2637 = vunpack.c.h.b16 %v2565
        %v2638 = vunpack.c.h.b16 %v2566
        %v2639 = vunpack.c.h.b16 %v2567
        %v2640 = vunpack.c.h.b16 %v2568
        %v2641 = vunpack.c.h.b16 %v2569
        %v2642 = vpack.c.b16 %v2595, %v2594
        %v2643 = vpack.c.b16 %v2597, %v2596
        %v2644 = vpack.c.b16 %v2599, %v2598
        %v2645 = vpack.c.b16 %v2601, %v2600
        %v2646 = vpack.c.b16 %v2603, %v2602
        %v2647 = vpack.c.b16 %v2605, %v2604
        %v2648 = vpack.c.b16 %v2607, %v2606
        %v2649 = vpack.c.b16 %v2609, %v2608
        %v2650 = vpack.c.b16 %v2611, %v2610
        %v2651 = vpack.c.b16 %v2613, %v2612
        %v2652 = vpack.c.b16 %v2615, %v2614
        %v2653 = vpack.c.b16 %v2617, %v2616
        %v2654 = vpack.c.b16 %v2619, %v2618
        %v2655 = vpack.c.b16 %v2621, %v2620
        %v2656 = vpack.c.b16 %v2623, %v2622
        %v2657 = vpack.c.b16 %v2625, %v2624
        %v2658 = vpack.c.b16 %v2627, %v2626
        %v2659 = vpack.c.b16 %v2629, %v2628
        %v2660 = vpack.c.b16 %v2631, %v2630
        %v2661 = vpack.c.b16 %v2633, %v2632
        %v2662 = vpack.c.b16 %v2635, %v2634
        %v2663 = vpack.c.b16 %v2637, %v2636
        %v2664 = vpack.c.b16 %v2639, %v2638
        %v2665 = vpack.c.b16 %v2641, %v2640
        %2690 = vst [vmem:[%s381] sm:$0xff] %v2642
        %2691 = vst [vmem:[%s381 + $0x8] sm:$0xff] %v2643
        %2692 = vst [vmem:[%s381 + $0x10] sm:$0xff] %v2644
        %2693 = vst [vmem:[%s381 + $0x18] sm:$0xff] %v2645
        %2694 = vst [vmem:[%s381 + $0x20] sm:$0xff] %v2646
        %2695 = vst [vmem:[%s381 + $0x28] sm:$0xff] %v2647
        %2696 = vst [vmem:[%s381 + $0x30] sm:$0xff] %v2648
        %2697 = vst [vmem:[%s381 + $0x38] sm:$0xff] %v2649
        %2698 = vst [vmem:[%s381 + $0x40] sm:$0xff] %v2650
        %2699 = vst [vmem:[%s381 + $0x48] sm:$0xff] %v2651
        %2700 = vst [vmem:[%s381 + $0x50] sm:$0xff] %v2652
        %2701 = vst [vmem:[%s381 + $0x58] sm:$0xff] %v2653
        %2702 = vst [vmem:[%s381 + $0x60] sm:$0xff] %v2654
        %2703 = vst [vmem:[%s381 + $0x68] sm:$0xff] %v2655
        %2704 = vst [vmem:[%s381 + $0x70] sm:$0xff] %v2656
        %2705 = vst [vmem:[%s381 + $0x78] sm:$0xff] %v2657
        %2706 = vst [vmem:[%s381 + $0x80] sm:$0xff] %v2658
        %2707 = vst [vmem:[%s381 + $0x88] sm:$0xff] %v2659
        %2708 = vst [vmem:[%s381 + $0x90] sm:$0xff] %v2660
        %2709 = vst [vmem:[%s381 + $0x98] sm:$0xff] %v2661
        %2710 = vst [vmem:[%s381 + $0xa0] sm:$0xff] %v2662
        %2711 = vst [vmem:[%s381 + $0xa8] sm:$0xff] %v2663
        %2712 = vst [vmem:[%s381 + $0xb0] sm:$0xff] %v2664
        %2713 = vst [vmem:[%s381 + $0xb8] sm:$0xff] %v2665
        %s2714 = sand.u32 %s207, 1
        %s2715 = scalar_lea.sflag [#allocation4], %s2714
        %s2716 = sand.u32 %s207, 1
        %s2717 = smul.addr %s2716, 192
        %s2718 = scalar_lea.vmem [#allocation11], %s2717
        // Predicated region
        $region69: #{tpu_custom_call.1} parent=47 // pred_check
          %p2719 = pneg %p217
        $region70: #{tpu_custom_call.1} parent=47 // pred_check_branch
          %2721 = sbr.rel (%p2719) target = $region72
        $region71: #{tpu_custom_call.1} parent=47 // pred_region
          %s2722 = smul.u32 2, %s31
          %s2724 = ssub.s32 3072, 3072
          %2725 = vsyncadd %s2715, %s2724
          %s2726 = smul.addr %s2722, 24
          %s2727 = smul.addr %s30, 48
          %s2728 = sadd.s32 %s2726, %s2727
          %s2729 = smul.addr %s2728, 64
          %s2730 = scalar_lea.hbm %s7, %s2729
          %s2731 = sshll.u32 %s2718, 4
          %s2732 = int_to_ptr.vmem [resolvable:$true] %s2731
          %2737 = dma.vmem_to_hbm [thread:$0]  %s2732, 3072, %s2730, %s2715, 1536, 1536, 96
        $region72: #{tpu_custom_call.1} parent=47 // pred_fallthru
          _
      $region48: #{tpu_custom_call.1} parent=5 // pred_fallthru
        _
      %p2738 = scmp.le.s32.totalorder 2, %s21
      // Predicated region
      $region73: #{tpu_custom_call.1} parent=5 // pred_check
        %p2739 = pneg %p2738
      $region74: #{tpu_custom_call.1} parent=5 // pred_check_branch
        %2741 = sbr.rel (%p2739) target = $region76
      $region75: #{tpu_custom_call.1} parent=5 // pred_region
        %s2742 = ssub.s32 %s21, 2
        // Predicated region
        $region77: #{tpu_custom_call.1} parent=75 // pred_check
          %p2743 = pneg %p223
        $region78: #{tpu_custom_call.1} parent=75 // pred_check_branch
          %2745 = sbr.rel (%p2743) target = $region80
        $region79: #{tpu_custom_call.1} parent=75 // pred_region
          %s2746 = sand.u32 %s208, 1
          %s2747 = scalar_lea.sflag [#allocation4], %s2746
          %s2748 = sand.u32 %s208, 1
          %s2749 = smul.addr %s2748, 192
          %s2750 = scalar_lea.vmem [#allocation11], %s2749
          %2751 = dma.done %s2747, 3072
        $region80: #{tpu_custom_call.1} parent=75 // pred_fallthru
          _
      $region76: #{tpu_custom_call.1} parent=5 // pred_fallthru
        _
    $region6: #{tpu_custom_call.1} parent=1 // loop_footer
      %s25 = sadd.s32 1, %s21
    $region7: #{tpu_custom_call.1} parent=1 // loop_footer_branch
      %20 = sbr.rel target = $region3
    $region8: #{tpu_custom_call.1} parent=1 // loop_exit
      _
    %2752 = vsyncpa [#allocation3], 1
    %s2753 = scalar_lea.sflag [#allocation3], 1
    %2754 = vsyncpa %s2753, 1
    %2755 = vsyncpa [#allocation6], 1
    %2756 = vsyncpa [#allocation9], 1
    %2757 = vsyncpa [#allocation4], 1
    %s2758 = scalar_lea.sflag [#allocation4], 1
    %2759 = vsyncpa %s2758, 1

</llo_original>
